<compile_context>
chip_gen: v7x
topology: tpu7x:2x2x1
jax: 0.10.0
libtpu: 0.0.40
codegen_flags: <defaults>
</compile_context>

<pallas_src>
import jax
import jax.numpy as jnp
from jax import lax
from jax.experimental import pallas as pl
from jax.experimental.pallas import tpu as pltpu


def _downsample_kernel(xa_ref, xh_ref, w_ref, o_ref):
    # xa_ref: (1, 4, TH2,  W2+2, C_in)   main rows of the 4 polyphase halo tiles
    # xh_ref: (1, 4, 2,    W2+2, C_in)   2-row bottom halo (first rows of next tile)
    # w_ref:  (3, 3*C_in, C_out)         per-kh weights, K ordered (kw, ci)
    # o_ref:  (1, TH2, W2, 4*C_out)      pixel-unshuffled output row tile
    th2 = o_ref.shape[1]
    w2 = o_ref.shape[2]
    c_in = xa_ref.shape[4]
    c_out = w_ref.shape[2]

    def col_taps(slab):
        # kw-im2col: lane index = kw*C_in + ci.  Only 2 of the 3 slices are
        # sublane-realignment copies, and they are done once per phase (not per tap).
        return jnp.concatenate([slab[:, kw:kw + w2, :] for kw in range(3)], axis=-1)

    outs = []
    for p in range(4):                      # polyphase p = di*2 + dj, fully unrolled
        cols = jnp.concatenate(
            [col_taps(xa_ref[0, p]), col_taps(xh_ref[0, p])], axis=0)   # (TH2+2, W2, 3*C_in)
        cols = cols.reshape((th2 + 2) * w2, 3 * c_in)
        acc = None
        for kh in range(3):                 # dense row taps: aligned leading-dim windows
            xs = cols[kh * w2:(kh + th2) * w2]
            d = jnp.dot(xs, w_ref[kh], preferred_element_type=jnp.float32)
            acc = d if acc is None else acc + d
        outs.append(acc.reshape(th2, w2, c_out))

    # Lane index = p*C_out + c.  The wrapper's single transpose maps this to
    # PyTorch's PixelUnshuffle channel order c*4 + di*2 + dj.
    o_ref[...] = (jnp.concatenate(outs, axis=-1)
                  .reshape(1, th2, w2, 4 * c_out)
                  .astype(o_ref.dtype))


def _vmem_capacity_bytes():
    try:
        return int(pltpu.get_tpu_info().vmem_capacity_bytes)
    except Exception:
        return 64 << 20   # conservative default = v7x per-TensorCore VMEM


def _step_bytes(th2, W2, C_in, C_out, itemsize):
    """Approximate VMEM footprint of one grid step (double-buffered I/O + temps)."""
    wp2 = W2 + 2
    inp = (th2 + 2) * wp2 * 4 * C_in * itemsize       # main + halo phase tiles
    out = th2 * W2 * 4 * C_out * itemsize              # unshuffled output tile
    cols = (th2 + 2) * W2 * 3 * C_in * itemsize        # per-phase kw-im2col temp
    acc = th2 * W2 * C_out * 4                          # fp32 accumulator
    return 2 * (inp + out) + 2 * cols + 2 * acc


def _pick_tile_h2(H2, W2, C_in, C_out, itemsize, budget):
    """Largest even row tile (in half-resolution rows) within the VMEM budget.

    Prefers a divisor of H2 (no padded tail rows) when one of comparable size
    exists; otherwise the ragged tail is handled by padding H2 up in the wrapper.
    """
    hi = min(max(2, H2 + (H2 % 2)), 256)
    best, best_div = 2, None
    for th2 in range(2, hi + 1, 2):
        if _step_bytes(th2, W2, C_in, C_out, itemsize) <= budget:
            best = th2
            if H2 % th2 == 0:
                best_div = th2
    if best_div is not None and 2 * best_div >= best:
        return best_div
    return best


def downsample(x, weight, *, tile_h2=None, compute_dtype=None, interpret=False):
    """Downsample forward.

    x:      (B, C, H, W)      NCHW, same as the PyTorch module input.
    weight: (C//2, C, 3, 3)   OIHW, same layout as nn.Conv2d.weight.
    compute_dtype: optional cast (e.g. jnp.bfloat16) for the kernel inputs;
        accumulation stays fp32 and the output keeps x.dtype.  Recommended at
        Restormer scale (C >= 48) to halve HBM/VMEM traffic.
    returns (B, 2*C, H//2, W//2) NCHW.
    """
    B, C_in, H, W = x.shape
    C_out = weight.shape[0]
    assert weight.shape == (C_out, C_in, 3, 3)
    assert H % 2 == 0 and W % 2 == 0, "PixelUnshuffle(2) needs even spatial dims"

    out_dtype = x.dtype
    cdt = jnp.dtype(compute_dtype) if compute_dtype is not None else jnp.dtype(x.dtype)
    itemsize = cdt.itemsize

    H2, W2 = H // 2, W // 2
    Wp2 = W2 + 2

    cap = _vmem_capacity_bytes()
    if tile_h2 is None:
        budget = min(int(0.30 * cap), 24 << 20)
        tile_h2 = _pick_tile_h2(H2, W2, C_in, C_out, itemsize, budget)
    assert tile_h2 % 2 == 0 and tile_h2 >= 2, "tile_h2 must be an even positive int"
    n_tiles = pl.cdiv(H2, tile_h2)
    H2p = n_tiles * tile_h2                 # ragged H2 handled by padding the tail

    # --- polyphase split + zero-pad (wrapper-side XLA layout passes) -------------
    # TODO(synk): fuse this split/pad (and the final NCHW transpose) into the kernel
    # DMA to remove the remaining wrapper HBM passes over input/output.
    xp = x.reshape(B, C_in, H2, 2, W2, 2)
    xp = jnp.transpose(xp, (0, 3, 5, 2, 4, 1))          # (B, di, dj, H2, W2, C)
    xp = xp.reshape(B, 4, H2, W2, C_in)
    xp = jnp.pad(xp, ((0, 0), (0, 0), (1, 1 + H2p - H2), (1, 1), (0, 0)))
    # weights: OIHW -> (kh, kw*C_in + ci, co), matching the kernel's kw-im2col order.
    w3 = jnp.transpose(weight, (2, 3, 1, 0)).reshape(3, 3 * C_in, C_out)
    if compute_dtype is not None:
        xp = xp.astype(cdt)
        w3 = w3.astype(cdt)

    est = _step_bytes(tile_h2, W2, C_in, C_out, itemsize)
    vmem_limit = int(min(max(3 * est, 48 << 20), 0.85 * cap))

    half = tile_h2 // 2   # tile_h2 is even, so the 2-row halo start is a valid block index

    conv = pl.pallas_call(
        _downsample_kernel,
        out_shape=jax.ShapeDtypeStruct((B, H2p, W2, 4 * C_out), out_dtype),
        grid=(n_tiles, B),   # row tiles lead so megacore sharding still splits when B == 1
        in_specs=[
            # main rows of the halo window: [i*tile_h2, (i+1)*tile_h2)
            pl.BlockSpec((1, 4, tile_h2, Wp2, C_in), lambda i, b: (b, 0, i, 0, 0)),
            # 2-row bottom halo: rows [(i+1)*tile_h2, (i+1)*tile_h2 + 2)
            pl.BlockSpec((1, 4, 2, Wp2, C_in), lambda i, b: (b, 0, (i + 1) * half, 0, 0)),
            # weights, resident across the whole grid
            pl.BlockSpec((3, 3 * C_in, C_out), lambda i, b: (0, 0, 0)),
        ],
        out_specs=pl.BlockSpec((1, tile_h2, W2, 4 * C_out), lambda i, b: (b, i, 0, 0)),
        compiler_params=pltpu.CompilerParams(
            dimension_semantics=("parallel", "parallel"),
            vmem_limit_bytes=vmem_limit,
        ),
        interpret=interpret,
    )(xp, xp, w3)

    # (B, H2, W2, 4*C_out) -> NCHW with PixelUnshuffle channel order c*4 + di*2 + dj.
    conv = conv[:, :H2]                                  # drop ragged-tail rows (no-op if aligned)
    out = conv.reshape(B, H2, W2, 4, C_out)
    out = jnp.transpose(out, (0, 4, 3, 1, 2))            # (B, C_out, 4, H2, W2)
    return out.reshape(B, 4 * C_out, H2, W2)


def _reference(x, weight):
    """Pure-JAX reference: dilated conv (cross-correlation) + PixelUnshuffle(2)."""
    y = lax.conv_general_dilated(
        x, weight,
        window_strides=(1, 1),
        padding=((2, 2), (2, 2)),
        rhs_dilation=(2, 2),
        dimension_numbers=("NCHW", "OIHW", "NCHW"),
    )
    B, C, H, W = y.shape
    y = y.reshape(B, C, H // 2, 2, W // 2, 2)
    y = jnp.transpose(y, (0, 1, 3, 5, 2, 4))
    return y.reshape(B, 4 * C, H // 2, W // 2)


if __name__ == "__main__":
    key = jax.random.PRNGKey(0)
    k_x, k_w = jax.random.split(key)

    # Small shapes consistent with the module: B=2, n_feat=4, spatial 16x16.
    B, n_feat, H, W = 2, 4, 16, 16
    x = jax.random.normal(k_x, (B, n_feat, H, W), dtype=jnp.float32)
    # Conv2d(n_feat, n_feat//2, 3, bias=False) weight, OIHW, deterministic.
    weight = 0.1 * jax.random.normal(k_w, (n_feat // 2, n_feat, 3, 3), dtype=jnp.float32)

    out = downsample(x, weight)
    out = jax.block_until_ready(out)

    ref = _reference(x, weight)
    assert out.shape == (B, 2 * n_feat, H // 2, W // 2), out.shape
    # Loose-ish tolerance: both paths may use the MXU's default f32 pass precision.
    assert jnp.allclose(out, ref, atol=1e-2, rtol=1e-2), (
        "mismatch vs reference, max abs diff = %s" % jnp.max(jnp.abs(out - ref)))

    print("KERNEL_OK")
</pallas_src>

<mosaic_0001>
module attributes {stable_mosaic.version = 11 : i64} {
  func.func @_downsample_kernel(%arg0: i32, %arg1: i32, %arg2: memref<1x4x8x10x4xf32, #tpu.memory_space<vmem>>, %arg3: memref<1x4x2x10x4xf32, #tpu.memory_space<vmem>>, %arg4: memref<3x12x2xf32, #tpu.memory_space<vmem>>, %arg5: memref<1x8x8x8xf32, #tpu.memory_space<vmem>>) attributes {dimension_semantics = [#tpu.dimension_semantics<parallel>, #tpu.dimension_semantics<parallel>], iteration_bounds = array<i64: 1, 2>, scalar_prefetch = 0 : i64, scratch_operands = 0 : i64, tpu.core_type = #tpu.core_type<tc>, window_params = [{transform_indices = @transform_0, window_bounds = array<i64: 1, 4, 8, 10, 4>}, {transform_indices = @transform_1, window_bounds = array<i64: 1, 4, 2, 10, 4>}, {pipeline_mode = #tpu.pipeline_mode<synchronous>, transform_indices = @transform_2, window_bounds = array<i64: 3, 12, 2>}, {transform_indices = @transform_3, window_bounds = array<i64: 1, 8, 8, 8>}]} {
    %c0 = arith.constant 0 : index
    %c0_0 = arith.constant 0 : index
    %c0_1 = arith.constant 0 : index
    %c0_2 = arith.constant 0 : index
    %c0_3 = arith.constant 0 : index
    %0 = vector.load %arg2[%c0, %c0_0, %c0_1, %c0_2, %c0_3] : memref<1x4x8x10x4xf32, #tpu.memory_space<vmem>>, vector<1x1x8x10x4xf32>
    %1 = vector.shape_cast %0 : vector<1x1x8x10x4xf32> to vector<8x10x4xf32>
    %2 = vector.extract_strided_slice %1 {offsets = [0, 0, 0], sizes = [8, 8, 4], strides = [1, 1, 1]} : vector<8x10x4xf32> to vector<8x8x4xf32>
    %3 = vector.extract_strided_slice %1 {offsets = [0, 1, 0], sizes = [8, 8, 4], strides = [1, 1, 1]} : vector<8x10x4xf32> to vector<8x8x4xf32>
    %4 = vector.extract_strided_slice %1 {offsets = [0, 2, 0], sizes = [8, 8, 4], strides = [1, 1, 1]} : vector<8x10x4xf32> to vector<8x8x4xf32>
    %5 = tpu.concatenate %2, %3, %4 in 2 : vector<8x8x4xf32>, vector<8x8x4xf32>, vector<8x8x4xf32> -> vector<8x8x12xf32>
    %c0_4 = arith.constant 0 : index
    %c0_5 = arith.constant 0 : index
    %c0_6 = arith.constant 0 : index
    %c0_7 = arith.constant 0 : index
    %c0_8 = arith.constant 0 : index
    %6 = vector.load %arg3[%c0_4, %c0_5, %c0_6, %c0_7, %c0_8] : memref<1x4x2x10x4xf32, #tpu.memory_space<vmem>>, vector<1x1x2x10x4xf32>
    %7 = vector.shape_cast %6 : vector<1x1x2x10x4xf32> to vector<2x10x4xf32>
    %8 = vector.extract_strided_slice %7 {offsets = [0, 0, 0], sizes = [2, 8, 4], strides = [1, 1, 1]} : vector<2x10x4xf32> to vector<2x8x4xf32>
    %9 = vector.extract_strided_slice %7 {offsets = [0, 1, 0], sizes = [2, 8, 4], strides = [1, 1, 1]} : vector<2x10x4xf32> to vector<2x8x4xf32>
    %10 = vector.extract_strided_slice %7 {offsets = [0, 2, 0], sizes = [2, 8, 4], strides = [1, 1, 1]} : vector<2x10x4xf32> to vector<2x8x4xf32>
    %11 = tpu.concatenate %8, %9, %10 in 2 : vector<2x8x4xf32>, vector<2x8x4xf32>, vector<2x8x4xf32> -> vector<2x8x12xf32>
    %12 = tpu.concatenate %5, %11 in 0 : vector<8x8x12xf32>, vector<2x8x12xf32> -> vector<10x8x12xf32>
    %13 = vector.shape_cast %12 : vector<10x8x12xf32> to vector<80x12xf32>
    %14 = vector.extract_strided_slice %13 {offsets = [0, 0], sizes = [64, 12], strides = [1, 1]} : vector<80x12xf32> to vector<64x12xf32>
    %c0_9 = arith.constant 0 : index
    %c0_10 = arith.constant 0 : index
    %c0_11 = arith.constant 0 : index
    %15 = vector.load %arg4[%c0_9, %c0_10, %c0_11] : memref<3x12x2xf32, #tpu.memory_space<vmem>>, vector<1x12x2xf32>
    %16 = vector.shape_cast %15 : vector<1x12x2xf32> to vector<12x2xf32>
    %cst = arith.constant dense<0.000000e+00> : vector<64x2xf32>
    %17 = tpu.matmul %14, %16, %cst {dimension_numbers = #tpu.dot_dimension_numbers<[1], [0], [0], [1], [0, 0, 1, 1], [], []>} : vector<64x12xf32>, vector<12x2xf32>, vector<64x2xf32> -> vector<64x2xf32>
    %18 = vector.extract_strided_slice %13 {offsets = [8, 0], sizes = [64, 12], strides = [1, 1]} : vector<80x12xf32> to vector<64x12xf32>
    %c1 = arith.constant 1 : index
    %c0_12 = arith.constant 0 : index
    %c0_13 = arith.constant 0 : index
    %19 = vector.load %arg4[%c1, %c0_12, %c0_13] : memref<3x12x2xf32, #tpu.memory_space<vmem>>, vector<1x12x2xf32>
    %20 = vector.shape_cast %19 : vector<1x12x2xf32> to vector<12x2xf32>
    %cst_14 = arith.constant dense<0.000000e+00> : vector<64x2xf32>
    %21 = tpu.matmul %18, %20, %cst_14 {dimension_numbers = #tpu.dot_dimension_numbers<[1], [0], [0], [1], [0, 0, 1, 1], [], []>} : vector<64x12xf32>, vector<12x2xf32>, vector<64x2xf32> -> vector<64x2xf32>
    %22 = arith.addf %17, %21 : vector<64x2xf32>
    %23 = vector.extract_strided_slice %13 {offsets = [16, 0], sizes = [64, 12], strides = [1, 1]} : vector<80x12xf32> to vector<64x12xf32>
    %c2 = arith.constant 2 : index
    %c0_15 = arith.constant 0 : index
    %c0_16 = arith.constant 0 : index
    %24 = vector.load %arg4[%c2, %c0_15, %c0_16] : memref<3x12x2xf32, #tpu.memory_space<vmem>>, vector<1x12x2xf32>
    %25 = vector.shape_cast %24 : vector<1x12x2xf32> to vector<12x2xf32>
    %cst_17 = arith.constant dense<0.000000e+00> : vector<64x2xf32>
    %26 = tpu.matmul %23, %25, %cst_17 {dimension_numbers = #tpu.dot_dimension_numbers<[1], [0], [0], [1], [0, 0, 1, 1], [], []>} : vector<64x12xf32>, vector<12x2xf32>, vector<64x2xf32> -> vector<64x2xf32>
    %27 = arith.addf %22, %26 : vector<64x2xf32>
    %28 = vector.shape_cast %27 : vector<64x2xf32> to vector<8x8x2xf32>
    %c0_18 = arith.constant 0 : index
    %c1_19 = arith.constant 1 : index
    %c0_20 = arith.constant 0 : index
    %c0_21 = arith.constant 0 : index
    %c0_22 = arith.constant 0 : index
    %29 = vector.load %arg2[%c0_18, %c1_19, %c0_20, %c0_21, %c0_22] : memref<1x4x8x10x4xf32, #tpu.memory_space<vmem>>, vector<1x1x8x10x4xf32>
    %30 = vector.shape_cast %29 : vector<1x1x8x10x4xf32> to vector<8x10x4xf32>
    %31 = vector.extract_strided_slice %30 {offsets = [0, 0, 0], sizes = [8, 8, 4], strides = [1, 1, 1]} : vector<8x10x4xf32> to vector<8x8x4xf32>
    %32 = vector.extract_strided_slice %30 {offsets = [0, 1, 0], sizes = [8, 8, 4], strides = [1, 1, 1]} : vector<8x10x4xf32> to vector<8x8x4xf32>
    %33 = vector.extract_strided_slice %30 {offsets = [0, 2, 0], sizes = [8, 8, 4], strides = [1, 1, 1]} : vector<8x10x4xf32> to vector<8x8x4xf32>
    %34 = tpu.concatenate %31, %32, %33 in 2 : vector<8x8x4xf32>, vector<8x8x4xf32>, vector<8x8x4xf32> -> vector<8x8x12xf32>
    %c0_23 = arith.constant 0 : index
    %c1_24 = arith.constant 1 : index
    %c0_25 = arith.constant 0 : index
    %c0_26 = arith.constant 0 : index
    %c0_27 = arith.constant 0 : index
    %35 = vector.load %arg3[%c0_23, %c1_24, %c0_25, %c0_26, %c0_27] : memref<1x4x2x10x4xf32, #tpu.memory_space<vmem>>, vector<1x1x2x10x4xf32>
    %36 = vector.shape_cast %35 : vector<1x1x2x10x4xf32> to vector<2x10x4xf32>
    %37 = vector.extract_strided_slice %36 {offsets = [0, 0, 0], sizes = [2, 8, 4], strides = [1, 1, 1]} : vector<2x10x4xf32> to vector<2x8x4xf32>
    %38 = vector.extract_strided_slice %36 {offsets = [0, 1, 0], sizes = [2, 8, 4], strides = [1, 1, 1]} : vector<2x10x4xf32> to vector<2x8x4xf32>
    %39 = vector.extract_strided_slice %36 {offsets = [0, 2, 0], sizes = [2, 8, 4], strides = [1, 1, 1]} : vector<2x10x4xf32> to vector<2x8x4xf32>
    %40 = tpu.concatenate %37, %38, %39 in 2 : vector<2x8x4xf32>, vector<2x8x4xf32>, vector<2x8x4xf32> -> vector<2x8x12xf32>
    %41 = tpu.concatenate %34, %40 in 0 : vector<8x8x12xf32>, vector<2x8x12xf32> -> vector<10x8x12xf32>
    %42 = vector.shape_cast %41 : vector<10x8x12xf32> to vector<80x12xf32>
    %43 = vector.extract_strided_slice %42 {offsets = [0, 0], sizes = [64, 12], strides = [1, 1]} : vector<80x12xf32> to vector<64x12xf32>
    %c0_28 = arith.constant 0 : index
    %c0_29 = arith.constant 0 : index
    %c0_30 = arith.constant 0 : index
    %44 = vector.load %arg4[%c0_28, %c0_29, %c0_30] : memref<3x12x2xf32, #tpu.memory_space<vmem>>, vector<1x12x2xf32>
    %45 = vector.shape_cast %44 : vector<1x12x2xf32> to vector<12x2xf32>
    %cst_31 = arith.constant dense<0.000000e+00> : vector<64x2xf32>
    %46 = tpu.matmul %43, %45, %cst_31 {dimension_numbers = #tpu.dot_dimension_numbers<[1], [0], [0], [1], [0, 0, 1, 1], [], []>} : vector<64x12xf32>, vector<12x2xf32>, vector<64x2xf32> -> vector<64x2xf32>
    %47 = vector.extract_strided_slice %42 {offsets = [8, 0], sizes = [64, 12], strides = [1, 1]} : vector<80x12xf32> to vector<64x12xf32>
    %c1_32 = arith.constant 1 : index
    %c0_33 = arith.constant 0 : index
    %c0_34 = arith.constant 0 : index
    %48 = vector.load %arg4[%c1_32, %c0_33, %c0_34] : memref<3x12x2xf32, #tpu.memory_space<vmem>>, vector<1x12x2xf32>
    %49 = vector.shape_cast %48 : vector<1x12x2xf32> to vector<12x2xf32>
    %cst_35 = arith.constant dense<0.000000e+00> : vector<64x2xf32>
    %50 = tpu.matmul %47, %49, %cst_35 {dimension_numbers = #tpu.dot_dimension_numbers<[1], [0], [0], [1], [0, 0, 1, 1], [], []>} : vector<64x12xf32>, vector<12x2xf32>, vector<64x2xf32> -> vector<64x2xf32>
    %51 = arith.addf %46, %50 : vector<64x2xf32>
    %52 = vector.extract_strided_slice %42 {offsets = [16, 0], sizes = [64, 12], strides = [1, 1]} : vector<80x12xf32> to vector<64x12xf32>
    %c2_36 = arith.constant 2 : index
    %c0_37 = arith.constant 0 : index
    %c0_38 = arith.constant 0 : index
    %53 = vector.load %arg4[%c2_36, %c0_37, %c0_38] : memref<3x12x2xf32, #tpu.memory_space<vmem>>, vector<1x12x2xf32>
    %54 = vector.shape_cast %53 : vector<1x12x2xf32> to vector<12x2xf32>
    %cst_39 = arith.constant dense<0.000000e+00> : vector<64x2xf32>
    %55 = tpu.matmul %52, %54, %cst_39 {dimension_numbers = #tpu.dot_dimension_numbers<[1], [0], [0], [1], [0, 0, 1, 1], [], []>} : vector<64x12xf32>, vector<12x2xf32>, vector<64x2xf32> -> vector<64x2xf32>
    %56 = arith.addf %51, %55 : vector<64x2xf32>
    %57 = vector.shape_cast %56 : vector<64x2xf32> to vector<8x8x2xf32>
    %c0_40 = arith.constant 0 : index
    %c2_41 = arith.constant 2 : index
    %c0_42 = arith.constant 0 : index
    %c0_43 = arith.constant 0 : index
    %c0_44 = arith.constant 0 : index
    %58 = vector.load %arg2[%c0_40, %c2_41, %c0_42, %c0_43, %c0_44] : memref<1x4x8x10x4xf32, #tpu.memory_space<vmem>>, vector<1x1x8x10x4xf32>
    %59 = vector.shape_cast %58 : vector<1x1x8x10x4xf32> to vector<8x10x4xf32>
    %60 = vector.extract_strided_slice %59 {offsets = [0, 0, 0], sizes = [8, 8, 4], strides = [1, 1, 1]} : vector<8x10x4xf32> to vector<8x8x4xf32>
    %61 = vector.extract_strided_slice %59 {offsets = [0, 1, 0], sizes = [8, 8, 4], strides = [1, 1, 1]} : vector<8x10x4xf32> to vector<8x8x4xf32>
    %62 = vector.extract_strided_slice %59 {offsets = [0, 2, 0], sizes = [8, 8, 4], strides = [1, 1, 1]} : vector<8x10x4xf32> to vector<8x8x4xf32>
    %63 = tpu.concatenate %60, %61, %62 in 2 : vector<8x8x4xf32>, vector<8x8x4xf32>, vector<8x8x4xf32> -> vector<8x8x12xf32>
    %c0_45 = arith.constant 0 : index
    %c2_46 = arith.constant 2 : index
    %c0_47 = arith.constant 0 : index
    %c0_48 = arith.constant 0 : index
    %c0_49 = arith.constant 0 : index
    %64 = vector.load %arg3[%c0_45, %c2_46, %c0_47, %c0_48, %c0_49] : memref<1x4x2x10x4xf32, #tpu.memory_space<vmem>>, vector<1x1x2x10x4xf32>
    %65 = vector.shape_cast %64 : vector<1x1x2x10x4xf32> to vector<2x10x4xf32>
    %66 = vector.extract_strided_slice %65 {offsets = [0, 0, 0], sizes = [2, 8, 4], strides = [1, 1, 1]} : vector<2x10x4xf32> to vector<2x8x4xf32>
    %67 = vector.extract_strided_slice %65 {offsets = [0, 1, 0], sizes = [2, 8, 4], strides = [1, 1, 1]} : vector<2x10x4xf32> to vector<2x8x4xf32>
    %68 = vector.extract_strided_slice %65 {offsets = [0, 2, 0], sizes = [2, 8, 4], strides = [1, 1, 1]} : vector<2x10x4xf32> to vector<2x8x4xf32>
    %69 = tpu.concatenate %66, %67, %68 in 2 : vector<2x8x4xf32>, vector<2x8x4xf32>, vector<2x8x4xf32> -> vector<2x8x12xf32>
    %70 = tpu.concatenate %63, %69 in 0 : vector<8x8x12xf32>, vector<2x8x12xf32> -> vector<10x8x12xf32>
    %71 = vector.shape_cast %70 : vector<10x8x12xf32> to vector<80x12xf32>
    %72 = vector.extract_strided_slice %71 {offsets = [0, 0], sizes = [64, 12], strides = [1, 1]} : vector<80x12xf32> to vector<64x12xf32>
    %c0_50 = arith.constant 0 : index
    %c0_51 = arith.constant 0 : index
    %c0_52 = arith.constant 0 : index
    %73 = vector.load %arg4[%c0_50, %c0_51, %c0_52] : memref<3x12x2xf32, #tpu.memory_space<vmem>>, vector<1x12x2xf32>
    %74 = vector.shape_cast %73 : vector<1x12x2xf32> to vector<12x2xf32>
    %cst_53 = arith.constant dense<0.000000e+00> : vector<64x2xf32>
    %75 = tpu.matmul %72, %74, %cst_53 {dimension_numbers = #tpu.dot_dimension_numbers<[1], [0], [0], [1], [0, 0, 1, 1], [], []>} : vector<64x12xf32>, vector<12x2xf32>, vector<64x2xf32> -> vector<64x2xf32>
    %76 = vector.extract_strided_slice %71 {offsets = [8, 0], sizes = [64, 12], strides = [1, 1]} : vector<80x12xf32> to vector<64x12xf32>
    %c1_54 = arith.constant 1 : index
    %c0_55 = arith.constant 0 : index
    %c0_56 = arith.constant 0 : index
    %77 = vector.load %arg4[%c1_54, %c0_55, %c0_56] : memref<3x12x2xf32, #tpu.memory_space<vmem>>, vector<1x12x2xf32>
    %78 = vector.shape_cast %77 : vector<1x12x2xf32> to vector<12x2xf32>
    %cst_57 = arith.constant dense<0.000000e+00> : vector<64x2xf32>
    %79 = tpu.matmul %76, %78, %cst_57 {dimension_numbers = #tpu.dot_dimension_numbers<[1], [0], [0], [1], [0, 0, 1, 1], [], []>} : vector<64x12xf32>, vector<12x2xf32>, vector<64x2xf32> -> vector<64x2xf32>
    %80 = arith.addf %75, %79 : vector<64x2xf32>
    %81 = vector.extract_strided_slice %71 {offsets = [16, 0], sizes = [64, 12], strides = [1, 1]} : vector<80x12xf32> to vector<64x12xf32>
    %c2_58 = arith.constant 2 : index
    %c0_59 = arith.constant 0 : index
    %c0_60 = arith.constant 0 : index
    %82 = vector.load %arg4[%c2_58, %c0_59, %c0_60] : memref<3x12x2xf32, #tpu.memory_space<vmem>>, vector<1x12x2xf32>
    %83 = vector.shape_cast %82 : vector<1x12x2xf32> to vector<12x2xf32>
    %cst_61 = arith.constant dense<0.000000e+00> : vector<64x2xf32>
    %84 = tpu.matmul %81, %83, %cst_61 {dimension_numbers = #tpu.dot_dimension_numbers<[1], [0], [0], [1], [0, 0, 1, 1], [], []>} : vector<64x12xf32>, vector<12x2xf32>, vector<64x2xf32> -> vector<64x2xf32>
    %85 = arith.addf %80, %84 : vector<64x2xf32>
    %86 = vector.shape_cast %85 : vector<64x2xf32> to vector<8x8x2xf32>
    %c0_62 = arith.constant 0 : index
    %c3 = arith.constant 3 : index
    %c0_63 = arith.constant 0 : index
    %c0_64 = arith.constant 0 : index
    %c0_65 = arith.constant 0 : index
    %87 = vector.load %arg2[%c0_62, %c3, %c0_63, %c0_64, %c0_65] : memref<1x4x8x10x4xf32, #tpu.memory_space<vmem>>, vector<1x1x8x10x4xf32>
    %88 = vector.shape_cast %87 : vector<1x1x8x10x4xf32> to vector<8x10x4xf32>
    %89 = vector.extract_strided_slice %88 {offsets = [0, 0, 0], sizes = [8, 8, 4], strides = [1, 1, 1]} : vector<8x10x4xf32> to vector<8x8x4xf32>
    %90 = vector.extract_strided_slice %88 {offsets = [0, 1, 0], sizes = [8, 8, 4], strides = [1, 1, 1]} : vector<8x10x4xf32> to vector<8x8x4xf32>
    %91 = vector.extract_strided_slice %88 {offsets = [0, 2, 0], sizes = [8, 8, 4], strides = [1, 1, 1]} : vector<8x10x4xf32> to vector<8x8x4xf32>
    %92 = tpu.concatenate %89, %90, %91 in 2 : vector<8x8x4xf32>, vector<8x8x4xf32>, vector<8x8x4xf32> -> vector<8x8x12xf32>
    %c0_66 = arith.constant 0 : index
    %c3_67 = arith.constant 3 : index
    %c0_68 = arith.constant 0 : index
    %c0_69 = arith.constant 0 : index
    %c0_70 = arith.constant 0 : index
    %93 = vector.load %arg3[%c0_66, %c3_67, %c0_68, %c0_69, %c0_70] : memref<1x4x2x10x4xf32, #tpu.memory_space<vmem>>, vector<1x1x2x10x4xf32>
    %94 = vector.shape_cast %93 : vector<1x1x2x10x4xf32> to vector<2x10x4xf32>
    %95 = vector.extract_strided_slice %94 {offsets = [0, 0, 0], sizes = [2, 8, 4], strides = [1, 1, 1]} : vector<2x10x4xf32> to vector<2x8x4xf32>
    %96 = vector.extract_strided_slice %94 {offsets = [0, 1, 0], sizes = [2, 8, 4], strides = [1, 1, 1]} : vector<2x10x4xf32> to vector<2x8x4xf32>
    %97 = vector.extract_strided_slice %94 {offsets = [0, 2, 0], sizes = [2, 8, 4], strides = [1, 1, 1]} : vector<2x10x4xf32> to vector<2x8x4xf32>
    %98 = tpu.concatenate %95, %96, %97 in 2 : vector<2x8x4xf32>, vector<2x8x4xf32>, vector<2x8x4xf32> -> vector<2x8x12xf32>
    %99 = tpu.concatenate %92, %98 in 0 : vector<8x8x12xf32>, vector<2x8x12xf32> -> vector<10x8x12xf32>
    %100 = vector.shape_cast %99 : vector<10x8x12xf32> to vector<80x12xf32>
    %101 = vector.extract_strided_slice %100 {offsets = [0, 0], sizes = [64, 12], strides = [1, 1]} : vector<80x12xf32> to vector<64x12xf32>
    %c0_71 = arith.constant 0 : index
    %c0_72 = arith.constant 0 : index
    %c0_73 = arith.constant 0 : index
    %102 = vector.load %arg4[%c0_71, %c0_72, %c0_73] : memref<3x12x2xf32, #tpu.memory_space<vmem>>, vector<1x12x2xf32>
    %103 = vector.shape_cast %102 : vector<1x12x2xf32> to vector<12x2xf32>
    %cst_74 = arith.constant dense<0.000000e+00> : vector<64x2xf32>
    %104 = tpu.matmul %101, %103, %cst_74 {dimension_numbers = #tpu.dot_dimension_numbers<[1], [0], [0], [1], [0, 0, 1, 1], [], []>} : vector<64x12xf32>, vector<12x2xf32>, vector<64x2xf32> -> vector<64x2xf32>
    %105 = vector.extract_strided_slice %100 {offsets = [8, 0], sizes = [64, 12], strides = [1, 1]} : vector<80x12xf32> to vector<64x12xf32>
    %c1_75 = arith.constant 1 : index
    %c0_76 = arith.constant 0 : index
    %c0_77 = arith.constant 0 : index
    %106 = vector.load %arg4[%c1_75, %c0_76, %c0_77] : memref<3x12x2xf32, #tpu.memory_space<vmem>>, vector<1x12x2xf32>
    %107 = vector.shape_cast %106 : vector<1x12x2xf32> to vector<12x2xf32>
    %cst_78 = arith.constant dense<0.000000e+00> : vector<64x2xf32>
    %108 = tpu.matmul %105, %107, %cst_78 {dimension_numbers = #tpu.dot_dimension_numbers<[1], [0], [0], [1], [0, 0, 1, 1], [], []>} : vector<64x12xf32>, vector<12x2xf32>, vector<64x2xf32> -> vector<64x2xf32>
    %109 = arith.addf %104, %108 : vector<64x2xf32>
    %110 = vector.extract_strided_slice %100 {offsets = [16, 0], sizes = [64, 12], strides = [1, 1]} : vector<80x12xf32> to vector<64x12xf32>
    %c2_79 = arith.constant 2 : index
    %c0_80 = arith.constant 0 : index
    %c0_81 = arith.constant 0 : index
    %111 = vector.load %arg4[%c2_79, %c0_80, %c0_81] : memref<3x12x2xf32, #tpu.memory_space<vmem>>, vector<1x12x2xf32>
    %112 = vector.shape_cast %111 : vector<1x12x2xf32> to vector<12x2xf32>
    %cst_82 = arith.constant dense<0.000000e+00> : vector<64x2xf32>
    %113 = tpu.matmul %110, %112, %cst_82 {dimension_numbers = #tpu.dot_dimension_numbers<[1], [0], [0], [1], [0, 0, 1, 1], [], []>} : vector<64x12xf32>, vector<12x2xf32>, vector<64x2xf32> -> vector<64x2xf32>
    %114 = arith.addf %109, %113 : vector<64x2xf32>
    %115 = vector.shape_cast %114 : vector<64x2xf32> to vector<8x8x2xf32>
    %116 = tpu.concatenate %28, %57, %86, %115 in 2 : vector<8x8x2xf32>, vector<8x8x2xf32>, vector<8x8x2xf32>, vector<8x8x2xf32> -> vector<8x8x8xf32>
    %117 = vector.shape_cast %116 : vector<8x8x8xf32> to vector<1x8x8x8xf32>
    %c0_83 = arith.constant 0 : index
    %c0_84 = arith.constant 0 : index
    %c0_85 = arith.constant 0 : index
    %c0_86 = arith.constant 0 : index
    %118 = vector.load %arg5[%c0_83, %c0_84, %c0_85, %c0_86] : memref<1x8x8x8xf32, #tpu.memory_space<vmem>>, vector<1x8x8x8xf32>
    tpu.vector_store %arg5[%c0_83, %c0_84, %c0_85, %c0_86], %117 {strides = array<i32>} : memref<1x8x8x8xf32, #tpu.memory_space<vmem>>, vector<1x8x8x8xf32>,
    return
  }
  func.func @transform_0(%arg0: i32, %arg1: i32) -> (i32, i32, i32, i32, i32) {
    %c0_i32 = arith.constant 0 : i32
    %c0_i32_0 = arith.constant 0 : i32
    %c0_i32_1 = arith.constant 0 : i32
    %c0_i32_2 = arith.constant 0 : i32
    return %arg1, %c0_i32, %arg0, %c0_i32_0, %c0_i32_1 : i32, i32, i32, i32, i32
  }
  func.func @transform_1(%arg0: i32, %arg1: i32) -> (i32, i32, i32, i32, i32) {
    %c1_i32 = arith.constant 1 : i32
    %0 = arith.addi %arg0, %c1_i32 : i32
    %c4_i32 = arith.constant 4 : i32
    %1 = arith.muli %0, %c4_i32 : i32
    %c0_i32 = arith.constant 0 : i32
    %c0_i32_0 = arith.constant 0 : i32
    %c0_i32_1 = arith.constant 0 : i32
    %c0_i32_2 = arith.constant 0 : i32
    return %arg1, %c0_i32, %1, %c0_i32_0, %c0_i32_1 : i32, i32, i32, i32, i32
  }
  func.func @transform_2(%arg0: i32, %arg1: i32) -> (i32, i32, i32) {
    %c0_i32 = arith.constant 0 : i32
    %c0_i32_0 = arith.constant 0 : i32
    %c0_i32_1 = arith.constant 0 : i32
    %c0_i32_2 = arith.constant 0 : i32
    return %c0_i32, %c0_i32_0, %c0_i32_1 : i32, i32, i32
  }
  func.func @transform_3(%arg0: i32, %arg1: i32) -> (i32, i32, i32, i32) {
    %c0_i32 = arith.constant 0 : i32
    %c0_i32_0 = arith.constant 0 : i32
    %c0_i32_1 = arith.constant 0 : i32
    return %arg1, %arg0, %c0_i32, %c0_i32_0 : i32, i32, i32, i32
  }
}

</mosaic_0001>

<llo_original>
// kernel: tpu_custom_call.1
$region0: #{tpu_custom_call.1}
  #allocation0 [shape = 'u32[]', space=smem, size = 0x4, offset = 0x4, fixed_abs, tag = 'smem constant byte address 0x4 - core index']
  #allocation1 [shape = 'u32[144,128]{1,0:T(1,128)}', space=vmem, size = 0x12000, scoped, tag = 'internal scratch']
  %s0 = inlined_call_operand.vmem [shape: f32[2,4,10,10,4], index: 0, kind: input, shape index: {}]
  %s1 = inlined_call_operand.vmem [shape: f32[2,4,10,10,4], index: 1, kind: input, shape index: {}]
  %s2 = inlined_call_operand.vmem [shape: f32[3,12,2], index: 2, kind: input, shape index: {}]
  %s3 = inlined_call_operand.hbm [shape: f32[2,8,8,8], index: 3, kind: output, shape index: {}]
  %s4 = sld [smem:[#allocation0]]
  $region135: #{tpu_custom_call.1} parent=0
    _
  %s6 = ssub.s32 1, %s4
  %s7 = scalar_select 0, %s6, %s4
  $region1: #{tpu_custom_call.1} parent=0
    #allocation2 [shape = 'u8[524288]{0}', space=vmem, size = 0x80000, scoped, tag = 'input window, operand 0']
    #allocation3 [shape = 'u8[131072]{0}', space=vmem, size = 0x20000, scoped, tag = 'input window, operand 1']
    #allocation4 [shape = 'u8[65536]{0}', space=vmem, size = 0x10000, scoped, tag = 'output window, operand 0']
    #allocation5 [shape = 's32[2]{0}', space=sflag, size = 0x8, scoped, tag = 'scoped memory for tpu_custom_call.1']
    %8 = vsyncpa [#allocation5], 0
    %s9 = scalar_lea.sflag [#allocation5], 1
    %10 = vsyncpa %s9, 0
    loop: start=0, step=1, limit=4
    $region2: #{tpu_custom_call.1} parent=1 // loop_pre_header
      _
    $region3: #{tpu_custom_call.1} parent=1 // loop_header
      %s12 = sphi 0, %s16
      %p13 = scmp.ge.s32.totalorder %s12, 4
      %s19 = sphi 0, %s31
      %s20 = sphi 0, %s27
      %s21 = sphi 0, %s19
      %s22 = sphi 0, %s20
      %s23 = sphi 0, %s21
      %s24 = sphi 0, %s22
      %s36 = sphi 0, %s38
      %s39 = sphi 0, %s36
      %s40 = sphi 0, %s39
      %s56 = sphi 0, %s40
      %s68 = sphi 0, %s70
      %s71 = sphi 0, %s68
      %s72 = sphi 0, %s71
      %s88 = sphi 0, %s72
      %s92 = sphi 0, %s92
      %s94 = sphi 0, %s92
      %s95 = sphi 0, %s94
      %s109 = sphi 0, %s95
      %s117 = sphi 0, %s119
      %s120 = sphi 0, %s117
      %s121 = sphi 0, %s120
      %s137 = sphi 0, %s121
    $region4: #{tpu_custom_call.1} parent=1 // loop_header_branch
      %15 = sbr.rel (%p13) target = $region8
    $region5: #{tpu_custom_call.1} parent=1 // loop_body
      %s17 = ssub.s32 %s12, 1
      %s18 = ssub.s32 %s12, 2
      %s25 = sadd.s32 1, %s20
      %p26 = scmp.ge.s32.totalorder %s25, 2
      %s27 = scalar_select %p26, 0, %s25
      %s28 = sadd.s32 1, %s19
      %s29 = scalar_select %p26, %s28, %s19
      %p30 = scmp.ge.s32.totalorder %s29, 1
      %s31 = scalar_select %p30, 0, %s29
      %s32 = ssub.s32 %s20, %s27
      %s33 = ssub.s32 %s19, %s31
      %s34 = sor.u32 %s32, %s33
      %p35 = scmp.eq.s32.totalorder %s34, 0
      %s37 = sadd.s32 %s36, 1
      %s38 = scalar_select %p35, %s36, %s37
      %p41 = pneg %p35
      %p42 = scmp.eq.s32.totalorder %s12, 1
      %p43 = por %p41, %p42
      %p44 = scmp.ne.s32.totalorder %s36, %s39
      %p45 = scmp.eq.s32.totalorder %s12, 0
      %p46 = por %p44, %p45
      %p47 = scmp.ne.s32.totalorder %s36, %s39
      %p48 = scmp.eq.s32.totalorder %s17, 1
      %p49 = por %p47, %p48
      %p50 = scmp.ne.s32.totalorder %s39, %s40
      %p51 = scmp.eq.s32.totalorder %s17, 0
      %p52 = por %p50, %p51
      %p53 = scmp.ne.s32.totalorder %s39, %s40
      %p54 = scmp.eq.s32.totalorder %s18, 1
      %p55 = por %p53, %p54
      %p57 = scmp.ne.s32.totalorder %s40, %s56
      %p58 = scmp.eq.s32.totalorder %s18, 0
      %p59 = por %p57, %p58
      %s60 = sadd.s32 %s19, 1
      %s61 = smul.u32 %s60, 4
      %s62 = sadd.s32 %s31, 1
      %s63 = smul.u32 %s62, 4
      %s64 = ssub.s32 %s20, %s27
      %s65 = ssub.s32 %s61, %s63
      %s66 = sor.u32 %s64, %s65
      %p67 = scmp.eq.s32.totalorder %s66, 0
      %s69 = sadd.s32 %s68, 1
      %s70 = scalar_select %p67, %s68, %s69
      %p73 = pneg %p67
      %p74 = scmp.eq.s32.totalorder %s12, 1
      %p75 = por %p73, %p74
      %p76 = scmp.ne.s32.totalorder %s68, %s71
      %p77 = scmp.eq.s32.totalorder %s12, 0
      %p78 = por %p76, %p77
      %p79 = scmp.ne.s32.totalorder %s68, %s71
      %p80 = scmp.eq.s32.totalorder %s17, 1
      %p81 = por %p79, %p80
      %p82 = scmp.ne.s32.totalorder %s71, %s72
      %p83 = scmp.eq.s32.totalorder %s17, 0
      %p84 = por %p82, %p83
      %p85 = scmp.ne.s32.totalorder %s71, %s72
      %p86 = scmp.eq.s32.totalorder %s18, 1
      %p87 = por %p85, %p86
      %p89 = scmp.ne.s32.totalorder %s72, %s88
      %p90 = scmp.eq.s32.totalorder %s18, 0
      %p91 = por %p89, %p90
      %s93 = sadd.s32 %s92, 1
      %p96 = scmp.eq.s32.totalorder %s12, 1
      %p97 = scmp.ne.s32.totalorder %s92, %s94
      %p98 = scmp.eq.s32.totalorder %s12, 0
      %p99 = por %p97, %p98
      %p100 = scmp.ne.s32.totalorder %s92, %s94
      %p101 = scmp.eq.s32.totalorder %s17, 1
      %p102 = por %p100, %p101
      %p103 = scmp.ne.s32.totalorder %s94, %s95
      %p104 = scmp.eq.s32.totalorder %s17, 0
      %p105 = por %p103, %p104
      %p106 = scmp.ne.s32.totalorder %s94, %s95
      %p107 = scmp.eq.s32.totalorder %s18, 1
      %p108 = por %p106, %p107
      %p110 = scmp.ne.s32.totalorder %s95, %s109
      %p111 = scmp.eq.s32.totalorder %s18, 0
      %p112 = por %p110, %p111
      %s113 = ssub.s32 %s20, %s27
      %s114 = ssub.s32 %s19, %s31
      %s115 = sor.u32 %s113, %s114
      %p116 = scmp.eq.s32.totalorder %s115, 0
      %s118 = sadd.s32 %s117, 1
      %s119 = scalar_select %p116, %s117, %s118
      %p122 = pneg %p116
      %p123 = scmp.eq.s32.totalorder %s12, 1
      %p124 = por %p122, %p123
      %p125 = scmp.ne.s32.totalorder %s117, %s120
      %p126 = scmp.eq.s32.totalorder %s12, 0
      %p127 = por %p125, %p126
      %p128 = scmp.ne.s32.totalorder %s117, %s120
      %p129 = scmp.eq.s32.totalorder %s17, 1
      %p130 = por %p128, %p129
      %p131 = scmp.ne.s32.totalorder %s120, %s121
      %p132 = scmp.eq.s32.totalorder %s17, 0
      %p133 = por %p131, %p132
      %p134 = scmp.ne.s32.totalorder %s120, %s121
      %p135 = scmp.eq.s32.totalorder %s18, 1
      %p136 = por %p134, %p135
      %p138 = scmp.ne.s32.totalorder %s121, %s137
      %p139 = scmp.eq.s32.totalorder %s18, 0
      %p140 = por %p138, %p139
      %p141 = scmp.le.s32.totalorder 1, %s12
      %p142 = scmp.lt.s32.totalorder %s12, 3
      %p143 = pnand %p141, %p142
      %p144 = pneg %p143
      // Predicated region
      $region9: #{tpu_custom_call.1} parent=5 // pred_check
        _
      $region10: #{tpu_custom_call.1} parent=5 // pred_check_branch
        %146 = sbr.rel (%p143) target = $region12
      $region11: #{tpu_custom_call.1} parent=5 // pred_region
        %s147 = ssub.s32 %s12, 1
        // Predicated region
        $region13: #{tpu_custom_call.1} parent=11 // pred_check
          %p148 = pneg %p105
        $region14: #{tpu_custom_call.1} parent=11 // pred_check_branch
          %150 = sbr.rel (%p148) target = $region16
        $region15: #{tpu_custom_call.1} parent=11 // pred_region
          _
        $region16: #{tpu_custom_call.1} parent=11 // pred_fallthru
          _
      $region12: #{tpu_custom_call.1} parent=5 // pred_fallthru
        _
      %p151 = scmp.lt.s32.totalorder %s12, 2
      // Predicated region
      $region17: #{tpu_custom_call.1} parent=5 // pred_check
        %p152 = pneg %p151
      $region18: #{tpu_custom_call.1} parent=5 // pred_check_branch
        %154 = sbr.rel (%p152) target = $region20
      $region19: #{tpu_custom_call.1} parent=5 // pred_region
        // Predicated region
        $region21: #{tpu_custom_call.1} parent=19 // pred_check
          %p155 = pneg %p46
        $region22: #{tpu_custom_call.1} parent=19 // pred_check_branch
          %157 = sbr.rel (%p155) target = $region24
        $region23: #{tpu_custom_call.1} parent=19 // pred_region
          %s158 = sand.u32 %s36, 1
          %s159 = sand.u32 %s36, 1
          %s160 = smul.addr %s159, 512
          %s161 = scalar_lea.vmem [#allocation2], %s160
          %s162 = smul.u32 8, %s19
          %s163 = ssub.s32 10, %s162
          %p164 = scmp.lt.s32.totalorder %s163, 8
          %s165 = scalar_select %p164, %s163, 8
          %s166 = smul.u32 512, %s165
          %s167 = smul.u32 %s166, 2
          %p168 = scmp.ne.s32.totalorder 0, %s167
          %s169 = smul.addr %s162, 2
          %s170 = smul.addr %s20, 80
          %s171 = sadd.s32 %s169, %s170
          %s172 = smul.addr %s171, 8
          %s173 = scalar_lea.vmem %s0, %s172
          %s174 = smul.u32 %s165, 2
          // Predicated region
          $region25: #{tpu_custom_call.1} parent=23 // pred_check
            %p175 = pneg %p168
          $region26: #{tpu_custom_call.1} parent=23 // pred_check_branch
            %177 = sbr.rel (%p175) target = $region28
          $region27: #{tpu_custom_call.1} parent=23 // pred_region
            // Predicated region
            $region29: #{tpu_custom_call.1} parent=27 // pred_check
              _
            $region30: #{tpu_custom_call.1} parent=27 // pred_check_branch
              %179 = sbr.rel (0) target = $region32
            $region31: #{tpu_custom_call.1} parent=27 // pred_region
              // Predicated region
              $region51: #{tpu_custom_call.1} parent=31 // pred_check
                _
              $region52: #{tpu_custom_call.1} parent=31 // pred_check_branch
                %360 = sbr.rel (0) target = $region54
              $region53: #{tpu_custom_call.1} parent=31 // pred_region
                %s361 = sshrl.u32 %s174, 4
                // While loop
                $region55: #{tpu_custom_call.1} parent=53 // loop_pre_header
                  _
                $region56: #{tpu_custom_call.1} parent=53 // loop_header
                  %s363 = sphi 0, %s365
                  %p364 = scmp.ge.s32.totalorder %s363, %s361
                  %s368 = sphi 0, %s501
                  %s369 = sphi %s173, %s504
                  %s370 = sphi %s161, %s505
                $region57: #{tpu_custom_call.1} parent=53 // loop_header_branch
                  %367 = sbr.rel (%p364) target = $region61
                $region58: #{tpu_custom_call.1} parent=53 // loop_body
                  %v371 = vld [vmem:[%s369] sm:$0xff]
                  %372 = vst [vmem:[%s370] sm:$0xff] %v371
                  %v373 = vld [vmem:[%s369 + $0x8] sm:$0xff]
                  %374 = vst [vmem:[%s370 + $0x8] sm:$0xff] %v373
                  %v375 = vld [vmem:[%s369 + $0x10] sm:$0xff]
                  %376 = vst [vmem:[%s370 + $0x10] sm:$0xff] %v375
                  %v377 = vld [vmem:[%s369 + $0x18] sm:$0xff]
                  %378 = vst [vmem:[%s370 + $0x18] sm:$0xff] %v377
                  %v379 = vld [vmem:[%s369 + $0x20] sm:$0xff]
                  %380 = vst [vmem:[%s370 + $0x20] sm:$0xff] %v379
                  %v381 = vld [vmem:[%s369 + $0x28] sm:$0xff]
                  %382 = vst [vmem:[%s370 + $0x28] sm:$0xff] %v381
                  %v383 = vld [vmem:[%s369 + $0x30] sm:$0xff]
                  %384 = vst [vmem:[%s370 + $0x30] sm:$0xff] %v383
                  %v385 = vld [vmem:[%s369 + $0x38] sm:$0xff]
                  %386 = vst [vmem:[%s370 + $0x38] sm:$0xff] %v385
                  %v387 = vld [vmem:[%s369 + $0x40] sm:$0xff]
                  %388 = vst [vmem:[%s370 + $0x40] sm:$0xff] %v387
                  %v389 = vld [vmem:[%s369 + $0x48] sm:$0xff]
                  %390 = vst [vmem:[%s370 + $0x48] sm:$0xff] %v389
                  %v391 = vld [vmem:[%s369 + $0x50] sm:$0xff]
                  %392 = vst [vmem:[%s370 + $0x50] sm:$0xff] %v391
                  %v393 = vld [vmem:[%s369 + $0x58] sm:$0xff]
                  %394 = vst [vmem:[%s370 + $0x58] sm:$0xff] %v393
                  %v395 = vld [vmem:[%s369 + $0x60] sm:$0xff]
                  %396 = vst [vmem:[%s370 + $0x60] sm:$0xff] %v395
                  %v397 = vld [vmem:[%s369 + $0x68] sm:$0xff]
                  %398 = vst [vmem:[%s370 + $0x68] sm:$0xff] %v397
                  %v399 = vld [vmem:[%s369 + $0x70] sm:$0xff]
                  %400 = vst [vmem:[%s370 + $0x70] sm:$0xff] %v399
                  %v401 = vld [vmem:[%s369 + $0x78] sm:$0xff]
                  %402 = vst [vmem:[%s370 + $0x78] sm:$0xff] %v401
                  %v403 = vld [vmem:[%s369 + $0xa0] sm:$0xff]
                  %404 = vst [vmem:[%s370 + $0x80] sm:$0xff] %v403
                  %v405 = vld [vmem:[%s369 + $0xa8] sm:$0xff]
                  %406 = vst [vmem:[%s370 + $0x88] sm:$0xff] %v405
                  %v407 = vld [vmem:[%s369 + $0xb0] sm:$0xff]
                  %408 = vst [vmem:[%s370 + $0x90] sm:$0xff] %v407
                  %v409 = vld [vmem:[%s369 + $0xb8] sm:$0xff]
                  %410 = vst [vmem:[%s370 + $0x98] sm:$0xff] %v409
                  %v411 = vld [vmem:[%s369 + $0xc0] sm:$0xff]
                  %412 = vst [vmem:[%s370 + $0xa0] sm:$0xff] %v411
                  %v413 = vld [vmem:[%s369 + $0xc8] sm:$0xff]
                  %414 = vst [vmem:[%s370 + $0xa8] sm:$0xff] %v413
                  %v415 = vld [vmem:[%s369 + $0xd0] sm:$0xff]
                  %416 = vst [vmem:[%s370 + $0xb0] sm:$0xff] %v415
                  %v417 = vld [vmem:[%s369 + $0xd8] sm:$0xff]
                  %418 = vst [vmem:[%s370 + $0xb8] sm:$0xff] %v417
                  %v419 = vld [vmem:[%s369 + $0xe0] sm:$0xff]
                  %420 = vst [vmem:[%s370 + $0xc0] sm:$0xff] %v419
                  %v421 = vld [vmem:[%s369 + $0xe8] sm:$0xff]
                  %422 = vst [vmem:[%s370 + $0xc8] sm:$0xff] %v421
                  %v423 = vld [vmem:[%s369 + $0xf0] sm:$0xff]
                  %424 = vst [vmem:[%s370 + $0xd0] sm:$0xff] %v423
                  %v425 = vld [vmem:[%s369 + $0xf8] sm:$0xff]
                  %426 = vst [vmem:[%s370 + $0xd8] sm:$0xff] %v425
                  %v427 = vld [vmem:[%s369 + $0x100] sm:$0xff]
                  %428 = vst [vmem:[%s370 + $0xe0] sm:$0xff] %v427
                  %v429 = vld [vmem:[%s369 + $0x108] sm:$0xff]
                  %430 = vst [vmem:[%s370 + $0xe8] sm:$0xff] %v429
                  %v431 = vld [vmem:[%s369 + $0x110] sm:$0xff]
                  %432 = vst [vmem:[%s370 + $0xf0] sm:$0xff] %v431
                  %v433 = vld [vmem:[%s369 + $0x118] sm:$0xff]
                  %434 = vst [vmem:[%s370 + $0xf8] sm:$0xff] %v433
                  %v435 = vld [vmem:[%s369 + $0x140] sm:$0xff]
                  %436 = vst [vmem:[%s370 + $0x100] sm:$0xff] %v435
                  %v437 = vld [vmem:[%s369 + $0x148] sm:$0xff]
                  %438 = vst [vmem:[%s370 + $0x108] sm:$0xff] %v437
                  %v439 = vld [vmem:[%s369 + $0x150] sm:$0xff]
                  %440 = vst [vmem:[%s370 + $0x110] sm:$0xff] %v439
                  %v441 = vld [vmem:[%s369 + $0x158] sm:$0xff]
                  %442 = vst [vmem:[%s370 + $0x118] sm:$0xff] %v441
                  %v443 = vld [vmem:[%s369 + $0x160] sm:$0xff]
                  %444 = vst [vmem:[%s370 + $0x120] sm:$0xff] %v443
                  %v445 = vld [vmem:[%s369 + $0x168] sm:$0xff]
                  %446 = vst [vmem:[%s370 + $0x128] sm:$0xff] %v445
                  %v447 = vld [vmem:[%s369 + $0x170] sm:$0xff]
                  %448 = vst [vmem:[%s370 + $0x130] sm:$0xff] %v447
                  %v449 = vld [vmem:[%s369 + $0x178] sm:$0xff]
                  %450 = vst [vmem:[%s370 + $0x138] sm:$0xff] %v449
                  %v451 = vld [vmem:[%s369 + $0x180] sm:$0xff]
                  %452 = vst [vmem:[%s370 + $0x140] sm:$0xff] %v451
                  %v453 = vld [vmem:[%s369 + $0x188] sm:$0xff]
                  %454 = vst [vmem:[%s370 + $0x148] sm:$0xff] %v453
                  %v455 = vld [vmem:[%s369 + $0x190] sm:$0xff]
                  %456 = vst [vmem:[%s370 + $0x150] sm:$0xff] %v455
                  %v457 = vld [vmem:[%s369 + $0x198] sm:$0xff]
                  %458 = vst [vmem:[%s370 + $0x158] sm:$0xff] %v457
                  %v459 = vld [vmem:[%s369 + $0x1a0] sm:$0xff]
                  %460 = vst [vmem:[%s370 + $0x160] sm:$0xff] %v459
                  %v461 = vld [vmem:[%s369 + $0x1a8] sm:$0xff]
                  %462 = vst [vmem:[%s370 + $0x168] sm:$0xff] %v461
                  %v463 = vld [vmem:[%s369 + $0x1b0] sm:$0xff]
                  %464 = vst [vmem:[%s370 + $0x170] sm:$0xff] %v463
                  %v465 = vld [vmem:[%s369 + $0x1b8] sm:$0xff]
                  %466 = vst [vmem:[%s370 + $0x178] sm:$0xff] %v465
                  %v467 = vld [vmem:[%s369 + $0x1e0] sm:$0xff]
                  %468 = vst [vmem:[%s370 + $0x180] sm:$0xff] %v467
                  %v469 = vld [vmem:[%s369 + $0x1e8] sm:$0xff]
                  %470 = vst [vmem:[%s370 + $0x188] sm:$0xff] %v469
                  %v471 = vld [vmem:[%s369 + $0x1f0] sm:$0xff]
                  %472 = vst [vmem:[%s370 + $0x190] sm:$0xff] %v471
                  %v473 = vld [vmem:[%s369 + $0x1f8] sm:$0xff]
                  %474 = vst [vmem:[%s370 + $0x198] sm:$0xff] %v473
                  %v475 = vld [vmem:[%s369 + $0x200] sm:$0xff]
                  %476 = vst [vmem:[%s370 + $0x1a0] sm:$0xff] %v475
                  %v477 = vld [vmem:[%s369 + $0x208] sm:$0xff]
                  %478 = vst [vmem:[%s370 + $0x1a8] sm:$0xff] %v477
                  %v479 = vld [vmem:[%s369 + $0x210] sm:$0xff]
                  %480 = vst [vmem:[%s370 + $0x1b0] sm:$0xff] %v479
                  %v481 = vld [vmem:[%s369 + $0x218] sm:$0xff]
                  %482 = vst [vmem:[%s370 + $0x1b8] sm:$0xff] %v481
                  %v483 = vld [vmem:[%s369 + $0x220] sm:$0xff]
                  %484 = vst [vmem:[%s370 + $0x1c0] sm:$0xff] %v483
                  %v485 = vld [vmem:[%s369 + $0x228] sm:$0xff]
                  %486 = vst [vmem:[%s370 + $0x1c8] sm:$0xff] %v485
                  %v487 = vld [vmem:[%s369 + $0x230] sm:$0xff]
                  %488 = vst [vmem:[%s370 + $0x1d0] sm:$0xff] %v487
                  %v489 = vld [vmem:[%s369 + $0x238] sm:$0xff]
                  %490 = vst [vmem:[%s370 + $0x1d8] sm:$0xff] %v489
                  %v491 = vld [vmem:[%s369 + $0x240] sm:$0xff]
                  %492 = vst [vmem:[%s370 + $0x1e0] sm:$0xff] %v491
                  %v493 = vld [vmem:[%s369 + $0x248] sm:$0xff]
                  %494 = vst [vmem:[%s370 + $0x1e8] sm:$0xff] %v493
                  %v495 = vld [vmem:[%s369 + $0x250] sm:$0xff]
                  %496 = vst [vmem:[%s370 + $0x1f0] sm:$0xff] %v495
                  %v497 = vld [vmem:[%s369 + $0x258] sm:$0xff]
                  %498 = vst [vmem:[%s370 + $0x1f8] sm:$0xff] %v497
                  %s499 = sadd.s32 1, %s368
                  %p500 = scmp.ge.s32.totalorder %s499, %s361
                  %s501 = scalar_select %p500, 0, %s499
                  %s502 = smul.u32 %s501, 128
                  %s503 = smul.u32 %s501, 128
                  %s504 = scalar_lea.vmem %s173, %s502
                  %s505 = scalar_lea.vmem %s161, %s503 [#allocation2]
                $region59: #{tpu_custom_call.1} parent=53 // loop_footer
                  %s365 = sadd.s32 %s363, 1
                $region60: #{tpu_custom_call.1} parent=53 // loop_footer_branch
                  %362 = sbr.rel target = $region56
                $region61: #{tpu_custom_call.1} parent=53 // loop_exit
                  _
                %s506 = sshrl.u32 %s174, 4
                %s507 = sand.u32 %s174, 15
                %s508 = smul.u32 %s506, 16
                %s509 = smul.u32 8, %s508
                %s510 = scalar_lea.vmem %s173, %s509
                %s511 = smul.u32 8, %s508
                %s512 = scalar_lea.vmem %s161, %s511 [#allocation2]
                // While loop
                $region62: #{tpu_custom_call.1} parent=53 // loop_pre_header
                  _
                $region63: #{tpu_custom_call.1} parent=53 // loop_header
                  %s514 = sphi 0, %s516
                  %p515 = scmp.ge.s32.totalorder %s514, %s507
                  %s519 = sphi 0, %s532
                  %s520 = sphi %s510, %s535
                  %s521 = sphi %s512, %s536
                $region64: #{tpu_custom_call.1} parent=53 // loop_header_branch
                  %518 = sbr.rel (%p515) target = $region68
                $region65: #{tpu_custom_call.1} parent=53 // loop_body
                  %v522 = vld [vmem:[%s520] sm:$0xff]
                  %523 = vst [vmem:[%s521] sm:$0xff] %v522
                  %v524 = vld [vmem:[%s520 + $0xa0] sm:$0xff]
                  %525 = vst [vmem:[%s521 + $0x80] sm:$0xff] %v524
                  %v526 = vld [vmem:[%s520 + $0x140] sm:$0xff]
                  %527 = vst [vmem:[%s521 + $0x100] sm:$0xff] %v526
                  %v528 = vld [vmem:[%s520 + $0x1e0] sm:$0xff]
                  %529 = vst [vmem:[%s521 + $0x180] sm:$0xff] %v528
                  %s530 = sadd.s32 1, %s519
                  %p531 = scmp.ge.s32.totalorder %s530, %s507
                  %s532 = scalar_select %p531, 0, %s530
                  %s533 = smul.u32 %s532, 8
                  %s534 = smul.u32 %s532, 8
                  %s535 = scalar_lea.vmem %s510, %s533
                  %s536 = scalar_lea.vmem %s512, %s534 [#allocation2]
                $region66: #{tpu_custom_call.1} parent=53 // loop_footer
                  %s516 = sadd.s32 %s514, 1
                $region67: #{tpu_custom_call.1} parent=53 // loop_footer_branch
                  %513 = sbr.rel target = $region63
                $region68: #{tpu_custom_call.1} parent=53 // loop_exit
                  _
              $region54: #{tpu_custom_call.1} parent=31 // pred_fallthru
                _
              // Predicated region
              $region69: #{tpu_custom_call.1} parent=31 // pred_check
                _
              $region70: #{tpu_custom_call.1} parent=31 // pred_check_branch
                %538 = sbr.rel target = $region72
              $region71: #{tpu_custom_call.1} parent=31 // pred_region
                _
              $region72: #{tpu_custom_call.1} parent=31 // pred_fallthru
                _
            $region32: #{tpu_custom_call.1} parent=27 // pred_fallthru
              _
            // Predicated region
            $region33: #{tpu_custom_call.1} parent=27 // pred_check
              _
            $region34: #{tpu_custom_call.1} parent=27 // pred_check_branch
              %181 = sbr.rel target = $region36
            $region35: #{tpu_custom_call.1} parent=27 // pred_region
              %s183 = sshrl.u32 %s174, 4
              // While loop
              $region37: #{tpu_custom_call.1} parent=35 // loop_pre_header
                _
              $region38: #{tpu_custom_call.1} parent=35 // loop_header
                %s185 = sphi 0, %s187
                %p186 = scmp.ge.s32.totalorder %s185, %s183
                %s190 = sphi 0, %s323
                %s191 = sphi %s173, %s326
                %s192 = sphi %s161, %s327
              $region39: #{tpu_custom_call.1} parent=35 // loop_header_branch
                %189 = sbr.rel (%p186) target = $region43
              $region40: #{tpu_custom_call.1} parent=35 // loop_body
                %v193 = vld [vmem:[%s191] sm:$0xff]
                %194 = vst [vmem:[%s192] sm:$0xff] %v193
                %v195 = vld [vmem:[%s191 + $0x8] sm:$0xff]
                %196 = vst [vmem:[%s192 + $0x8] sm:$0xff] %v195
                %v197 = vld [vmem:[%s191 + $0x10] sm:$0xff]
                %198 = vst [vmem:[%s192 + $0x10] sm:$0xff] %v197
                %v199 = vld [vmem:[%s191 + $0x18] sm:$0xff]
                %200 = vst [vmem:[%s192 + $0x18] sm:$0xff] %v199
                %v201 = vld [vmem:[%s191 + $0x20] sm:$0xff]
                %202 = vst [vmem:[%s192 + $0x20] sm:$0xff] %v201
                %v203 = vld [vmem:[%s191 + $0x28] sm:$0xff]
                %204 = vst [vmem:[%s192 + $0x28] sm:$0xff] %v203
                %v205 = vld [vmem:[%s191 + $0x30] sm:$0xff]
                %206 = vst [vmem:[%s192 + $0x30] sm:$0xff] %v205
                %v207 = vld [vmem:[%s191 + $0x38] sm:$0xff]
                %208 = vst [vmem:[%s192 + $0x38] sm:$0xff] %v207
                %v209 = vld [vmem:[%s191 + $0x40] sm:$0xff]
                %210 = vst [vmem:[%s192 + $0x40] sm:$0xff] %v209
                %v211 = vld [vmem:[%s191 + $0x48] sm:$0xff]
                %212 = vst [vmem:[%s192 + $0x48] sm:$0xff] %v211
                %v213 = vld [vmem:[%s191 + $0x50] sm:$0xff]
                %214 = vst [vmem:[%s192 + $0x50] sm:$0xff] %v213
                %v215 = vld [vmem:[%s191 + $0x58] sm:$0xff]
                %216 = vst [vmem:[%s192 + $0x58] sm:$0xff] %v215
                %v217 = vld [vmem:[%s191 + $0x60] sm:$0xff]
                %218 = vst [vmem:[%s192 + $0x60] sm:$0xff] %v217
                %v219 = vld [vmem:[%s191 + $0x68] sm:$0xff]
                %220 = vst [vmem:[%s192 + $0x68] sm:$0xff] %v219
                %v221 = vld [vmem:[%s191 + $0x70] sm:$0xff]
                %222 = vst [vmem:[%s192 + $0x70] sm:$0xff] %v221
                %v223 = vld [vmem:[%s191 + $0x78] sm:$0xff]
                %224 = vst [vmem:[%s192 + $0x78] sm:$0xff] %v223
                %v225 = vld [vmem:[%s191 + $0xa0] sm:$0xff]
                %226 = vst [vmem:[%s192 + $0x80] sm:$0xff] %v225
                %v227 = vld [vmem:[%s191 + $0xa8] sm:$0xff]
                %228 = vst [vmem:[%s192 + $0x88] sm:$0xff] %v227
                %v229 = vld [vmem:[%s191 + $0xb0] sm:$0xff]
                %230 = vst [vmem:[%s192 + $0x90] sm:$0xff] %v229
                %v231 = vld [vmem:[%s191 + $0xb8] sm:$0xff]
                %232 = vst [vmem:[%s192 + $0x98] sm:$0xff] %v231
                %v233 = vld [vmem:[%s191 + $0xc0] sm:$0xff]
                %234 = vst [vmem:[%s192 + $0xa0] sm:$0xff] %v233
                %v235 = vld [vmem:[%s191 + $0xc8] sm:$0xff]
                %236 = vst [vmem:[%s192 + $0xa8] sm:$0xff] %v235
                %v237 = vld [vmem:[%s191 + $0xd0] sm:$0xff]
                %238 = vst [vmem:[%s192 + $0xb0] sm:$0xff] %v237
                %v239 = vld [vmem:[%s191 + $0xd8] sm:$0xff]
                %240 = vst [vmem:[%s192 + $0xb8] sm:$0xff] %v239
                %v241 = vld [vmem:[%s191 + $0xe0] sm:$0xff]
                %242 = vst [vmem:[%s192 + $0xc0] sm:$0xff] %v241
                %v243 = vld [vmem:[%s191 + $0xe8] sm:$0xff]
                %244 = vst [vmem:[%s192 + $0xc8] sm:$0xff] %v243
                %v245 = vld [vmem:[%s191 + $0xf0] sm:$0xff]
                %246 = vst [vmem:[%s192 + $0xd0] sm:$0xff] %v245
                %v247 = vld [vmem:[%s191 + $0xf8] sm:$0xff]
                %248 = vst [vmem:[%s192 + $0xd8] sm:$0xff] %v247
                %v249 = vld [vmem:[%s191 + $0x100] sm:$0xff]
                %250 = vst [vmem:[%s192 + $0xe0] sm:$0xff] %v249
                %v251 = vld [vmem:[%s191 + $0x108] sm:$0xff]
                %252 = vst [vmem:[%s192 + $0xe8] sm:$0xff] %v251
                %v253 = vld [vmem:[%s191 + $0x110] sm:$0xff]
                %254 = vst [vmem:[%s192 + $0xf0] sm:$0xff] %v253
                %v255 = vld [vmem:[%s191 + $0x118] sm:$0xff]
                %256 = vst [vmem:[%s192 + $0xf8] sm:$0xff] %v255
                %v257 = vld [vmem:[%s191 + $0x140] sm:$0xff]
                %258 = vst [vmem:[%s192 + $0x100] sm:$0xff] %v257
                %v259 = vld [vmem:[%s191 + $0x148] sm:$0xff]
                %260 = vst [vmem:[%s192 + $0x108] sm:$0xff] %v259
                %v261 = vld [vmem:[%s191 + $0x150] sm:$0xff]
                %262 = vst [vmem:[%s192 + $0x110] sm:$0xff] %v261
                %v263 = vld [vmem:[%s191 + $0x158] sm:$0xff]
                %264 = vst [vmem:[%s192 + $0x118] sm:$0xff] %v263
                %v265 = vld [vmem:[%s191 + $0x160] sm:$0xff]
                %266 = vst [vmem:[%s192 + $0x120] sm:$0xff] %v265
                %v267 = vld [vmem:[%s191 + $0x168] sm:$0xff]
                %268 = vst [vmem:[%s192 + $0x128] sm:$0xff] %v267
                %v269 = vld [vmem:[%s191 + $0x170] sm:$0xff]
                %270 = vst [vmem:[%s192 + $0x130] sm:$0xff] %v269
                %v271 = vld [vmem:[%s191 + $0x178] sm:$0xff]
                %272 = vst [vmem:[%s192 + $0x138] sm:$0xff] %v271
                %v273 = vld [vmem:[%s191 + $0x180] sm:$0xff]
                %274 = vst [vmem:[%s192 + $0x140] sm:$0xff] %v273
                %v275 = vld [vmem:[%s191 + $0x188] sm:$0xff]
                %276 = vst [vmem:[%s192 + $0x148] sm:$0xff] %v275
                %v277 = vld [vmem:[%s191 + $0x190] sm:$0xff]
                %278 = vst [vmem:[%s192 + $0x150] sm:$0xff] %v277
                %v279 = vld [vmem:[%s191 + $0x198] sm:$0xff]
                %280 = vst [vmem:[%s192 + $0x158] sm:$0xff] %v279
                %v281 = vld [vmem:[%s191 + $0x1a0] sm:$0xff]
                %282 = vst [vmem:[%s192 + $0x160] sm:$0xff] %v281
                %v283 = vld [vmem:[%s191 + $0x1a8] sm:$0xff]
                %284 = vst [vmem:[%s192 + $0x168] sm:$0xff] %v283
                %v285 = vld [vmem:[%s191 + $0x1b0] sm:$0xff]
                %286 = vst [vmem:[%s192 + $0x170] sm:$0xff] %v285
                %v287 = vld [vmem:[%s191 + $0x1b8] sm:$0xff]
                %288 = vst [vmem:[%s192 + $0x178] sm:$0xff] %v287
                %v289 = vld [vmem:[%s191 + $0x1e0] sm:$0xff]
                %290 = vst [vmem:[%s192 + $0x180] sm:$0xff] %v289
                %v291 = vld [vmem:[%s191 + $0x1e8] sm:$0xff]
                %292 = vst [vmem:[%s192 + $0x188] sm:$0xff] %v291
                %v293 = vld [vmem:[%s191 + $0x1f0] sm:$0xff]
                %294 = vst [vmem:[%s192 + $0x190] sm:$0xff] %v293
                %v295 = vld [vmem:[%s191 + $0x1f8] sm:$0xff]
                %296 = vst [vmem:[%s192 + $0x198] sm:$0xff] %v295
                %v297 = vld [vmem:[%s191 + $0x200] sm:$0xff]
                %298 = vst [vmem:[%s192 + $0x1a0] sm:$0xff] %v297
                %v299 = vld [vmem:[%s191 + $0x208] sm:$0xff]
                %300 = vst [vmem:[%s192 + $0x1a8] sm:$0xff] %v299
                %v301 = vld [vmem:[%s191 + $0x210] sm:$0xff]
                %302 = vst [vmem:[%s192 + $0x1b0] sm:$0xff] %v301
                %v303 = vld [vmem:[%s191 + $0x218] sm:$0xff]
                %304 = vst [vmem:[%s192 + $0x1b8] sm:$0xff] %v303
                %v305 = vld [vmem:[%s191 + $0x220] sm:$0xff]
                %306 = vst [vmem:[%s192 + $0x1c0] sm:$0xff] %v305
                %v307 = vld [vmem:[%s191 + $0x228] sm:$0xff]
                %308 = vst [vmem:[%s192 + $0x1c8] sm:$0xff] %v307
                %v309 = vld [vmem:[%s191 + $0x230] sm:$0xff]
                %310 = vst [vmem:[%s192 + $0x1d0] sm:$0xff] %v309
                %v311 = vld [vmem:[%s191 + $0x238] sm:$0xff]
                %312 = vst [vmem:[%s192 + $0x1d8] sm:$0xff] %v311
                %v313 = vld [vmem:[%s191 + $0x240] sm:$0xff]
                %314 = vst [vmem:[%s192 + $0x1e0] sm:$0xff] %v313
                %v315 = vld [vmem:[%s191 + $0x248] sm:$0xff]
                %316 = vst [vmem:[%s192 + $0x1e8] sm:$0xff] %v315
                %v317 = vld [vmem:[%s191 + $0x250] sm:$0xff]
                %318 = vst [vmem:[%s192 + $0x1f0] sm:$0xff] %v317
                %v319 = vld [vmem:[%s191 + $0x258] sm:$0xff]
                %320 = vst [vmem:[%s192 + $0x1f8] sm:$0xff] %v319
                %s321 = sadd.s32 1, %s190
                %p322 = scmp.ge.s32.totalorder %s321, %s183
                %s323 = scalar_select %p322, 0, %s321
                %s324 = smul.u32 %s323, 128
                %s325 = smul.u32 %s323, 128
                %s326 = scalar_lea.vmem %s173, %s324
                %s327 = scalar_lea.vmem %s161, %s325 [#allocation2]
              $region41: #{tpu_custom_call.1} parent=35 // loop_footer
                %s187 = sadd.s32 %s185, 1
              $region42: #{tpu_custom_call.1} parent=35 // loop_footer_branch
                %184 = sbr.rel target = $region38
              $region43: #{tpu_custom_call.1} parent=35 // loop_exit
                _
              %s328 = sshrl.u32 %s174, 4
              %s329 = sand.u32 %s174, 15
              %s330 = smul.u32 %s328, 16
              %s331 = smul.u32 8, %s330
              %s332 = scalar_lea.vmem %s173, %s331
              %s333 = smul.u32 8, %s330
              %s334 = scalar_lea.vmem %s161, %s333 [#allocation2]
              // While loop
              $region44: #{tpu_custom_call.1} parent=35 // loop_pre_header
                _
              $region45: #{tpu_custom_call.1} parent=35 // loop_header
                %s336 = sphi 0, %s338
                %p337 = scmp.ge.s32.totalorder %s336, %s329
                %s341 = sphi 0, %s354
                %s342 = sphi %s332, %s357
                %s343 = sphi %s334, %s358
              $region46: #{tpu_custom_call.1} parent=35 // loop_header_branch
                %340 = sbr.rel (%p337) target = $region50
              $region47: #{tpu_custom_call.1} parent=35 // loop_body
                %v344 = vld [vmem:[%s342] sm:$0xff]
                %345 = vst [vmem:[%s343] sm:$0xff] %v344
                %v346 = vld [vmem:[%s342 + $0xa0] sm:$0xff]
                %347 = vst [vmem:[%s343 + $0x80] sm:$0xff] %v346
                %v348 = vld [vmem:[%s342 + $0x140] sm:$0xff]
                %349 = vst [vmem:[%s343 + $0x100] sm:$0xff] %v348
                %v350 = vld [vmem:[%s342 + $0x1e0] sm:$0xff]
                %351 = vst [vmem:[%s343 + $0x180] sm:$0xff] %v350
                %s352 = sadd.s32 1, %s341
                %p353 = scmp.ge.s32.totalorder %s352, %s329
                %s354 = scalar_select %p353, 0, %s352
                %s355 = smul.u32 %s354, 8
                %s356 = smul.u32 %s354, 8
                %s357 = scalar_lea.vmem %s332, %s355
                %s358 = scalar_lea.vmem %s334, %s356 [#allocation2]
              $region48: #{tpu_custom_call.1} parent=35 // loop_footer
                %s338 = sadd.s32 %s336, 1
              $region49: #{tpu_custom_call.1} parent=35 // loop_footer_branch
                %335 = sbr.rel target = $region45
              $region50: #{tpu_custom_call.1} parent=35 // loop_exit
                _
            $region36: #{tpu_custom_call.1} parent=27 // pred_fallthru
              _
          $region28: #{tpu_custom_call.1} parent=23 // pred_fallthru
            _
          %539 = vnop
        $region24: #{tpu_custom_call.1} parent=19 // pred_fallthru
          _
        // Predicated region
        $region73: #{tpu_custom_call.1} parent=19 // pred_check
          %p540 = pneg %p78
        $region74: #{tpu_custom_call.1} parent=19 // pred_check_branch
          %542 = sbr.rel (%p540) target = $region76
        $region75: #{tpu_custom_call.1} parent=19 // pred_region
          %s543 = sand.u32 %s68, 1
          %s544 = sand.u32 %s68, 1
          %s545 = smul.addr %s544, 128
          %s546 = scalar_lea.vmem [#allocation3], %s545
          %s547 = sadd.s32 %s19, 1
          %s548 = smul.u32 %s547, 4
          %s549 = smul.u32 2, %s548
          %s550 = smul.addr %s549, 2
          %s551 = smul.addr %s20, 80
          %s552 = sadd.s32 %s550, %s551
          %s553 = smul.addr %s552, 8
          %s554 = scalar_lea.vmem %s1, %s553
          // Predicated region
          $region77: #{tpu_custom_call.1} parent=75 // pred_check
            _
          $region78: #{tpu_custom_call.1} parent=75 // pred_check_branch
            %556 = sbr.rel (0) target = $region80
          $region79: #{tpu_custom_call.1} parent=75 // pred_region
            // Predicated region
            $region81: #{tpu_custom_call.1} parent=79 // pred_check
              _
            $region82: #{tpu_custom_call.1} parent=79 // pred_check_branch
              %558 = sbr.rel (0) target = $region84
            $region83: #{tpu_custom_call.1} parent=79 // pred_region
              // Predicated region
              $region96: #{tpu_custom_call.1} parent=83 // pred_check
                _
              $region97: #{tpu_custom_call.1} parent=83 // pred_check_branch
                %603 = sbr.rel (0) target = $region99
              $region98: #{tpu_custom_call.1} parent=83 // pred_region
                loop: start=0, step=1, limit=1
                $region100: #{tpu_custom_call.1} parent=98 // loop_pre_header
                  _
                $region101: #{tpu_custom_call.1} parent=98 // loop_header
                  %s605 = sphi 0, %s609
                  %p606 = scmp.ge.s32.totalorder %s605, 1
                  %s610 = sphi %s554, %s554
                  %s611 = sphi %s546, %s546
                $region102: #{tpu_custom_call.1} parent=98 // loop_header_branch
                  %608 = sbr.rel (%p606) target = $region106
                $region103: #{tpu_custom_call.1} parent=98 // loop_body
                  %v612 = vld [vmem:[%s610] sm:$0xff]
                  %613 = vst [vmem:[%s611] sm:$0xff] %v612
                  %v614 = vld [vmem:[%s610 + $0x8] sm:$0xff]
                  %615 = vst [vmem:[%s611 + $0x8] sm:$0xff] %v614
                  %v616 = vld [vmem:[%s610 + $0x10] sm:$0xff]
                  %617 = vst [vmem:[%s611 + $0x10] sm:$0xff] %v616
                  %v618 = vld [vmem:[%s610 + $0x18] sm:$0xff]
                  %619 = vst [vmem:[%s611 + $0x18] sm:$0xff] %v618
                  %v620 = vld [vmem:[%s610 + $0xa0] sm:$0xff]
                  %621 = vst [vmem:[%s611 + $0x20] sm:$0xff] %v620
                  %v622 = vld [vmem:[%s610 + $0xa8] sm:$0xff]
                  %623 = vst [vmem:[%s611 + $0x28] sm:$0xff] %v622
                  %v624 = vld [vmem:[%s610 + $0xb0] sm:$0xff]
                  %625 = vst [vmem:[%s611 + $0x30] sm:$0xff] %v624
                  %v626 = vld [vmem:[%s610 + $0xb8] sm:$0xff]
                  %627 = vst [vmem:[%s611 + $0x38] sm:$0xff] %v626
                  %v628 = vld [vmem:[%s610 + $0x140] sm:$0xff]
                  %629 = vst [vmem:[%s611 + $0x40] sm:$0xff] %v628
                  %v630 = vld [vmem:[%s610 + $0x148] sm:$0xff]
                  %631 = vst [vmem:[%s611 + $0x48] sm:$0xff] %v630
                  %v632 = vld [vmem:[%s610 + $0x150] sm:$0xff]
                  %633 = vst [vmem:[%s611 + $0x50] sm:$0xff] %v632
                  %v634 = vld [vmem:[%s610 + $0x158] sm:$0xff]
                  %635 = vst [vmem:[%s611 + $0x58] sm:$0xff] %v634
                  %v636 = vld [vmem:[%s610 + $0x1e0] sm:$0xff]
                  %637 = vst [vmem:[%s611 + $0x60] sm:$0xff] %v636
                  %v638 = vld [vmem:[%s610 + $0x1e8] sm:$0xff]
                  %639 = vst [vmem:[%s611 + $0x68] sm:$0xff] %v638
                  %v640 = vld [vmem:[%s610 + $0x1f0] sm:$0xff]
                  %641 = vst [vmem:[%s611 + $0x70] sm:$0xff] %v640
                  %v642 = vld [vmem:[%s610 + $0x1f8] sm:$0xff]
                  %643 = vst [vmem:[%s611 + $0x78] sm:$0xff] %v642
                $region104: #{tpu_custom_call.1} parent=98 // loop_footer
                  %s609 = sadd.s32 1, %s605
                $region105: #{tpu_custom_call.1} parent=98 // loop_footer_branch
                  %604 = sbr.rel target = $region101
                $region106: #{tpu_custom_call.1} parent=98 // loop_exit
                  _
              $region99: #{tpu_custom_call.1} parent=83 // pred_fallthru
                _
              // Predicated region
              $region107: #{tpu_custom_call.1} parent=83 // pred_check
                _
              $region108: #{tpu_custom_call.1} parent=83 // pred_check_branch
                %645 = sbr.rel target = $region110
              $region109: #{tpu_custom_call.1} parent=83 // pred_region
                _
              $region110: #{tpu_custom_call.1} parent=83 // pred_fallthru
                _
            $region84: #{tpu_custom_call.1} parent=79 // pred_fallthru
              _
            // Predicated region
            $region85: #{tpu_custom_call.1} parent=79 // pred_check
              _
            $region86: #{tpu_custom_call.1} parent=79 // pred_check_branch
              %560 = sbr.rel target = $region88
            $region87: #{tpu_custom_call.1} parent=79 // pred_region
              loop: start=0, step=1, limit=1
              $region89: #{tpu_custom_call.1} parent=87 // loop_pre_header
                _
              $region90: #{tpu_custom_call.1} parent=87 // loop_header
                %s563 = sphi 0, %s567
                %p564 = scmp.ge.s32.totalorder %s563, 1
                %s568 = sphi %s554, %s554
                %s569 = sphi %s546, %s546
              $region91: #{tpu_custom_call.1} parent=87 // loop_header_branch
                %566 = sbr.rel (%p564) target = $region95
              $region92: #{tpu_custom_call.1} parent=87 // loop_body
                %v570 = vld [vmem:[%s568] sm:$0xff]
                %571 = vst [vmem:[%s569] sm:$0xff] %v570
                %v572 = vld [vmem:[%s568 + $0x8] sm:$0xff]
                %573 = vst [vmem:[%s569 + $0x8] sm:$0xff] %v572
                %v574 = vld [vmem:[%s568 + $0x10] sm:$0xff]
                %575 = vst [vmem:[%s569 + $0x10] sm:$0xff] %v574
                %v576 = vld [vmem:[%s568 + $0x18] sm:$0xff]
                %577 = vst [vmem:[%s569 + $0x18] sm:$0xff] %v576
                %v578 = vld [vmem:[%s568 + $0xa0] sm:$0xff]
                %579 = vst [vmem:[%s569 + $0x20] sm:$0xff] %v578
                %v580 = vld [vmem:[%s568 + $0xa8] sm:$0xff]
                %581 = vst [vmem:[%s569 + $0x28] sm:$0xff] %v580
                %v582 = vld [vmem:[%s568 + $0xb0] sm:$0xff]
                %583 = vst [vmem:[%s569 + $0x30] sm:$0xff] %v582
                %v584 = vld [vmem:[%s568 + $0xb8] sm:$0xff]
                %585 = vst [vmem:[%s569 + $0x38] sm:$0xff] %v584
                %v586 = vld [vmem:[%s568 + $0x140] sm:$0xff]
                %587 = vst [vmem:[%s569 + $0x40] sm:$0xff] %v586
                %v588 = vld [vmem:[%s568 + $0x148] sm:$0xff]
                %589 = vst [vmem:[%s569 + $0x48] sm:$0xff] %v588
                %v590 = vld [vmem:[%s568 + $0x150] sm:$0xff]
                %591 = vst [vmem:[%s569 + $0x50] sm:$0xff] %v590
                %v592 = vld [vmem:[%s568 + $0x158] sm:$0xff]
                %593 = vst [vmem:[%s569 + $0x58] sm:$0xff] %v592
                %v594 = vld [vmem:[%s568 + $0x1e0] sm:$0xff]
                %595 = vst [vmem:[%s569 + $0x60] sm:$0xff] %v594
                %v596 = vld [vmem:[%s568 + $0x1e8] sm:$0xff]
                %597 = vst [vmem:[%s569 + $0x68] sm:$0xff] %v596
                %v598 = vld [vmem:[%s568 + $0x1f0] sm:$0xff]
                %599 = vst [vmem:[%s569 + $0x70] sm:$0xff] %v598
                %v600 = vld [vmem:[%s568 + $0x1f8] sm:$0xff]
                %601 = vst [vmem:[%s569 + $0x78] sm:$0xff] %v600
              $region93: #{tpu_custom_call.1} parent=87 // loop_footer
                %s567 = sadd.s32 1, %s563
              $region94: #{tpu_custom_call.1} parent=87 // loop_footer_branch
                %562 = sbr.rel target = $region90
              $region95: #{tpu_custom_call.1} parent=87 // loop_exit
                _
            $region88: #{tpu_custom_call.1} parent=79 // pred_fallthru
              _
          $region80: #{tpu_custom_call.1} parent=75 // pred_fallthru
            _
          %646 = vnop
        $region76: #{tpu_custom_call.1} parent=19 // pred_fallthru
          _
      $region20: #{tpu_custom_call.1} parent=5 // pred_fallthru
        _
      %p647 = scmp.le.s32.totalorder 1, %s12
      %p648 = scmp.lt.s32.totalorder %s12, 3
      %p649 = pnand %p647, %p648
      %p650 = pneg %p649
      // Predicated region
      $region111: #{tpu_custom_call.1} parent=5 // pred_check
        _
      $region112: #{tpu_custom_call.1} parent=5 // pred_check_branch
        %652 = sbr.rel (%p649) target = $region114
      $region113: #{tpu_custom_call.1} parent=5 // pred_region
        %s653 = ssub.s32 %s12, 1
        %s654 = sand.u32 %s39, 1
        %s655 = sand.u32 %s39, 1
        %s656 = smul.addr %s655, 512
        %s657 = scalar_lea.vmem [#allocation2], %s656
        // Predicated region
        $region115: #{tpu_custom_call.1} parent=113 // pred_check
          %p658 = pneg %p52
        $region116: #{tpu_custom_call.1} parent=113 // pred_check_branch
          %660 = sbr.rel (%p658) target = $region118
        $region117: #{tpu_custom_call.1} parent=113 // pred_region
          _
        $region118: #{tpu_custom_call.1} parent=113 // pred_fallthru
          _
        %s661 = sand.u32 %s71, 1
        %s662 = sand.u32 %s71, 1
        %s663 = smul.addr %s662, 128
        %s664 = scalar_lea.vmem [#allocation3], %s663
        // Predicated region
        $region119: #{tpu_custom_call.1} parent=113 // pred_check
          %p665 = pneg %p84
        $region120: #{tpu_custom_call.1} parent=113 // pred_check_branch
          %667 = sbr.rel (%p665) target = $region122
        $region121: #{tpu_custom_call.1} parent=113 // pred_region
          _
        $region122: #{tpu_custom_call.1} parent=113 // pred_fallthru
          _
        %s668 = sand.u32 %s39, 1
        %s669 = sand.u32 %s39, 1
        %s670 = smul.addr %s669, 512
        %s671 = scalar_lea.vmem [#allocation2], %s670
        %p672 = pneg %p52
        %p673 = pneg %p49
        %s674 = sand.u32 %s71, 1
        %s675 = sand.u32 %s71, 1
        %s676 = smul.addr %s675, 128
        %s677 = scalar_lea.vmem [#allocation3], %s676
        %p678 = pneg %p84
        %p679 = pneg %p81
        %p680 = pneg %p105
        %p681 = pneg %p102
        %p682 = pneg %p133
        %p683 = pneg %p130
        %s684 = sand.u32 %s120, 1
        %s685 = scalar_lea.sflag [#allocation5], %s684
        %s686 = sand.u32 %s120, 1
        %s687 = smul.addr %s686, 64
        %s688 = scalar_lea.vmem [#allocation4], %s687
        %s689 = smul.u32 8, %s21
        %s690 = ssub.s32 10, %s689
        %p691 = scmp.lt.s32.totalorder %s690, 8
        %s692 = scalar_select %p691, %s690, 8
        %s693 = smul.u32 512, %s692
        %s694 = smul.u32 %s693, 2
        %s695 = sadd.s32 %s21, 1
        %s696 = smul.u32 %s695, 4
        %s697 = smul.u32 2, %s696
        %s698 = smul.u32 8, %s21
        %v699 = vld [vmem:[%s657] sm:$0xff]
        %v700 = vld [vmem:[%s657 + $0x8] sm:$0x3]
        %v701 = vld [vmem:[%s657 + $0x10] sm:$0xff]
        %v702 = vld [vmem:[%s657 + $0x18] sm:$0x3]
        %v703 = vld [vmem:[%s657 + $0x20] sm:$0xff]
        %v704 = vld [vmem:[%s657 + $0x28] sm:$0x3]
        %v705 = vld [vmem:[%s657 + $0x30] sm:$0xff]
        %v706 = vld [vmem:[%s657 + $0x38] sm:$0x3]
        %v707 = vld [vmem:[%s657 + $0x40] sm:$0xff]
        %v708 = vld [vmem:[%s657 + $0x48] sm:$0x3]
        %v709 = vld [vmem:[%s657 + $0x50] sm:$0xff]
        %v710 = vld [vmem:[%s657 + $0x58] sm:$0x3]
        %v711 = vld [vmem:[%s657 + $0x60] sm:$0xff]
        %v712 = vld [vmem:[%s657 + $0x68] sm:$0x3]
        %v713 = vld [vmem:[%s657 + $0x70] sm:$0xff]
        %v714 = vld [vmem:[%s657 + $0x78] sm:$0x3]
        %vm731 = vcmask 1046528
        %v732 = vrot.slane %v699, 1
        %v733 = vrot.slane %v700, 1
        %v734 = vsel %vm731, %v732, %v733
        %v735 = vrot.slane %v701, 1
        %v736 = vrot.slane %v702, 1
        %v737 = vsel %vm731, %v735, %v736
        %v738 = vrot.slane %v703, 1
        %v739 = vrot.slane %v704, 1
        %v740 = vsel %vm731, %v738, %v739
        %v741 = vrot.slane %v705, 1
        %v742 = vrot.slane %v706, 1
        %v743 = vsel %vm731, %v741, %v742
        %v744 = vrot.slane %v707, 1
        %v745 = vrot.slane %v708, 1
        %v746 = vsel %vm731, %v744, %v745
        %v747 = vrot.slane %v709, 1
        %v748 = vrot.slane %v710, 1
        %v749 = vsel %vm731, %v747, %v748
        %v750 = vrot.slane %v711, 1
        %v751 = vrot.slane %v712, 1
        %v752 = vsel %vm731, %v750, %v751
        %v753 = vrot.slane %v713, 1
        %v754 = vrot.slane %v714, 1
        %v755 = vsel %vm731, %v753, %v754
        %756 = vrot.lane.b32.xlu0 %v734, 4
        %v757 = vpop.permute.xlu0 %756
        %758 = vrot.lane.b32.xlu0 %v737, 4
        %v759 = vpop.permute.xlu0 %758
        %760 = vrot.lane.b32.xlu0 %v740, 4
        %v761 = vpop.permute.xlu0 %760
        %762 = vrot.lane.b32.xlu0 %v743, 4
        %v763 = vpop.permute.xlu0 %762
        %764 = vrot.lane.b32.xlu0 %v746, 4
        %v765 = vpop.permute.xlu0 %764
        %766 = vrot.lane.b32.xlu0 %v749, 4
        %v767 = vpop.permute.xlu0 %766
        %768 = vrot.lane.b32.xlu0 %v752, 4
        %v769 = vpop.permute.xlu0 %768
        %770 = vrot.lane.b32.xlu0 %v755, 4
        %v771 = vpop.permute.xlu0 %770
        %vm780 = vcmask 1045504
        %v781 = vrot.slane %v699, 2
        %v782 = vrot.slane %v700, 2
        %v783 = vsel %vm780, %v781, %v782
        %v784 = vrot.slane %v701, 2
        %v785 = vrot.slane %v702, 2
        %v786 = vsel %vm780, %v784, %v785
        %v787 = vrot.slane %v703, 2
        %v788 = vrot.slane %v704, 2
        %v789 = vsel %vm780, %v787, %v788
        %v790 = vrot.slane %v705, 2
        %v791 = vrot.slane %v706, 2
        %v792 = vsel %vm780, %v790, %v791
        %v793 = vrot.slane %v707, 2
        %v794 = vrot.slane %v708, 2
        %v795 = vsel %vm780, %v793, %v794
        %v796 = vrot.slane %v709, 2
        %v797 = vrot.slane %v710, 2
        %v798 = vsel %vm780, %v796, %v797
        %v799 = vrot.slane %v711, 2
        %v800 = vrot.slane %v712, 2
        %v801 = vsel %vm780, %v799, %v800
        %v802 = vrot.slane %v713, 2
        %v803 = vrot.slane %v714, 2
        %v804 = vsel %vm780, %v802, %v803
        %805 = vrot.lane.b32.xlu0 %v783, 8
        %v806 = vpop.permute.xlu0 %805
        %807 = vrot.lane.b32.xlu0 %v786, 8
        %v808 = vpop.permute.xlu0 %807
        %809 = vrot.lane.b32.xlu0 %v789, 8
        %v810 = vpop.permute.xlu0 %809
        %811 = vrot.lane.b32.xlu0 %v792, 8
        %v812 = vpop.permute.xlu0 %811
        %813 = vrot.lane.b32.xlu0 %v795, 8
        %v814 = vpop.permute.xlu0 %813
        %815 = vrot.lane.b32.xlu0 %v798, 8
        %v816 = vpop.permute.xlu0 %815
        %817 = vrot.lane.b32.xlu0 %v801, 8
        %v818 = vpop.permute.xlu0 %817
        %819 = vrot.lane.b32.xlu0 %v804, 8
        %v820 = vpop.permute.xlu0 %819
        %vm829 = vcmask 31744
        %v830 = vsel %vm829, %v699, %v757
        %v831 = vsel %vm829, %v701, %v759
        %v832 = vsel %vm829, %v703, %v761
        %v833 = vsel %vm829, %v705, %v763
        %v834 = vsel %vm829, %v707, %v765
        %v835 = vsel %vm829, %v709, %v767
        %v836 = vsel %vm829, %v711, %v769
        %v837 = vsel %vm829, %v713, %v771
        %vm838 = vcmask 64512
        %v839 = vsel %vm838, %v830, %v806
        %v840 = vsel %vm838, %v831, %v808
        %v841 = vsel %vm838, %v832, %v810
        %v842 = vsel %vm838, %v833, %v812
        %v843 = vsel %vm838, %v834, %v814
        %v844 = vsel %vm838, %v835, %v816
        %v845 = vsel %vm838, %v836, %v818
        %v846 = vsel %vm838, %v837, %v820
        %v847 = vld [vmem:[%s664] sm:$0xff]
        %v848 = vld [vmem:[%s664 + $0x8] sm:$0x3]
        %v849 = vld [vmem:[%s664 + $0x10] sm:$0xff]
        %v850 = vld [vmem:[%s664 + $0x18] sm:$0x3]
        %v855 = vrot.slane %v847, 1
        %v856 = vrot.slane %v848, 1
        %v857 = vsel %vm731, %v855, %v856
        %v858 = vrot.slane %v849, 1
        %v859 = vrot.slane %v850, 1
        %v860 = vsel %vm731, %v858, %v859
        %861 = vrot.lane.b32.xlu0 %v857, 4
        %v862 = vpop.permute.xlu0 %861
        %863 = vrot.lane.b32.xlu0 %v860, 4
        %v864 = vpop.permute.xlu0 %863
        %v867 = vrot.slane %v847, 2
        %v868 = vrot.slane %v848, 2
        %v869 = vsel %vm780, %v867, %v868
        %v870 = vrot.slane %v849, 2
        %v871 = vrot.slane %v850, 2
        %v872 = vsel %vm780, %v870, %v871
        %873 = vrot.lane.b32.xlu0 %v869, 8
        %v874 = vpop.permute.xlu0 %873
        %875 = vrot.lane.b32.xlu0 %v872, 8
        %v876 = vpop.permute.xlu0 %875
        %v879 = vsel %vm829, %v847, %v862
        %v880 = vsel %vm829, %v849, %v864
        %v881 = vsel %vm838, %v879, %v874
        %v882 = vsel %vm838, %v880, %v876
        %v883 = vld [vmem:[%s2] sm:$0xff]
        %v884 = vld [vmem:[%s2 + $0x8] sm:$0xf]
        %s885 = scalar_lea.vmem %s2, 16
        %v886 = vld [vmem:[%s885] sm:$0xff]
        %v887 = vld [vmem:[%s885 + $0x8] sm:$0xf]
        %vm888 = vcmask 97280
        %v890 = vsel %vm888, %v840, 0
        %v893 = vsel %vm888, %v841, 0
        %v896 = vsel %vm888, %v842, 0
        %v899 = vsel %vm888, %v843, 0
        %v902 = vsel %vm888, %v844, 0
        %v905 = vsel %vm888, %v845, 0
        %v908 = vsel %vm888, %v846, 0
        %v911 = vsel %vm888, %v881, 0
        %vm913 = vcmask 1043456
        %v915 = vsel %vm913, %v887, 0
        %917 = vmatprep.subr.mxu0 0.0
        %918 = vmatpush1.msra.mxu0 %v886
        %919 = vmatprep.subr.mxu0 0.0
        %920 = vmatpush1.msra.mxu0 %v915
        %921 = vmatprep.subr.mxu0 0.0
        %922 = vmatpush1.msra.mxu0 0.0
        %923 = vmatprep.subr.mxu0 0.0
        %924 = vmatpush1.msra.mxu0 0.0
        %925 = vmatprep.subr.mxu0 0.0
        %926 = vmatpush1.msra.mxu0 0.0
        %927 = vmatprep.subr.mxu0 0.0
        %928 = vmatpush1.msra.mxu0 0.0
        %929 = vmatprep.subr.mxu0 0.0
        %930 = vmatpush1.msra.mxu0 0.0
        %931 = vmatprep.subr.mxu0 0.0
        %932 = vmatpush1.msra.mxu0 0.0
        %933 = vmatprep.subr.mxu0 0.0
        %934 = vmatpush1.msra.mxu0 0.0
        %935 = vmatprep.subr.mxu0 0.0
        %936 = vmatpush1.msra.mxu0 0.0
        %937 = vmatprep.subr.mxu0 0.0
        %938 = vmatpush1.msra.mxu0 0.0
        %939 = vmatprep.subr.mxu0 0.0
        %940 = vmatpush1.msra.mxu0 0.0
        %941 = vmatprep.subr.mxu0 0.0
        %942 = vmatpush1.msra.mxu0 0.0
        %943 = vmatprep.subr.mxu0 0.0
        %944 = vmatpush1.msra.mxu0 0.0
        %945 = vmatprep.subr.mxu0 0.0
        %946 = vmatpush1.msra.mxu0 0.0
        %947 = vmatprep.subr.mxu0 0.0
        %948 = vmatpush1.msra.mxu0 0.0
        %949 = vmatprep.subr.mxu0 0.0
        %950 = vmatpush1.msra.mxu0 0.0
        %951 = vmatprep.subr.mxu0 0.0
        %952 = vmatpush1.msra.mxu0 0.0
        %953 = vmatprep.subr.mxu0 0.0
        %954 = vmatpush1.msra.mxu0 0.0
        %955 = vmatprep.subr.mxu0 0.0
        %956 = vmatpush1.msra.mxu0 0.0
        %957 = vmatprep.subr.mxu0 0.0
        %958 = vmatpush1.msra.mxu0 0.0
        %959 = vmatprep.subr.mxu0 0.0
        %960 = vmatpush1.msra.mxu0 0.0
        %961 = vmatprep.subr.mxu0 0.0
        %962 = vmatpush1.msra.mxu0 0.0
        %963 = vmatprep.subr.mxu0 0.0
        %964 = vmatpush1.msra.mxu0 0.0
        %965 = vmatprep.subr.mxu0 0.0
        %966 = vmatpush1.msra.mxu0 0.0
        %967 = vmatprep.subr.mxu0 0.0
        %968 = vmatpush1.msra.mxu0 0.0
        %969 = vmatprep.subr.mxu0 0.0
        %970 = vmatpush1.msra.mxu0 0.0
        %971 = vmatprep.subr.mxu0 0.0
        %972 = vmatpush1.msra.mxu0 0.0
        %973 = vmatprep.subr.mxu0 0.0
        %974 = vmatpush1.msra.mxu0 0.0
        %975 = vmatprep.subr.mxu0 0.0
        %976 = vmatpush1.msra.mxu0 0.0
        %977 = vmatprep.subr.mxu0 0.0
        %978 = vmatpush1.msra.mxu0 0.0
        %979 = vmatprep.subr.mxu0 0.0
        %980 = vmatpush1.msra.mxu0 0.0
        %981 = vmatprep.mubr.f32.mxu0 0.0
        %982 = vmatmul.mubr.f32.gmra.mrb[0].mxu0 %v890
        %v983 = vpop.f32.mrb[0].mxu0
        %v984 = vadd.f32 0.0, %v983
        %v985 = vpop.f32.mrb[0].mxu0
        %986 = vmatprep.mubr.f32.mxu0 0.0
        %987 = vmatmul.mubr.f32.gmra.mrb[0].mxu0 %v893
        %v988 = vpop.f32.mrb[0].mxu0
        %v989 = vadd.f32 0.0, %v988
        %v990 = vpop.f32.mrb[0].mxu0
        %991 = vmatprep.mubr.f32.mxu0 0.0
        %992 = vmatmul.mubr.f32.gmra.mrb[0].mxu0 %v896
        %v993 = vpop.f32.mrb[0].mxu0
        %v994 = vadd.f32 0.0, %v993
        %v995 = vpop.f32.mrb[0].mxu0
        %996 = vmatprep.mubr.f32.mxu0 0.0
        %997 = vmatmul.mubr.f32.gmra.mrb[0].mxu0 %v899
        %v998 = vpop.f32.mrb[0].mxu0
        %v999 = vadd.f32 0.0, %v998
        %v1000 = vpop.f32.mrb[0].mxu0
        %1001 = vmatprep.mubr.f32.mxu0 0.0
        %1002 = vmatmul.mubr.f32.gmra.mrb[0].mxu0 %v902
        %v1003 = vpop.f32.mrb[0].mxu0
        %v1004 = vadd.f32 0.0, %v1003
        %v1005 = vpop.f32.mrb[0].mxu0
        %1006 = vmatprep.mubr.f32.mxu0 0.0
        %1007 = vmatmul.mubr.f32.gmra.mrb[0].mxu0 %v905
        %v1008 = vpop.f32.mrb[0].mxu0
        %v1009 = vadd.f32 0.0, %v1008
        %v1010 = vpop.f32.mrb[0].mxu0
        %1011 = vmatprep.mubr.f32.mxu0 0.0
        %1012 = vmatmul.mubr.f32.gmra.mrb[0].mxu0 %v908
        %v1013 = vpop.f32.mrb[0].mxu0
        %v1014 = vadd.f32 0.0, %v1013
        %v1015 = vpop.f32.mrb[0].mxu0
        %1016 = vmatprep.mubr.f32.mxu0 0.0
        %1017 = vmatmul.mubr.f32.gmra.mrb[0].mxu0 %v911
        %v1018 = vpop.f32.mrb[0].mxu0
        %v1019 = vadd.f32 0.0, %v1018
        %v1020 = vpop.f32.mrb[0].mxu0
        %1021 = vdwg.mxu0
        %v1023 = vsel %vm888, %v839, 0
        %v1026 = vsel %vm913, %v884, 0
        %1028 = vmatprep.subr.mxu0 0.0
        %1029 = vmatpush1.msra.mxu0 %v883
        %1030 = vmatprep.subr.mxu0 0.0
        %1031 = vmatpush1.msra.mxu0 %v1026
        %1032 = vmatprep.subr.mxu0 0.0
        %1033 = vmatpush1.msra.mxu0 0.0
        %1034 = vmatprep.subr.mxu0 0.0
        %1035 = vmatpush1.msra.mxu0 0.0
        %1036 = vmatprep.subr.mxu0 0.0
        %1037 = vmatpush1.msra.mxu0 0.0
        %1038 = vmatprep.subr.mxu0 0.0
        %1039 = vmatpush1.msra.mxu0 0.0
        %1040 = vmatprep.subr.mxu0 0.0
        %1041 = vmatpush1.msra.mxu0 0.0
        %1042 = vmatprep.subr.mxu0 0.0
        %1043 = vmatpush1.msra.mxu0 0.0
        %1044 = vmatprep.subr.mxu0 0.0
        %1045 = vmatpush1.msra.mxu0 0.0
        %1046 = vmatprep.subr.mxu0 0.0
        %1047 = vmatpush1.msra.mxu0 0.0
        %1048 = vmatprep.subr.mxu0 0.0
        %1049 = vmatpush1.msra.mxu0 0.0
        %1050 = vmatprep.subr.mxu0 0.0
        %1051 = vmatpush1.msra.mxu0 0.0
        %1052 = vmatprep.subr.mxu0 0.0
        %1053 = vmatpush1.msra.mxu0 0.0
        %1054 = vmatprep.subr.mxu0 0.0
        %1055 = vmatpush1.msra.mxu0 0.0
        %1056 = vmatprep.subr.mxu0 0.0
        %1057 = vmatpush1.msra.mxu0 0.0
        %1058 = vmatprep.subr.mxu0 0.0
        %1059 = vmatpush1.msra.mxu0 0.0
        %1060 = vmatprep.subr.mxu0 0.0
        %1061 = vmatpush1.msra.mxu0 0.0
        %1062 = vmatprep.subr.mxu0 0.0
        %1063 = vmatpush1.msra.mxu0 0.0
        %1064 = vmatprep.subr.mxu0 0.0
        %1065 = vmatpush1.msra.mxu0 0.0
        %1066 = vmatprep.subr.mxu0 0.0
        %1067 = vmatpush1.msra.mxu0 0.0
        %1068 = vmatprep.subr.mxu0 0.0
        %1069 = vmatpush1.msra.mxu0 0.0
        %1070 = vmatprep.subr.mxu0 0.0
        %1071 = vmatpush1.msra.mxu0 0.0
        %1072 = vmatprep.subr.mxu0 0.0
        %1073 = vmatpush1.msra.mxu0 0.0
        %1074 = vmatprep.subr.mxu0 0.0
        %1075 = vmatpush1.msra.mxu0 0.0
        %1076 = vmatprep.subr.mxu0 0.0
        %1077 = vmatpush1.msra.mxu0 0.0
        %1078 = vmatprep.subr.mxu0 0.0
        %1079 = vmatpush1.msra.mxu0 0.0
        %1080 = vmatprep.subr.mxu0 0.0
        %1081 = vmatpush1.msra.mxu0 0.0
        %1082 = vmatprep.subr.mxu0 0.0
        %1083 = vmatpush1.msra.mxu0 0.0
        %1084 = vmatprep.subr.mxu0 0.0
        %1085 = vmatpush1.msra.mxu0 0.0
        %1086 = vmatprep.subr.mxu0 0.0
        %1087 = vmatpush1.msra.mxu0 0.0
        %1088 = vmatprep.subr.mxu0 0.0
        %1089 = vmatpush1.msra.mxu0 0.0
        %1090 = vmatprep.subr.mxu0 0.0
        %1091 = vmatpush1.msra.mxu0 0.0
        %1092 = vmatprep.mubr.f32.mxu0 0.0
        %1093 = vmatmul.mubr.f32.gmra.mrb[0].mxu0 %v1023
        %v1094 = vpop.f32.mrb[0].mxu0
        %v1095 = vadd.f32 %v984, %v1094
        %v1096 = vpop.f32.mrb[0].mxu0
        %1097 = vmatprep.mubr.f32.mxu0 0.0
        %1098 = vmatmul.mubr.f32.gmra.mrb[0].mxu0 %v890
        %v1099 = vpop.f32.mrb[0].mxu0
        %v1100 = vadd.f32 %v989, %v1099
        %v1101 = vpop.f32.mrb[0].mxu0
        %1102 = vmatprep.mubr.f32.mxu0 0.0
        %1103 = vmatmul.mubr.f32.gmra.mrb[0].mxu0 %v893
        %v1104 = vpop.f32.mrb[0].mxu0
        %v1105 = vadd.f32 %v994, %v1104
        %v1106 = vpop.f32.mrb[0].mxu0
        %1107 = vmatprep.mubr.f32.mxu0 0.0
        %1108 = vmatmul.mubr.f32.gmra.mrb[0].mxu0 %v896
        %v1109 = vpop.f32.mrb[0].mxu0
        %v1110 = vadd.f32 %v999, %v1109
        %v1111 = vpop.f32.mrb[0].mxu0
        %1112 = vmatprep.mubr.f32.mxu0 0.0
        %1113 = vmatmul.mubr.f32.gmra.mrb[0].mxu0 %v899
        %v1114 = vpop.f32.mrb[0].mxu0
        %v1115 = vadd.f32 %v1004, %v1114
        %v1116 = vpop.f32.mrb[0].mxu0
        %1117 = vmatprep.mubr.f32.mxu0 0.0
        %1118 = vmatmul.mubr.f32.gmra.mrb[0].mxu0 %v902
        %v1119 = vpop.f32.mrb[0].mxu0
        %v1120 = vadd.f32 %v1009, %v1119
        %v1121 = vpop.f32.mrb[0].mxu0
        %1122 = vmatprep.mubr.f32.mxu0 0.0
        %1123 = vmatmul.mubr.f32.gmra.mrb[0].mxu0 %v905
        %v1124 = vpop.f32.mrb[0].mxu0
        %v1125 = vadd.f32 %v1014, %v1124
        %v1126 = vpop.f32.mrb[0].mxu0
        %1127 = vmatprep.mubr.f32.mxu0 0.0
        %1128 = vmatmul.mubr.f32.gmra.mrb[0].mxu0 %v908
        %v1129 = vpop.f32.mrb[0].mxu0
        %v1130 = vadd.f32 %v1019, %v1129
        %v1131 = vpop.f32.mrb[0].mxu0
        %1132 = vdwg.mxu0
        %s1133 = scalar_lea.vmem %s2, 32
        %v1134 = vld [vmem:[%s1133] sm:$0xff]
        %v1135 = vld [vmem:[%s1133 + $0x8] sm:$0xf]
        %v1137 = vsel %vm888, %v882, 0
        %v1140 = vsel %vm913, %v1135, 0
        %1142 = vmatprep.subr.mxu0 0.0
        %1143 = vmatpush1.msra.mxu0 %v1134
        %1144 = vmatprep.subr.mxu0 0.0
        %1145 = vmatpush1.msra.mxu0 %v1140
        %1146 = vmatprep.subr.mxu0 0.0
        %1147 = vmatpush1.msra.mxu0 0.0
        %1148 = vmatprep.subr.mxu0 0.0
        %1149 = vmatpush1.msra.mxu0 0.0
        %1150 = vmatprep.subr.mxu0 0.0
        %1151 = vmatpush1.msra.mxu0 0.0
        %1152 = vmatprep.subr.mxu0 0.0
        %1153 = vmatpush1.msra.mxu0 0.0
        %1154 = vmatprep.subr.mxu0 0.0
        %1155 = vmatpush1.msra.mxu0 0.0
        %1156 = vmatprep.subr.mxu0 0.0
        %1157 = vmatpush1.msra.mxu0 0.0
        %1158 = vmatprep.subr.mxu0 0.0
        %1159 = vmatpush1.msra.mxu0 0.0
        %1160 = vmatprep.subr.mxu0 0.0
        %1161 = vmatpush1.msra.mxu0 0.0
        %1162 = vmatprep.subr.mxu0 0.0
        %1163 = vmatpush1.msra.mxu0 0.0
        %1164 = vmatprep.subr.mxu0 0.0
        %1165 = vmatpush1.msra.mxu0 0.0
        %1166 = vmatprep.subr.mxu0 0.0
        %1167 = vmatpush1.msra.mxu0 0.0
        %1168 = vmatprep.subr.mxu0 0.0
        %1169 = vmatpush1.msra.mxu0 0.0
        %1170 = vmatprep.subr.mxu0 0.0
        %1171 = vmatpush1.msra.mxu0 0.0
        %1172 = vmatprep.subr.mxu0 0.0
        %1173 = vmatpush1.msra.mxu0 0.0
        %1174 = vmatprep.subr.mxu0 0.0
        %1175 = vmatpush1.msra.mxu0 0.0
        %1176 = vmatprep.subr.mxu0 0.0
        %1177 = vmatpush1.msra.mxu0 0.0
        %1178 = vmatprep.subr.mxu0 0.0
        %1179 = vmatpush1.msra.mxu0 0.0
        %1180 = vmatprep.subr.mxu0 0.0
        %1181 = vmatpush1.msra.mxu0 0.0
        %1182 = vmatprep.subr.mxu0 0.0
        %1183 = vmatpush1.msra.mxu0 0.0
        %1184 = vmatprep.subr.mxu0 0.0
        %1185 = vmatpush1.msra.mxu0 0.0
        %1186 = vmatprep.subr.mxu0 0.0
        %1187 = vmatpush1.msra.mxu0 0.0
        %1188 = vmatprep.subr.mxu0 0.0
        %1189 = vmatpush1.msra.mxu0 0.0
        %1190 = vmatprep.subr.mxu0 0.0
        %1191 = vmatpush1.msra.mxu0 0.0
        %1192 = vmatprep.subr.mxu0 0.0
        %1193 = vmatpush1.msra.mxu0 0.0
        %1194 = vmatprep.subr.mxu0 0.0
        %1195 = vmatpush1.msra.mxu0 0.0
        %1196 = vmatprep.subr.mxu0 0.0
        %1197 = vmatpush1.msra.mxu0 0.0
        %1198 = vmatprep.subr.mxu0 0.0
        %1199 = vmatpush1.msra.mxu0 0.0
        %1200 = vmatprep.subr.mxu0 0.0
        %1201 = vmatpush1.msra.mxu0 0.0
        %1202 = vmatprep.subr.mxu0 0.0
        %1203 = vmatpush1.msra.mxu0 0.0
        %1204 = vmatprep.subr.mxu0 0.0
        %1205 = vmatpush1.msra.mxu0 0.0
        %1206 = vmatprep.mubr.f32.mxu0 0.0
        %1207 = vmatmul.mubr.f32.gmra.mrb[0].mxu0 %v893
        %v1208 = vpop.f32.mrb[0].mxu0
        %v1209 = vadd.f32 0.0, %v1208
        %v1210 = vpop.f32.mrb[0].mxu0
        %1211 = vmatprep.mubr.f32.mxu0 0.0
        %1212 = vmatmul.mubr.f32.gmra.mrb[0].mxu0 %v896
        %v1213 = vpop.f32.mrb[0].mxu0
        %v1214 = vadd.f32 0.0, %v1213
        %v1215 = vpop.f32.mrb[0].mxu0
        %1216 = vmatprep.mubr.f32.mxu0 0.0
        %1217 = vmatmul.mubr.f32.gmra.mrb[0].mxu0 %v899
        %v1218 = vpop.f32.mrb[0].mxu0
        %v1219 = vadd.f32 0.0, %v1218
        %v1220 = vpop.f32.mrb[0].mxu0
        %1221 = vmatprep.mubr.f32.mxu0 0.0
        %1222 = vmatmul.mubr.f32.gmra.mrb[0].mxu0 %v902
        %v1223 = vpop.f32.mrb[0].mxu0
        %v1224 = vadd.f32 0.0, %v1223
        %v1225 = vpop.f32.mrb[0].mxu0
        %1226 = vmatprep.mubr.f32.mxu0 0.0
        %1227 = vmatmul.mubr.f32.gmra.mrb[0].mxu0 %v905
        %v1228 = vpop.f32.mrb[0].mxu0
        %v1229 = vadd.f32 0.0, %v1228
        %v1230 = vpop.f32.mrb[0].mxu0
        %1231 = vmatprep.mubr.f32.mxu0 0.0
        %1232 = vmatmul.mubr.f32.gmra.mrb[0].mxu0 %v908
        %v1233 = vpop.f32.mrb[0].mxu0
        %v1234 = vadd.f32 0.0, %v1233
        %v1235 = vpop.f32.mrb[0].mxu0
        %1236 = vmatprep.mubr.f32.mxu0 0.0
        %1237 = vmatmul.mubr.f32.gmra.mrb[0].mxu0 %v911
        %v1238 = vpop.f32.mrb[0].mxu0
        %v1239 = vadd.f32 0.0, %v1238
        %v1240 = vpop.f32.mrb[0].mxu0
        %1241 = vmatprep.mubr.f32.mxu0 0.0
        %1242 = vmatmul.mubr.f32.gmra.mrb[0].mxu0 %v1137
        %v1243 = vpop.f32.mrb[0].mxu0
        %v1244 = vadd.f32 0.0, %v1243
        %v1245 = vpop.f32.mrb[0].mxu0
        %1246 = vdwg.mxu0
        %v1247 = vadd.f32 %v1095, %v1209
        %v1248 = vadd.f32 %v1100, %v1214
        %v1249 = vadd.f32 %v1105, %v1219
        %v1250 = vadd.f32 %v1110, %v1224
        %v1251 = vadd.f32 %v1115, %v1229
        %v1252 = vadd.f32 %v1120, %v1234
        %v1253 = vadd.f32 %v1125, %v1239
        %v1254 = vadd.f32 %v1130, %v1244
        %s1255 = scalar_lea.vmem %s657, 128 [#allocation2]
        %v1256 = vld [vmem:[%s1255] sm:$0xff]
        %v1257 = vld [vmem:[%s1255 + $0x8] sm:$0x3]
        %v1258 = vld [vmem:[%s1255 + $0x10] sm:$0xff]
        %v1259 = vld [vmem:[%s1255 + $0x18] sm:$0x3]
        %v1260 = vld [vmem:[%s1255 + $0x20] sm:$0xff]
        %v1261 = vld [vmem:[%s1255 + $0x28] sm:$0x3]
        %v1262 = vld [vmem:[%s1255 + $0x30] sm:$0xff]
        %v1263 = vld [vmem:[%s1255 + $0x38] sm:$0x3]
        %v1264 = vld [vmem:[%s1255 + $0x40] sm:$0xff]
        %v1265 = vld [vmem:[%s1255 + $0x48] sm:$0x3]
        %v1266 = vld [vmem:[%s1255 + $0x50] sm:$0xff]
        %v1267 = vld [vmem:[%s1255 + $0x58] sm:$0x3]
        %v1268 = vld [vmem:[%s1255 + $0x60] sm:$0xff]
        %v1269 = vld [vmem:[%s1255 + $0x68] sm:$0x3]
        %v1270 = vld [vmem:[%s1255 + $0x70] sm:$0xff]
        %v1271 = vld [vmem:[%s1255 + $0x78] sm:$0x3]
        %v1288 = vrot.slane %v1256, 1
        %v1289 = vrot.slane %v1257, 1
        %v1290 = vsel %vm731, %v1288, %v1289
        %v1291 = vrot.slane %v1258, 1
        %v1292 = vrot.slane %v1259, 1
        %v1293 = vsel %vm731, %v1291, %v1292
        %v1294 = vrot.slane %v1260, 1
        %v1295 = vrot.slane %v1261, 1
        %v1296 = vsel %vm731, %v1294, %v1295
        %v1297 = vrot.slane %v1262, 1
        %v1298 = vrot.slane %v1263, 1
        %v1299 = vsel %vm731, %v1297, %v1298
        %v1300 = vrot.slane %v1264, 1
        %v1301 = vrot.slane %v1265, 1
        %v1302 = vsel %vm731, %v1300, %v1301
        %v1303 = vrot.slane %v1266, 1
        %v1304 = vrot.slane %v1267, 1
        %v1305 = vsel %vm731, %v1303, %v1304
        %v1306 = vrot.slane %v1268, 1
        %v1307 = vrot.slane %v1269, 1
        %v1308 = vsel %vm731, %v1306, %v1307
        %v1309 = vrot.slane %v1270, 1
        %v1310 = vrot.slane %v1271, 1
        %v1311 = vsel %vm731, %v1309, %v1310
        %1312 = vrot.lane.b32.xlu0 %v1290, 4
        %v1313 = vpop.permute.xlu0 %1312
        %1314 = vrot.lane.b32.xlu0 %v1293, 4
        %v1315 = vpop.permute.xlu0 %1314
        %1316 = vrot.lane.b32.xlu0 %v1296, 4
        %v1317 = vpop.permute.xlu0 %1316
        %1318 = vrot.lane.b32.xlu0 %v1299, 4
        %v1319 = vpop.permute.xlu0 %1318
        %1320 = vrot.lane.b32.xlu0 %v1302, 4
        %v1321 = vpop.permute.xlu0 %1320
        %1322 = vrot.lane.b32.xlu0 %v1305, 4
        %v1323 = vpop.permute.xlu0 %1322
        %1324 = vrot.lane.b32.xlu0 %v1308, 4
        %v1325 = vpop.permute.xlu0 %1324
        %1326 = vrot.lane.b32.xlu0 %v1311, 4
        %v1327 = vpop.permute.xlu0 %1326
        %v1336 = vrot.slane %v1256, 2
        %v1337 = vrot.slane %v1257, 2
        %v1338 = vsel %vm780, %v1336, %v1337
        %v1339 = vrot.slane %v1258, 2
        %v1340 = vrot.slane %v1259, 2
        %v1341 = vsel %vm780, %v1339, %v1340
        %v1342 = vrot.slane %v1260, 2
        %v1343 = vrot.slane %v1261, 2
        %v1344 = vsel %vm780, %v1342, %v1343
        %v1345 = vrot.slane %v1262, 2
        %v1346 = vrot.slane %v1263, 2
        %v1347 = vsel %vm780, %v1345, %v1346
        %v1348 = vrot.slane %v1264, 2
        %v1349 = vrot.slane %v1265, 2
        %v1350 = vsel %vm780, %v1348, %v1349
        %v1351 = vrot.slane %v1266, 2
        %v1352 = vrot.slane %v1267, 2
        %v1353 = vsel %vm780, %v1351, %v1352
        %v1354 = vrot.slane %v1268, 2
        %v1355 = vrot.slane %v1269, 2
        %v1356 = vsel %vm780, %v1354, %v1355
        %v1357 = vrot.slane %v1270, 2
        %v1358 = vrot.slane %v1271, 2
        %v1359 = vsel %vm780, %v1357, %v1358
        %1360 = vrot.lane.b32.xlu0 %v1338, 8
        %v1361 = vpop.permute.xlu0 %1360
        %1362 = vrot.lane.b32.xlu0 %v1341, 8
        %v1363 = vpop.permute.xlu0 %1362
        %1364 = vrot.lane.b32.xlu0 %v1344, 8
        %v1365 = vpop.permute.xlu0 %1364
        %1366 = vrot.lane.b32.xlu0 %v1347, 8
        %v1367 = vpop.permute.xlu0 %1366
        %1368 = vrot.lane.b32.xlu0 %v1350, 8
        %v1369 = vpop.permute.xlu0 %1368
        %1370 = vrot.lane.b32.xlu0 %v1353, 8
        %v1371 = vpop.permute.xlu0 %1370
        %1372 = vrot.lane.b32.xlu0 %v1356, 8
        %v1373 = vpop.permute.xlu0 %1372
        %1374 = vrot.lane.b32.xlu0 %v1359, 8
        %v1375 = vpop.permute.xlu0 %1374
        %v1384 = vsel %vm829, %v1256, %v1313
        %v1385 = vsel %vm829, %v1258, %v1315
        %v1386 = vsel %vm829, %v1260, %v1317
        %v1387 = vsel %vm829, %v1262, %v1319
        %v1388 = vsel %vm829, %v1264, %v1321
        %v1389 = vsel %vm829, %v1266, %v1323
        %v1390 = vsel %vm829, %v1268, %v1325
        %v1391 = vsel %vm829, %v1270, %v1327
        %v1392 = vsel %vm838, %v1384, %v1361
        %v1393 = vsel %vm838, %v1385, %v1363
        %v1394 = vsel %vm838, %v1386, %v1365
        %v1395 = vsel %vm838, %v1387, %v1367
        %v1396 = vsel %vm838, %v1388, %v1369
        %v1397 = vsel %vm838, %v1389, %v1371
        %v1398 = vsel %vm838, %v1390, %v1373
        %v1399 = vsel %vm838, %v1391, %v1375
        %s1400 = scalar_lea.vmem %s664, 32 [#allocation3]
        %v1401 = vld [vmem:[%s1400] sm:$0xff]
        %v1402 = vld [vmem:[%s1400 + $0x8] sm:$0x3]
        %v1403 = vld [vmem:[%s1400 + $0x10] sm:$0xff]
        %v1404 = vld [vmem:[%s1400 + $0x18] sm:$0x3]
        %v1409 = vrot.slane %v1401, 1
        %v1410 = vrot.slane %v1402, 1
        %v1411 = vsel %vm731, %v1409, %v1410
        %v1412 = vrot.slane %v1403, 1
        %v1413 = vrot.slane %v1404, 1
        %v1414 = vsel %vm731, %v1412, %v1413
        %1415 = vrot.lane.b32.xlu0 %v1411, 4
        %v1416 = vpop.permute.xlu0 %1415
        %1417 = vrot.lane.b32.xlu0 %v1414, 4
        %v1418 = vpop.permute.xlu0 %1417
        %v1421 = vrot.slane %v1401, 2
        %v1422 = vrot.slane %v1402, 2
        %v1423 = vsel %vm780, %v1421, %v1422
        %v1424 = vrot.slane %v1403, 2
        %v1425 = vrot.slane %v1404, 2
        %v1426 = vsel %vm780, %v1424, %v1425
        %1427 = vrot.lane.b32.xlu0 %v1423, 8
        %v1428 = vpop.permute.xlu0 %1427
        %1429 = vrot.lane.b32.xlu0 %v1426, 8
        %v1430 = vpop.permute.xlu0 %1429
        %v1433 = vsel %vm829, %v1401, %v1416
        %v1434 = vsel %vm829, %v1403, %v1418
        %v1435 = vsel %vm838, %v1433, %v1428
        %v1436 = vsel %vm838, %v1434, %v1430
        %v1438 = vsel %vm888, %v1393, 0
        %v1441 = vsel %vm888, %v1394, 0
        %v1444 = vsel %vm888, %v1395, 0
        %v1447 = vsel %vm888, %v1396, 0
        %v1450 = vsel %vm888, %v1397, 0
        %v1453 = vsel %vm888, %v1398, 0
        %v1456 = vsel %vm888, %v1399, 0
        %v1459 = vsel %vm888, %v1435, 0
        %1461 = vmatprep.subr.mxu0 0.0
        %1462 = vmatpush1.msra.mxu0 %v886
        %1463 = vmatprep.subr.mxu0 0.0
        %1464 = vmatpush1.msra.mxu0 %v915
        %1465 = vmatprep.subr.mxu0 0.0
        %1466 = vmatpush1.msra.mxu0 0.0
        %1467 = vmatprep.subr.mxu0 0.0
        %1468 = vmatpush1.msra.mxu0 0.0
        %1469 = vmatprep.subr.mxu0 0.0
        %1470 = vmatpush1.msra.mxu0 0.0
        %1471 = vmatprep.subr.mxu0 0.0
        %1472 = vmatpush1.msra.mxu0 0.0
        %1473 = vmatprep.subr.mxu0 0.0
        %1474 = vmatpush1.msra.mxu0 0.0
        %1475 = vmatprep.subr.mxu0 0.0
        %1476 = vmatpush1.msra.mxu0 0.0
        %1477 = vmatprep.subr.mxu0 0.0
        %1478 = vmatpush1.msra.mxu0 0.0
        %1479 = vmatprep.subr.mxu0 0.0
        %1480 = vmatpush1.msra.mxu0 0.0
        %1481 = vmatprep.subr.mxu0 0.0
        %1482 = vmatpush1.msra.mxu0 0.0
        %1483 = vmatprep.subr.mxu0 0.0
        %1484 = vmatpush1.msra.mxu0 0.0
        %1485 = vmatprep.subr.mxu0 0.0
        %1486 = vmatpush1.msra.mxu0 0.0
        %1487 = vmatprep.subr.mxu0 0.0
        %1488 = vmatpush1.msra.mxu0 0.0
        %1489 = vmatprep.subr.mxu0 0.0
        %1490 = vmatpush1.msra.mxu0 0.0
        %1491 = vmatprep.subr.mxu0 0.0
        %1492 = vmatpush1.msra.mxu0 0.0
        %1493 = vmatprep.subr.mxu0 0.0
        %1494 = vmatpush1.msra.mxu0 0.0
        %1495 = vmatprep.subr.mxu0 0.0
        %1496 = vmatpush1.msra.mxu0 0.0
        %1497 = vmatprep.subr.mxu0 0.0
        %1498 = vmatpush1.msra.mxu0 0.0
        %1499 = vmatprep.subr.mxu0 0.0
        %1500 = vmatpush1.msra.mxu0 0.0
        %1501 = vmatprep.subr.mxu0 0.0
        %1502 = vmatpush1.msra.mxu0 0.0
        %1503 = vmatprep.subr.mxu0 0.0
        %1504 = vmatpush1.msra.mxu0 0.0
        %1505 = vmatprep.subr.mxu0 0.0
        %1506 = vmatpush1.msra.mxu0 0.0
        %1507 = vmatprep.subr.mxu0 0.0
        %1508 = vmatpush1.msra.mxu0 0.0
        %1509 = vmatprep.subr.mxu0 0.0
        %1510 = vmatpush1.msra.mxu0 0.0
        %1511 = vmatprep.subr.mxu0 0.0
        %1512 = vmatpush1.msra.mxu0 0.0
        %1513 = vmatprep.subr.mxu0 0.0
        %1514 = vmatpush1.msra.mxu0 0.0
        %1515 = vmatprep.subr.mxu0 0.0
        %1516 = vmatpush1.msra.mxu0 0.0
        %1517 = vmatprep.subr.mxu0 0.0
        %1518 = vmatpush1.msra.mxu0 0.0
        %1519 = vmatprep.subr.mxu0 0.0
        %1520 = vmatpush1.msra.mxu0 0.0
        %1521 = vmatprep.subr.mxu0 0.0
        %1522 = vmatpush1.msra.mxu0 0.0
        %1523 = vmatprep.subr.mxu0 0.0
        %1524 = vmatpush1.msra.mxu0 0.0
        %1525 = vmatprep.mubr.f32.mxu0 0.0
        %1526 = vmatmul.mubr.f32.gmra.mrb[0].mxu0 %v1438
        %v1527 = vpop.f32.mrb[0].mxu0
        %v1528 = vadd.f32 0.0, %v1527
        %v1529 = vpop.f32.mrb[0].mxu0
        %1530 = vmatprep.mubr.f32.mxu0 0.0
        %1531 = vmatmul.mubr.f32.gmra.mrb[0].mxu0 %v1441
        %v1532 = vpop.f32.mrb[0].mxu0
        %v1533 = vadd.f32 0.0, %v1532
        %v1534 = vpop.f32.mrb[0].mxu0
        %1535 = vmatprep.mubr.f32.mxu0 0.0
        %1536 = vmatmul.mubr.f32.gmra.mrb[0].mxu0 %v1444
        %v1537 = vpop.f32.mrb[0].mxu0
        %v1538 = vadd.f32 0.0, %v1537
        %v1539 = vpop.f32.mrb[0].mxu0
        %1540 = vmatprep.mubr.f32.mxu0 0.0
        %1541 = vmatmul.mubr.f32.gmra.mrb[0].mxu0 %v1447
        %v1542 = vpop.f32.mrb[0].mxu0
        %v1543 = vadd.f32 0.0, %v1542
        %v1544 = vpop.f32.mrb[0].mxu0
        %1545 = vmatprep.mubr.f32.mxu0 0.0
        %1546 = vmatmul.mubr.f32.gmra.mrb[0].mxu0 %v1450
        %v1547 = vpop.f32.mrb[0].mxu0
        %v1548 = vadd.f32 0.0, %v1547
        %v1549 = vpop.f32.mrb[0].mxu0
        %1550 = vmatprep.mubr.f32.mxu0 0.0
        %1551 = vmatmul.mubr.f32.gmra.mrb[0].mxu0 %v1453
        %v1552 = vpop.f32.mrb[0].mxu0
        %v1553 = vadd.f32 0.0, %v1552
        %v1554 = vpop.f32.mrb[0].mxu0
        %1555 = vmatprep.mubr.f32.mxu0 0.0
        %1556 = vmatmul.mubr.f32.gmra.mrb[0].mxu0 %v1456
        %v1557 = vpop.f32.mrb[0].mxu0
        %v1558 = vadd.f32 0.0, %v1557
        %v1559 = vpop.f32.mrb[0].mxu0
        %1560 = vmatprep.mubr.f32.mxu0 0.0
        %1561 = vmatmul.mubr.f32.gmra.mrb[0].mxu0 %v1459
        %v1562 = vpop.f32.mrb[0].mxu0
        %v1563 = vadd.f32 0.0, %v1562
        %v1564 = vpop.f32.mrb[0].mxu0
        %1565 = vdwg.mxu0
        %v1567 = vsel %vm888, %v1392, 0
        %1569 = vmatprep.subr.mxu0 0.0
        %1570 = vmatpush1.msra.mxu0 %v883
        %1571 = vmatprep.subr.mxu0 0.0
        %1572 = vmatpush1.msra.mxu0 %v1026
        %1573 = vmatprep.subr.mxu0 0.0
        %1574 = vmatpush1.msra.mxu0 0.0
        %1575 = vmatprep.subr.mxu0 0.0
        %1576 = vmatpush1.msra.mxu0 0.0
        %1577 = vmatprep.subr.mxu0 0.0
        %1578 = vmatpush1.msra.mxu0 0.0
        %1579 = vmatprep.subr.mxu0 0.0
        %1580 = vmatpush1.msra.mxu0 0.0
        %1581 = vmatprep.subr.mxu0 0.0
        %1582 = vmatpush1.msra.mxu0 0.0
        %1583 = vmatprep.subr.mxu0 0.0
        %1584 = vmatpush1.msra.mxu0 0.0
        %1585 = vmatprep.subr.mxu0 0.0
        %1586 = vmatpush1.msra.mxu0 0.0
        %1587 = vmatprep.subr.mxu0 0.0
        %1588 = vmatpush1.msra.mxu0 0.0
        %1589 = vmatprep.subr.mxu0 0.0
        %1590 = vmatpush1.msra.mxu0 0.0
        %1591 = vmatprep.subr.mxu0 0.0
        %1592 = vmatpush1.msra.mxu0 0.0
        %1593 = vmatprep.subr.mxu0 0.0
        %1594 = vmatpush1.msra.mxu0 0.0
        %1595 = vmatprep.subr.mxu0 0.0
        %1596 = vmatpush1.msra.mxu0 0.0
        %1597 = vmatprep.subr.mxu0 0.0
        %1598 = vmatpush1.msra.mxu0 0.0
        %1599 = vmatprep.subr.mxu0 0.0
        %1600 = vmatpush1.msra.mxu0 0.0
        %1601 = vmatprep.subr.mxu0 0.0
        %1602 = vmatpush1.msra.mxu0 0.0
        %1603 = vmatprep.subr.mxu0 0.0
        %1604 = vmatpush1.msra.mxu0 0.0
        %1605 = vmatprep.subr.mxu0 0.0
        %1606 = vmatpush1.msra.mxu0 0.0
        %1607 = vmatprep.subr.mxu0 0.0
        %1608 = vmatpush1.msra.mxu0 0.0
        %1609 = vmatprep.subr.mxu0 0.0
        %1610 = vmatpush1.msra.mxu0 0.0
        %1611 = vmatprep.subr.mxu0 0.0
        %1612 = vmatpush1.msra.mxu0 0.0
        %1613 = vmatprep.subr.mxu0 0.0
        %1614 = vmatpush1.msra.mxu0 0.0
        %1615 = vmatprep.subr.mxu0 0.0
        %1616 = vmatpush1.msra.mxu0 0.0
        %1617 = vmatprep.subr.mxu0 0.0
        %1618 = vmatpush1.msra.mxu0 0.0
        %1619 = vmatprep.subr.mxu0 0.0
        %1620 = vmatpush1.msra.mxu0 0.0
        %1621 = vmatprep.subr.mxu0 0.0
        %1622 = vmatpush1.msra.mxu0 0.0
        %1623 = vmatprep.subr.mxu0 0.0
        %1624 = vmatpush1.msra.mxu0 0.0
        %1625 = vmatprep.subr.mxu0 0.0
        %1626 = vmatpush1.msra.mxu0 0.0
        %1627 = vmatprep.subr.mxu0 0.0
        %1628 = vmatpush1.msra.mxu0 0.0
        %1629 = vmatprep.subr.mxu0 0.0
        %1630 = vmatpush1.msra.mxu0 0.0
        %1631 = vmatprep.subr.mxu0 0.0
        %1632 = vmatpush1.msra.mxu0 0.0
        %1633 = vmatprep.mubr.f32.mxu0 0.0
        %1634 = vmatmul.mubr.f32.gmra.mrb[0].mxu0 %v1567
        %v1635 = vpop.f32.mrb[0].mxu0
        %v1636 = vadd.f32 %v1528, %v1635
        %v1637 = vpop.f32.mrb[0].mxu0
        %1638 = vmatprep.mubr.f32.mxu0 0.0
        %1639 = vmatmul.mubr.f32.gmra.mrb[0].mxu0 %v1438
        %v1640 = vpop.f32.mrb[0].mxu0
        %v1641 = vadd.f32 %v1533, %v1640
        %v1642 = vpop.f32.mrb[0].mxu0
        %1643 = vmatprep.mubr.f32.mxu0 0.0
        %1644 = vmatmul.mubr.f32.gmra.mrb[0].mxu0 %v1441
        %v1645 = vpop.f32.mrb[0].mxu0
        %v1646 = vadd.f32 %v1538, %v1645
        %v1647 = vpop.f32.mrb[0].mxu0
        %1648 = vmatprep.mubr.f32.mxu0 0.0
        %1649 = vmatmul.mubr.f32.gmra.mrb[0].mxu0 %v1444
        %v1650 = vpop.f32.mrb[0].mxu0
        %v1651 = vadd.f32 %v1543, %v1650
        %v1652 = vpop.f32.mrb[0].mxu0
        %1653 = vmatprep.mubr.f32.mxu0 0.0
        %1654 = vmatmul.mubr.f32.gmra.mrb[0].mxu0 %v1447
        %v1655 = vpop.f32.mrb[0].mxu0
        %v1656 = vadd.f32 %v1548, %v1655
        %v1657 = vpop.f32.mrb[0].mxu0
        %1658 = vmatprep.mubr.f32.mxu0 0.0
        %1659 = vmatmul.mubr.f32.gmra.mrb[0].mxu0 %v1450
        %v1660 = vpop.f32.mrb[0].mxu0
        %v1661 = vadd.f32 %v1553, %v1660
        %v1662 = vpop.f32.mrb[0].mxu0
        %1663 = vmatprep.mubr.f32.mxu0 0.0
        %1664 = vmatmul.mubr.f32.gmra.mrb[0].mxu0 %v1453
        %v1665 = vpop.f32.mrb[0].mxu0
        %v1666 = vadd.f32 %v1558, %v1665
        %v1667 = vpop.f32.mrb[0].mxu0
        %1668 = vmatprep.mubr.f32.mxu0 0.0
        %1669 = vmatmul.mubr.f32.gmra.mrb[0].mxu0 %v1456
        %v1670 = vpop.f32.mrb[0].mxu0
        %v1671 = vadd.f32 %v1563, %v1670
        %v1672 = vpop.f32.mrb[0].mxu0
        %1673 = vdwg.mxu0
        %v1675 = vsel %vm888, %v1436, 0
        %1677 = vmatprep.subr.mxu0 0.0
        %1678 = vmatpush1.msra.mxu0 %v1134
        %1679 = vmatprep.subr.mxu0 0.0
        %1680 = vmatpush1.msra.mxu0 %v1140
        %1681 = vmatprep.subr.mxu0 0.0
        %1682 = vmatpush1.msra.mxu0 0.0
        %1683 = vmatprep.subr.mxu0 0.0
        %1684 = vmatpush1.msra.mxu0 0.0
        %1685 = vmatprep.subr.mxu0 0.0
        %1686 = vmatpush1.msra.mxu0 0.0
        %1687 = vmatprep.subr.mxu0 0.0
        %1688 = vmatpush1.msra.mxu0 0.0
        %1689 = vmatprep.subr.mxu0 0.0
        %1690 = vmatpush1.msra.mxu0 0.0
        %1691 = vmatprep.subr.mxu0 0.0
        %1692 = vmatpush1.msra.mxu0 0.0
        %1693 = vmatprep.subr.mxu0 0.0
        %1694 = vmatpush1.msra.mxu0 0.0
        %1695 = vmatprep.subr.mxu0 0.0
        %1696 = vmatpush1.msra.mxu0 0.0
        %1697 = vmatprep.subr.mxu0 0.0
        %1698 = vmatpush1.msra.mxu0 0.0
        %1699 = vmatprep.subr.mxu0 0.0
        %1700 = vmatpush1.msra.mxu0 0.0
        %1701 = vmatprep.subr.mxu0 0.0
        %1702 = vmatpush1.msra.mxu0 0.0
        %1703 = vmatprep.subr.mxu0 0.0
        %1704 = vmatpush1.msra.mxu0 0.0
        %1705 = vmatprep.subr.mxu0 0.0
        %1706 = vmatpush1.msra.mxu0 0.0
        %1707 = vmatprep.subr.mxu0 0.0
        %1708 = vmatpush1.msra.mxu0 0.0
        %1709 = vmatprep.subr.mxu0 0.0
        %1710 = vmatpush1.msra.mxu0 0.0
        %1711 = vmatprep.subr.mxu0 0.0
        %1712 = vmatpush1.msra.mxu0 0.0
        %1713 = vmatprep.subr.mxu0 0.0
        %1714 = vmatpush1.msra.mxu0 0.0
        %1715 = vmatprep.subr.mxu0 0.0
        %1716 = vmatpush1.msra.mxu0 0.0
        %1717 = vmatprep.subr.mxu0 0.0
        %1718 = vmatpush1.msra.mxu0 0.0
        %1719 = vmatprep.subr.mxu0 0.0
        %1720 = vmatpush1.msra.mxu0 0.0
        %1721 = vmatprep.subr.mxu0 0.0
        %1722 = vmatpush1.msra.mxu0 0.0
        %1723 = vmatprep.subr.mxu0 0.0
        %1724 = vmatpush1.msra.mxu0 0.0
        %1725 = vmatprep.subr.mxu0 0.0
        %1726 = vmatpush1.msra.mxu0 0.0
        %1727 = vmatprep.subr.mxu0 0.0
        %1728 = vmatpush1.msra.mxu0 0.0
        %1729 = vmatprep.subr.mxu0 0.0
        %1730 = vmatpush1.msra.mxu0 0.0
        %1731 = vmatprep.subr.mxu0 0.0
        %1732 = vmatpush1.msra.mxu0 0.0
        %1733 = vmatprep.subr.mxu0 0.0
        %1734 = vmatpush1.msra.mxu0 0.0
        %1735 = vmatprep.subr.mxu0 0.0
        %1736 = vmatpush1.msra.mxu0 0.0
        %1737 = vmatprep.subr.mxu0 0.0
        %1738 = vmatpush1.msra.mxu0 0.0
        %1739 = vmatprep.subr.mxu0 0.0
        %1740 = vmatpush1.msra.mxu0 0.0
        %1741 = vmatprep.mubr.f32.mxu0 0.0
        %1742 = vmatmul.mubr.f32.gmra.mrb[0].mxu0 %v1441
        %v1743 = vpop.f32.mrb[0].mxu0
        %v1744 = vadd.f32 0.0, %v1743
        %v1745 = vpop.f32.mrb[0].mxu0
        %1746 = vmatprep.mubr.f32.mxu0 0.0
        %1747 = vmatmul.mubr.f32.gmra.mrb[0].mxu0 %v1444
        %v1748 = vpop.f32.mrb[0].mxu0
        %v1749 = vadd.f32 0.0, %v1748
        %v1750 = vpop.f32.mrb[0].mxu0
        %1751 = vmatprep.mubr.f32.mxu0 0.0
        %1752 = vmatmul.mubr.f32.gmra.mrb[0].mxu0 %v1447
        %v1753 = vpop.f32.mrb[0].mxu0
        %v1754 = vadd.f32 0.0, %v1753
        %v1755 = vpop.f32.mrb[0].mxu0
        %1756 = vmatprep.mubr.f32.mxu0 0.0
        %1757 = vmatmul.mubr.f32.gmra.mrb[0].mxu0 %v1450
        %v1758 = vpop.f32.mrb[0].mxu0
        %v1759 = vadd.f32 0.0, %v1758
        %v1760 = vpop.f32.mrb[0].mxu0
        %1761 = vmatprep.mubr.f32.mxu0 0.0
        %1762 = vmatmul.mubr.f32.gmra.mrb[0].mxu0 %v1453
        %v1763 = vpop.f32.mrb[0].mxu0
        %v1764 = vadd.f32 0.0, %v1763
        %v1765 = vpop.f32.mrb[0].mxu0
        %1766 = vmatprep.mubr.f32.mxu0 0.0
        %1767 = vmatmul.mubr.f32.gmra.mrb[0].mxu0 %v1456
        %v1768 = vpop.f32.mrb[0].mxu0
        %v1769 = vadd.f32 0.0, %v1768
        %v1770 = vpop.f32.mrb[0].mxu0
        %1771 = vmatprep.mubr.f32.mxu0 0.0
        %1772 = vmatmul.mubr.f32.gmra.mrb[0].mxu0 %v1459
        %v1773 = vpop.f32.mrb[0].mxu0
        %v1774 = vadd.f32 0.0, %v1773
        %v1775 = vpop.f32.mrb[0].mxu0
        %1776 = vmatprep.mubr.f32.mxu0 0.0
        %1777 = vmatmul.mubr.f32.gmra.mrb[0].mxu0 %v1675
        %v1778 = vpop.f32.mrb[0].mxu0
        %v1779 = vadd.f32 0.0, %v1778
        %v1780 = vpop.f32.mrb[0].mxu0
        %1781 = vdwg.mxu0
        %v1782 = vadd.f32 %v1636, %v1744
        %v1783 = vadd.f32 %v1641, %v1749
        %v1784 = vadd.f32 %v1646, %v1754
        %v1785 = vadd.f32 %v1651, %v1759
        %v1786 = vadd.f32 %v1656, %v1764
        %v1787 = vadd.f32 %v1661, %v1769
        %v1788 = vadd.f32 %v1666, %v1774
        %v1789 = vadd.f32 %v1671, %v1779
        %s1790 = scalar_lea.vmem %s657, 256 [#allocation2]
        %v1791 = vld [vmem:[%s1790] sm:$0xff]
        %v1792 = vld [vmem:[%s1790 + $0x8] sm:$0x3]
        %v1793 = vld [vmem:[%s1790 + $0x10] sm:$0xff]
        %v1794 = vld [vmem:[%s1790 + $0x18] sm:$0x3]
        %v1795 = vld [vmem:[%s1790 + $0x20] sm:$0xff]
        %v1796 = vld [vmem:[%s1790 + $0x28] sm:$0x3]
        %v1797 = vld [vmem:[%s1790 + $0x30] sm:$0xff]
        %v1798 = vld [vmem:[%s1790 + $0x38] sm:$0x3]
        %v1799 = vld [vmem:[%s1790 + $0x40] sm:$0xff]
        %v1800 = vld [vmem:[%s1790 + $0x48] sm:$0x3]
        %v1801 = vld [vmem:[%s1790 + $0x50] sm:$0xff]
        %v1802 = vld [vmem:[%s1790 + $0x58] sm:$0x3]
        %v1803 = vld [vmem:[%s1790 + $0x60] sm:$0xff]
        %v1804 = vld [vmem:[%s1790 + $0x68] sm:$0x3]
        %v1805 = vld [vmem:[%s1790 + $0x70] sm:$0xff]
        %v1806 = vld [vmem:[%s1790 + $0x78] sm:$0x3]
        %v1823 = vrot.slane %v1791, 1
        %v1824 = vrot.slane %v1792, 1
        %v1825 = vsel %vm731, %v1823, %v1824
        %v1826 = vrot.slane %v1793, 1
        %v1827 = vrot.slane %v1794, 1
        %v1828 = vsel %vm731, %v1826, %v1827
        %v1829 = vrot.slane %v1795, 1
        %v1830 = vrot.slane %v1796, 1
        %v1831 = vsel %vm731, %v1829, %v1830
        %v1832 = vrot.slane %v1797, 1
        %v1833 = vrot.slane %v1798, 1
        %v1834 = vsel %vm731, %v1832, %v1833
        %v1835 = vrot.slane %v1799, 1
        %v1836 = vrot.slane %v1800, 1
        %v1837 = vsel %vm731, %v1835, %v1836
        %v1838 = vrot.slane %v1801, 1
        %v1839 = vrot.slane %v1802, 1
        %v1840 = vsel %vm731, %v1838, %v1839
        %v1841 = vrot.slane %v1803, 1
        %v1842 = vrot.slane %v1804, 1
        %v1843 = vsel %vm731, %v1841, %v1842
        %v1844 = vrot.slane %v1805, 1
        %v1845 = vrot.slane %v1806, 1
        %v1846 = vsel %vm731, %v1844, %v1845
        %1847 = vrot.lane.b32.xlu0 %v1825, 4
        %v1848 = vpop.permute.xlu0 %1847
        %1849 = vrot.lane.b32.xlu0 %v1828, 4
        %v1850 = vpop.permute.xlu0 %1849
        %1851 = vrot.lane.b32.xlu0 %v1831, 4
        %v1852 = vpop.permute.xlu0 %1851
        %1853 = vrot.lane.b32.xlu0 %v1834, 4
        %v1854 = vpop.permute.xlu0 %1853
        %1855 = vrot.lane.b32.xlu0 %v1837, 4
        %v1856 = vpop.permute.xlu0 %1855
        %1857 = vrot.lane.b32.xlu0 %v1840, 4
        %v1858 = vpop.permute.xlu0 %1857
        %1859 = vrot.lane.b32.xlu0 %v1843, 4
        %v1860 = vpop.permute.xlu0 %1859
        %1861 = vrot.lane.b32.xlu0 %v1846, 4
        %v1862 = vpop.permute.xlu0 %1861
        %v1871 = vrot.slane %v1791, 2
        %v1872 = vrot.slane %v1792, 2
        %v1873 = vsel %vm780, %v1871, %v1872
        %v1874 = vrot.slane %v1793, 2
        %v1875 = vrot.slane %v1794, 2
        %v1876 = vsel %vm780, %v1874, %v1875
        %v1877 = vrot.slane %v1795, 2
        %v1878 = vrot.slane %v1796, 2
        %v1879 = vsel %vm780, %v1877, %v1878
        %v1880 = vrot.slane %v1797, 2
        %v1881 = vrot.slane %v1798, 2
        %v1882 = vsel %vm780, %v1880, %v1881
        %v1883 = vrot.slane %v1799, 2
        %v1884 = vrot.slane %v1800, 2
        %v1885 = vsel %vm780, %v1883, %v1884
        %v1886 = vrot.slane %v1801, 2
        %v1887 = vrot.slane %v1802, 2
        %v1888 = vsel %vm780, %v1886, %v1887
        %v1889 = vrot.slane %v1803, 2
        %v1890 = vrot.slane %v1804, 2
        %v1891 = vsel %vm780, %v1889, %v1890
        %v1892 = vrot.slane %v1805, 2
        %v1893 = vrot.slane %v1806, 2
        %v1894 = vsel %vm780, %v1892, %v1893
        %1895 = vrot.lane.b32.xlu0 %v1873, 8
        %v1896 = vpop.permute.xlu0 %1895
        %1897 = vrot.lane.b32.xlu0 %v1876, 8
        %v1898 = vpop.permute.xlu0 %1897
        %1899 = vrot.lane.b32.xlu0 %v1879, 8
        %v1900 = vpop.permute.xlu0 %1899
        %1901 = vrot.lane.b32.xlu0 %v1882, 8
        %v1902 = vpop.permute.xlu0 %1901
        %1903 = vrot.lane.b32.xlu0 %v1885, 8
        %v1904 = vpop.permute.xlu0 %1903
        %1905 = vrot.lane.b32.xlu0 %v1888, 8
        %v1906 = vpop.permute.xlu0 %1905
        %1907 = vrot.lane.b32.xlu0 %v1891, 8
        %v1908 = vpop.permute.xlu0 %1907
        %1909 = vrot.lane.b32.xlu0 %v1894, 8
        %v1910 = vpop.permute.xlu0 %1909
        %v1919 = vsel %vm829, %v1791, %v1848
        %v1920 = vsel %vm829, %v1793, %v1850
        %v1921 = vsel %vm829, %v1795, %v1852
        %v1922 = vsel %vm829, %v1797, %v1854
        %v1923 = vsel %vm829, %v1799, %v1856
        %v1924 = vsel %vm829, %v1801, %v1858
        %v1925 = vsel %vm829, %v1803, %v1860
        %v1926 = vsel %vm829, %v1805, %v1862
        %v1927 = vsel %vm838, %v1919, %v1896
        %v1928 = vsel %vm838, %v1920, %v1898
        %v1929 = vsel %vm838, %v1921, %v1900
        %v1930 = vsel %vm838, %v1922, %v1902
        %v1931 = vsel %vm838, %v1923, %v1904
        %v1932 = vsel %vm838, %v1924, %v1906
        %v1933 = vsel %vm838, %v1925, %v1908
        %v1934 = vsel %vm838, %v1926, %v1910
        %s1935 = scalar_lea.vmem %s664, 64 [#allocation3]
        %v1936 = vld [vmem:[%s1935] sm:$0xff]
        %v1937 = vld [vmem:[%s1935 + $0x8] sm:$0x3]
        %v1938 = vld [vmem:[%s1935 + $0x10] sm:$0xff]
        %v1939 = vld [vmem:[%s1935 + $0x18] sm:$0x3]
        %v1944 = vrot.slane %v1936, 1
        %v1945 = vrot.slane %v1937, 1
        %v1946 = vsel %vm731, %v1944, %v1945
        %v1947 = vrot.slane %v1938, 1
        %v1948 = vrot.slane %v1939, 1
        %v1949 = vsel %vm731, %v1947, %v1948
        %1950 = vrot.lane.b32.xlu0 %v1946, 4
        %v1951 = vpop.permute.xlu0 %1950
        %1952 = vrot.lane.b32.xlu0 %v1949, 4
        %v1953 = vpop.permute.xlu0 %1952
        %v1956 = vrot.slane %v1936, 2
        %v1957 = vrot.slane %v1937, 2
        %v1958 = vsel %vm780, %v1956, %v1957
        %v1959 = vrot.slane %v1938, 2
        %v1960 = vrot.slane %v1939, 2
        %v1961 = vsel %vm780, %v1959, %v1960
        %1962 = vrot.lane.b32.xlu0 %v1958, 8
        %v1963 = vpop.permute.xlu0 %1962
        %1964 = vrot.lane.b32.xlu0 %v1961, 8
        %v1965 = vpop.permute.xlu0 %1964
        %v1968 = vsel %vm829, %v1936, %v1951
        %v1969 = vsel %vm829, %v1938, %v1953
        %v1970 = vsel %vm838, %v1968, %v1963
        %v1971 = vsel %vm838, %v1969, %v1965
        %v1973 = vsel %vm888, %v1928, 0
        %v1976 = vsel %vm888, %v1929, 0
        %v1979 = vsel %vm888, %v1930, 0
        %v1982 = vsel %vm888, %v1931, 0
        %v1985 = vsel %vm888, %v1932, 0
        %v1988 = vsel %vm888, %v1933, 0
        %v1991 = vsel %vm888, %v1934, 0
        %v1994 = vsel %vm888, %v1970, 0
        %1996 = vmatprep.subr.mxu0 0.0
        %1997 = vmatpush1.msra.mxu0 %v886
        %1998 = vmatprep.subr.mxu0 0.0
        %1999 = vmatpush1.msra.mxu0 %v915
        %2000 = vmatprep.subr.mxu0 0.0
        %2001 = vmatpush1.msra.mxu0 0.0
        %2002 = vmatprep.subr.mxu0 0.0
        %2003 = vmatpush1.msra.mxu0 0.0
        %2004 = vmatprep.subr.mxu0 0.0
        %2005 = vmatpush1.msra.mxu0 0.0
        %2006 = vmatprep.subr.mxu0 0.0
        %2007 = vmatpush1.msra.mxu0 0.0
        %2008 = vmatprep.subr.mxu0 0.0
        %2009 = vmatpush1.msra.mxu0 0.0
        %2010 = vmatprep.subr.mxu0 0.0
        %2011 = vmatpush1.msra.mxu0 0.0
        %2012 = vmatprep.subr.mxu0 0.0
        %2013 = vmatpush1.msra.mxu0 0.0
        %2014 = vmatprep.subr.mxu0 0.0
        %2015 = vmatpush1.msra.mxu0 0.0
        %2016 = vmatprep.subr.mxu0 0.0
        %2017 = vmatpush1.msra.mxu0 0.0
        %2018 = vmatprep.subr.mxu0 0.0
        %2019 = vmatpush1.msra.mxu0 0.0
        %2020 = vmatprep.subr.mxu0 0.0
        %2021 = vmatpush1.msra.mxu0 0.0
        %2022 = vmatprep.subr.mxu0 0.0
        %2023 = vmatpush1.msra.mxu0 0.0
        %2024 = vmatprep.subr.mxu0 0.0
        %2025 = vmatpush1.msra.mxu0 0.0
        %2026 = vmatprep.subr.mxu0 0.0
        %2027 = vmatpush1.msra.mxu0 0.0
        %2028 = vmatprep.subr.mxu0 0.0
        %2029 = vmatpush1.msra.mxu0 0.0
        %2030 = vmatprep.subr.mxu0 0.0
        %2031 = vmatpush1.msra.mxu0 0.0
        %2032 = vmatprep.subr.mxu0 0.0
        %2033 = vmatpush1.msra.mxu0 0.0
        %2034 = vmatprep.subr.mxu0 0.0
        %2035 = vmatpush1.msra.mxu0 0.0
        %2036 = vmatprep.subr.mxu0 0.0
        %2037 = vmatpush1.msra.mxu0 0.0
        %2038 = vmatprep.subr.mxu0 0.0
        %2039 = vmatpush1.msra.mxu0 0.0
        %2040 = vmatprep.subr.mxu0 0.0
        %2041 = vmatpush1.msra.mxu0 0.0
        %2042 = vmatprep.subr.mxu0 0.0
        %2043 = vmatpush1.msra.mxu0 0.0
        %2044 = vmatprep.subr.mxu0 0.0
        %2045 = vmatpush1.msra.mxu0 0.0
        %2046 = vmatprep.subr.mxu0 0.0
        %2047 = vmatpush1.msra.mxu0 0.0
        %2048 = vmatprep.subr.mxu0 0.0
        %2049 = vmatpush1.msra.mxu0 0.0
        %2050 = vmatprep.subr.mxu0 0.0
        %2051 = vmatpush1.msra.mxu0 0.0
        %2052 = vmatprep.subr.mxu0 0.0
        %2053 = vmatpush1.msra.mxu0 0.0
        %2054 = vmatprep.subr.mxu0 0.0
        %2055 = vmatpush1.msra.mxu0 0.0
        %2056 = vmatprep.subr.mxu0 0.0
        %2057 = vmatpush1.msra.mxu0 0.0
        %2058 = vmatprep.subr.mxu0 0.0
        %2059 = vmatpush1.msra.mxu0 0.0
        %2060 = vmatprep.mubr.f32.mxu0 0.0
        %2061 = vmatmul.mubr.f32.gmra.mrb[0].mxu0 %v1973
        %v2062 = vpop.f32.mrb[0].mxu0
        %v2063 = vadd.f32 0.0, %v2062
        %v2064 = vpop.f32.mrb[0].mxu0
        %2065 = vmatprep.mubr.f32.mxu0 0.0
        %2066 = vmatmul.mubr.f32.gmra.mrb[0].mxu0 %v1976
        %v2067 = vpop.f32.mrb[0].mxu0
        %v2068 = vadd.f32 0.0, %v2067
        %v2069 = vpop.f32.mrb[0].mxu0
        %2070 = vmatprep.mubr.f32.mxu0 0.0
        %2071 = vmatmul.mubr.f32.gmra.mrb[0].mxu0 %v1979
        %v2072 = vpop.f32.mrb[0].mxu0
        %v2073 = vadd.f32 0.0, %v2072
        %v2074 = vpop.f32.mrb[0].mxu0
        %2075 = vmatprep.mubr.f32.mxu0 0.0
        %2076 = vmatmul.mubr.f32.gmra.mrb[0].mxu0 %v1982
        %v2077 = vpop.f32.mrb[0].mxu0
        %v2078 = vadd.f32 0.0, %v2077
        %v2079 = vpop.f32.mrb[0].mxu0
        %2080 = vmatprep.mubr.f32.mxu0 0.0
        %2081 = vmatmul.mubr.f32.gmra.mrb[0].mxu0 %v1985
        %v2082 = vpop.f32.mrb[0].mxu0
        %v2083 = vadd.f32 0.0, %v2082
        %v2084 = vpop.f32.mrb[0].mxu0
        %2085 = vmatprep.mubr.f32.mxu0 0.0
        %2086 = vmatmul.mubr.f32.gmra.mrb[0].mxu0 %v1988
        %v2087 = vpop.f32.mrb[0].mxu0
        %v2088 = vadd.f32 0.0, %v2087
        %v2089 = vpop.f32.mrb[0].mxu0
        %2090 = vmatprep.mubr.f32.mxu0 0.0
        %2091 = vmatmul.mubr.f32.gmra.mrb[0].mxu0 %v1991
        %v2092 = vpop.f32.mrb[0].mxu0
        %v2093 = vadd.f32 0.0, %v2092
        %v2094 = vpop.f32.mrb[0].mxu0
        %2095 = vmatprep.mubr.f32.mxu0 0.0
        %2096 = vmatmul.mubr.f32.gmra.mrb[0].mxu0 %v1994
        %v2097 = vpop.f32.mrb[0].mxu0
        %v2098 = vadd.f32 0.0, %v2097
        %v2099 = vpop.f32.mrb[0].mxu0
        %2100 = vdwg.mxu0
        %v2102 = vsel %vm888, %v1927, 0
        %2104 = vmatprep.subr.mxu0 0.0
        %2105 = vmatpush1.msra.mxu0 %v883
        %2106 = vmatprep.subr.mxu0 0.0
        %2107 = vmatpush1.msra.mxu0 %v1026
        %2108 = vmatprep.subr.mxu0 0.0
        %2109 = vmatpush1.msra.mxu0 0.0
        %2110 = vmatprep.subr.mxu0 0.0
        %2111 = vmatpush1.msra.mxu0 0.0
        %2112 = vmatprep.subr.mxu0 0.0
        %2113 = vmatpush1.msra.mxu0 0.0
        %2114 = vmatprep.subr.mxu0 0.0
        %2115 = vmatpush1.msra.mxu0 0.0
        %2116 = vmatprep.subr.mxu0 0.0
        %2117 = vmatpush1.msra.mxu0 0.0
        %2118 = vmatprep.subr.mxu0 0.0
        %2119 = vmatpush1.msra.mxu0 0.0
        %2120 = vmatprep.subr.mxu0 0.0
        %2121 = vmatpush1.msra.mxu0 0.0
        %2122 = vmatprep.subr.mxu0 0.0
        %2123 = vmatpush1.msra.mxu0 0.0
        %2124 = vmatprep.subr.mxu0 0.0
        %2125 = vmatpush1.msra.mxu0 0.0
        %2126 = vmatprep.subr.mxu0 0.0
        %2127 = vmatpush1.msra.mxu0 0.0
        %2128 = vmatprep.subr.mxu0 0.0
        %2129 = vmatpush1.msra.mxu0 0.0
        %2130 = vmatprep.subr.mxu0 0.0
        %2131 = vmatpush1.msra.mxu0 0.0
        %2132 = vmatprep.subr.mxu0 0.0
        %2133 = vmatpush1.msra.mxu0 0.0
        %2134 = vmatprep.subr.mxu0 0.0
        %2135 = vmatpush1.msra.mxu0 0.0
        %2136 = vmatprep.subr.mxu0 0.0
        %2137 = vmatpush1.msra.mxu0 0.0
        %2138 = vmatprep.subr.mxu0 0.0
        %2139 = vmatpush1.msra.mxu0 0.0
        %2140 = vmatprep.subr.mxu0 0.0
        %2141 = vmatpush1.msra.mxu0 0.0
        %2142 = vmatprep.subr.mxu0 0.0
        %2143 = vmatpush1.msra.mxu0 0.0
        %2144 = vmatprep.subr.mxu0 0.0
        %2145 = vmatpush1.msra.mxu0 0.0
        %2146 = vmatprep.subr.mxu0 0.0
        %2147 = vmatpush1.msra.mxu0 0.0
        %2148 = vmatprep.subr.mxu0 0.0
        %2149 = vmatpush1.msra.mxu0 0.0
        %2150 = vmatprep.subr.mxu0 0.0
        %2151 = vmatpush1.msra.mxu0 0.0
        %2152 = vmatprep.subr.mxu0 0.0
        %2153 = vmatpush1.msra.mxu0 0.0
        %2154 = vmatprep.subr.mxu0 0.0
        %2155 = vmatpush1.msra.mxu0 0.0
        %2156 = vmatprep.subr.mxu0 0.0
        %2157 = vmatpush1.msra.mxu0 0.0
        %2158 = vmatprep.subr.mxu0 0.0
        %2159 = vmatpush1.msra.mxu0 0.0
        %2160 = vmatprep.subr.mxu0 0.0
        %2161 = vmatpush1.msra.mxu0 0.0
        %2162 = vmatprep.subr.mxu0 0.0
        %2163 = vmatpush1.msra.mxu0 0.0
        %2164 = vmatprep.subr.mxu0 0.0
        %2165 = vmatpush1.msra.mxu0 0.0
        %2166 = vmatprep.subr.mxu0 0.0
        %2167 = vmatpush1.msra.mxu0 0.0
        %2168 = vmatprep.mubr.f32.mxu0 0.0
        %2169 = vmatmul.mubr.f32.gmra.mrb[0].mxu0 %v2102
        %v2170 = vpop.f32.mrb[0].mxu0
        %v2171 = vadd.f32 %v2063, %v2170
        %v2172 = vpop.f32.mrb[0].mxu0
        %2173 = vmatprep.mubr.f32.mxu0 0.0
        %2174 = vmatmul.mubr.f32.gmra.mrb[0].mxu0 %v1973
        %v2175 = vpop.f32.mrb[0].mxu0
        %v2176 = vadd.f32 %v2068, %v2175
        %v2177 = vpop.f32.mrb[0].mxu0
        %2178 = vmatprep.mubr.f32.mxu0 0.0
        %2179 = vmatmul.mubr.f32.gmra.mrb[0].mxu0 %v1976
        %v2180 = vpop.f32.mrb[0].mxu0
        %v2181 = vadd.f32 %v2073, %v2180
        %v2182 = vpop.f32.mrb[0].mxu0
        %2183 = vmatprep.mubr.f32.mxu0 0.0
        %2184 = vmatmul.mubr.f32.gmra.mrb[0].mxu0 %v1979
        %v2185 = vpop.f32.mrb[0].mxu0
        %v2186 = vadd.f32 %v2078, %v2185
        %v2187 = vpop.f32.mrb[0].mxu0
        %2188 = vmatprep.mubr.f32.mxu0 0.0
        %2189 = vmatmul.mubr.f32.gmra.mrb[0].mxu0 %v1982
        %v2190 = vpop.f32.mrb[0].mxu0
        %v2191 = vadd.f32 %v2083, %v2190
        %v2192 = vpop.f32.mrb[0].mxu0
        %2193 = vmatprep.mubr.f32.mxu0 0.0
        %2194 = vmatmul.mubr.f32.gmra.mrb[0].mxu0 %v1985
        %v2195 = vpop.f32.mrb[0].mxu0
        %v2196 = vadd.f32 %v2088, %v2195
        %v2197 = vpop.f32.mrb[0].mxu0
        %2198 = vmatprep.mubr.f32.mxu0 0.0
        %2199 = vmatmul.mubr.f32.gmra.mrb[0].mxu0 %v1988
        %v2200 = vpop.f32.mrb[0].mxu0
        %v2201 = vadd.f32 %v2093, %v2200
        %v2202 = vpop.f32.mrb[0].mxu0
        %2203 = vmatprep.mubr.f32.mxu0 0.0
        %2204 = vmatmul.mubr.f32.gmra.mrb[0].mxu0 %v1991
        %v2205 = vpop.f32.mrb[0].mxu0
        %v2206 = vadd.f32 %v2098, %v2205
        %v2207 = vpop.f32.mrb[0].mxu0
        %2208 = vdwg.mxu0
        %v2210 = vsel %vm888, %v1971, 0
        %2212 = vmatprep.subr.mxu0 0.0
        %2213 = vmatpush1.msra.mxu0 %v1134
        %2214 = vmatprep.subr.mxu0 0.0
        %2215 = vmatpush1.msra.mxu0 %v1140
        %2216 = vmatprep.subr.mxu0 0.0
        %2217 = vmatpush1.msra.mxu0 0.0
        %2218 = vmatprep.subr.mxu0 0.0
        %2219 = vmatpush1.msra.mxu0 0.0
        %2220 = vmatprep.subr.mxu0 0.0
        %2221 = vmatpush1.msra.mxu0 0.0
        %2222 = vmatprep.subr.mxu0 0.0
        %2223 = vmatpush1.msra.mxu0 0.0
        %2224 = vmatprep.subr.mxu0 0.0
        %2225 = vmatpush1.msra.mxu0 0.0
        %2226 = vmatprep.subr.mxu0 0.0
        %2227 = vmatpush1.msra.mxu0 0.0
        %2228 = vmatprep.subr.mxu0 0.0
        %2229 = vmatpush1.msra.mxu0 0.0
        %2230 = vmatprep.subr.mxu0 0.0
        %2231 = vmatpush1.msra.mxu0 0.0
        %2232 = vmatprep.subr.mxu0 0.0
        %2233 = vmatpush1.msra.mxu0 0.0
        %2234 = vmatprep.subr.mxu0 0.0
        %2235 = vmatpush1.msra.mxu0 0.0
        %2236 = vmatprep.subr.mxu0 0.0
        %2237 = vmatpush1.msra.mxu0 0.0
        %2238 = vmatprep.subr.mxu0 0.0
        %2239 = vmatpush1.msra.mxu0 0.0
        %2240 = vmatprep.subr.mxu0 0.0
        %2241 = vmatpush1.msra.mxu0 0.0
        %2242 = vmatprep.subr.mxu0 0.0
        %2243 = vmatpush1.msra.mxu0 0.0
        %2244 = vmatprep.subr.mxu0 0.0
        %2245 = vmatpush1.msra.mxu0 0.0
        %2246 = vmatprep.subr.mxu0 0.0
        %2247 = vmatpush1.msra.mxu0 0.0
        %2248 = vmatprep.subr.mxu0 0.0
        %2249 = vmatpush1.msra.mxu0 0.0
        %2250 = vmatprep.subr.mxu0 0.0
        %2251 = vmatpush1.msra.mxu0 0.0
        %2252 = vmatprep.subr.mxu0 0.0
        %2253 = vmatpush1.msra.mxu0 0.0
        %2254 = vmatprep.subr.mxu0 0.0
        %2255 = vmatpush1.msra.mxu0 0.0
        %2256 = vmatprep.subr.mxu0 0.0
        %2257 = vmatpush1.msra.mxu0 0.0
        %2258 = vmatprep.subr.mxu0 0.0
        %2259 = vmatpush1.msra.mxu0 0.0
        %2260 = vmatprep.subr.mxu0 0.0
        %2261 = vmatpush1.msra.mxu0 0.0
        %2262 = vmatprep.subr.mxu0 0.0
        %2263 = vmatpush1.msra.mxu0 0.0
        %2264 = vmatprep.subr.mxu0 0.0
        %2265 = vmatpush1.msra.mxu0 0.0
        %2266 = vmatprep.subr.mxu0 0.0
        %2267 = vmatpush1.msra.mxu0 0.0
        %2268 = vmatprep.subr.mxu0 0.0
        %2269 = vmatpush1.msra.mxu0 0.0
        %2270 = vmatprep.subr.mxu0 0.0
        %2271 = vmatpush1.msra.mxu0 0.0
        %2272 = vmatprep.subr.mxu0 0.0
        %2273 = vmatpush1.msra.mxu0 0.0
        %2274 = vmatprep.subr.mxu0 0.0
        %2275 = vmatpush1.msra.mxu0 0.0
        %2276 = vmatprep.mubr.f32.mxu0 0.0
        %2277 = vmatmul.mubr.f32.gmra.mrb[0].mxu0 %v1976
        %v2278 = vpop.f32.mrb[0].mxu0
        %v2279 = vadd.f32 0.0, %v2278
        %v2280 = vpop.f32.mrb[0].mxu0
        %2281 = vmatprep.mubr.f32.mxu0 0.0
        %2282 = vmatmul.mubr.f32.gmra.mrb[0].mxu0 %v1979
        %v2283 = vpop.f32.mrb[0].mxu0
        %v2284 = vadd.f32 0.0, %v2283
        %v2285 = vpop.f32.mrb[0].mxu0
        %2286 = vmatprep.mubr.f32.mxu0 0.0
        %2287 = vmatmul.mubr.f32.gmra.mrb[0].mxu0 %v1982
        %v2288 = vpop.f32.mrb[0].mxu0
        %v2289 = vadd.f32 0.0, %v2288
        %v2290 = vpop.f32.mrb[0].mxu0
        %2291 = vmatprep.mubr.f32.mxu0 0.0
        %2292 = vmatmul.mubr.f32.gmra.mrb[0].mxu0 %v1985
        %v2293 = vpop.f32.mrb[0].mxu0
        %v2294 = vadd.f32 0.0, %v2293
        %v2295 = vpop.f32.mrb[0].mxu0
        %2296 = vmatprep.mubr.f32.mxu0 0.0
        %2297 = vmatmul.mubr.f32.gmra.mrb[0].mxu0 %v1988
        %v2298 = vpop.f32.mrb[0].mxu0
        %v2299 = vadd.f32 0.0, %v2298
        %v2300 = vpop.f32.mrb[0].mxu0
        %2301 = vmatprep.mubr.f32.mxu0 0.0
        %2302 = vmatmul.mubr.f32.gmra.mrb[0].mxu0 %v1991
        %v2303 = vpop.f32.mrb[0].mxu0
        %v2304 = vadd.f32 0.0, %v2303
        %v2305 = vpop.f32.mrb[0].mxu0
        %2306 = vmatprep.mubr.f32.mxu0 0.0
        %2307 = vmatmul.mubr.f32.gmra.mrb[0].mxu0 %v1994
        %v2308 = vpop.f32.mrb[0].mxu0
        %v2309 = vadd.f32 0.0, %v2308
        %v2310 = vpop.f32.mrb[0].mxu0
        %2311 = vmatprep.mubr.f32.mxu0 0.0
        %2312 = vmatmul.mubr.f32.gmra.mrb[0].mxu0 %v2210
        %v2313 = vpop.f32.mrb[0].mxu0
        %v2314 = vadd.f32 0.0, %v2313
        %v2315 = vpop.f32.mrb[0].mxu0
        %2316 = vdwg.mxu0
        %v2317 = vadd.f32 %v2171, %v2279
        %v2318 = vadd.f32 %v2176, %v2284
        %v2319 = vadd.f32 %v2181, %v2289
        %v2320 = vadd.f32 %v2186, %v2294
        %v2321 = vadd.f32 %v2191, %v2299
        %v2322 = vadd.f32 %v2196, %v2304
        %v2323 = vadd.f32 %v2201, %v2309
        %v2324 = vadd.f32 %v2206, %v2314
        %s2325 = scalar_lea.vmem %s657, 384 [#allocation2]
        %v2326 = vld [vmem:[%s2325] sm:$0xff]
        %v2327 = vld [vmem:[%s2325 + $0x8] sm:$0x3]
        %v2328 = vld [vmem:[%s2325 + $0x10] sm:$0xff]
        %v2329 = vld [vmem:[%s2325 + $0x18] sm:$0x3]
        %v2330 = vld [vmem:[%s2325 + $0x20] sm:$0xff]
        %v2331 = vld [vmem:[%s2325 + $0x28] sm:$0x3]
        %v2332 = vld [vmem:[%s2325 + $0x30] sm:$0xff]
        %v2333 = vld [vmem:[%s2325 + $0x38] sm:$0x3]
        %v2334 = vld [vmem:[%s2325 + $0x40] sm:$0xff]
        %v2335 = vld [vmem:[%s2325 + $0x48] sm:$0x3]
        %v2336 = vld [vmem:[%s2325 + $0x50] sm:$0xff]
        %v2337 = vld [vmem:[%s2325 + $0x58] sm:$0x3]
        %v2338 = vld [vmem:[%s2325 + $0x60] sm:$0xff]
        %v2339 = vld [vmem:[%s2325 + $0x68] sm:$0x3]
        %v2340 = vld [vmem:[%s2325 + $0x70] sm:$0xff]
        %v2341 = vld [vmem:[%s2325 + $0x78] sm:$0x3]
        %v2358 = vrot.slane %v2326, 1
        %v2359 = vrot.slane %v2327, 1
        %v2360 = vsel %vm731, %v2358, %v2359
        %v2361 = vrot.slane %v2328, 1
        %v2362 = vrot.slane %v2329, 1
        %v2363 = vsel %vm731, %v2361, %v2362
        %v2364 = vrot.slane %v2330, 1
        %v2365 = vrot.slane %v2331, 1
        %v2366 = vsel %vm731, %v2364, %v2365
        %v2367 = vrot.slane %v2332, 1
        %v2368 = vrot.slane %v2333, 1
        %v2369 = vsel %vm731, %v2367, %v2368
        %v2370 = vrot.slane %v2334, 1
        %v2371 = vrot.slane %v2335, 1
        %v2372 = vsel %vm731, %v2370, %v2371
        %v2373 = vrot.slane %v2336, 1
        %v2374 = vrot.slane %v2337, 1
        %v2375 = vsel %vm731, %v2373, %v2374
        %v2376 = vrot.slane %v2338, 1
        %v2377 = vrot.slane %v2339, 1
        %v2378 = vsel %vm731, %v2376, %v2377
        %v2379 = vrot.slane %v2340, 1
        %v2380 = vrot.slane %v2341, 1
        %v2381 = vsel %vm731, %v2379, %v2380
        %2382 = vrot.lane.b32.xlu0 %v2360, 4
        %v2383 = vpop.permute.xlu0 %2382
        %2384 = vrot.lane.b32.xlu0 %v2363, 4
        %v2385 = vpop.permute.xlu0 %2384
        %2386 = vrot.lane.b32.xlu0 %v2366, 4
        %v2387 = vpop.permute.xlu0 %2386
        %2388 = vrot.lane.b32.xlu0 %v2369, 4
        %v2389 = vpop.permute.xlu0 %2388
        %2390 = vrot.lane.b32.xlu0 %v2372, 4
        %v2391 = vpop.permute.xlu0 %2390
        %2392 = vrot.lane.b32.xlu0 %v2375, 4
        %v2393 = vpop.permute.xlu0 %2392
        %2394 = vrot.lane.b32.xlu0 %v2378, 4
        %v2395 = vpop.permute.xlu0 %2394
        %2396 = vrot.lane.b32.xlu0 %v2381, 4
        %v2397 = vpop.permute.xlu0 %2396
        %v2406 = vrot.slane %v2326, 2
        %v2407 = vrot.slane %v2327, 2
        %v2408 = vsel %vm780, %v2406, %v2407
        %v2409 = vrot.slane %v2328, 2
        %v2410 = vrot.slane %v2329, 2
        %v2411 = vsel %vm780, %v2409, %v2410
        %v2412 = vrot.slane %v2330, 2
        %v2413 = vrot.slane %v2331, 2
        %v2414 = vsel %vm780, %v2412, %v2413
        %v2415 = vrot.slane %v2332, 2
        %v2416 = vrot.slane %v2333, 2
        %v2417 = vsel %vm780, %v2415, %v2416
        %v2418 = vrot.slane %v2334, 2
        %v2419 = vrot.slane %v2335, 2
        %v2420 = vsel %vm780, %v2418, %v2419
        %v2421 = vrot.slane %v2336, 2
        %v2422 = vrot.slane %v2337, 2
        %v2423 = vsel %vm780, %v2421, %v2422
        %v2424 = vrot.slane %v2338, 2
        %v2425 = vrot.slane %v2339, 2
        %v2426 = vsel %vm780, %v2424, %v2425
        %v2427 = vrot.slane %v2340, 2
        %v2428 = vrot.slane %v2341, 2
        %v2429 = vsel %vm780, %v2427, %v2428
        %2430 = vrot.lane.b32.xlu0 %v2408, 8
        %v2431 = vpop.permute.xlu0 %2430
        %2432 = vrot.lane.b32.xlu0 %v2411, 8
        %v2433 = vpop.permute.xlu0 %2432
        %2434 = vrot.lane.b32.xlu0 %v2414, 8
        %v2435 = vpop.permute.xlu0 %2434
        %2436 = vrot.lane.b32.xlu0 %v2417, 8
        %v2437 = vpop.permute.xlu0 %2436
        %2438 = vrot.lane.b32.xlu0 %v2420, 8
        %v2439 = vpop.permute.xlu0 %2438
        %2440 = vrot.lane.b32.xlu0 %v2423, 8
        %v2441 = vpop.permute.xlu0 %2440
        %2442 = vrot.lane.b32.xlu0 %v2426, 8
        %v2443 = vpop.permute.xlu0 %2442
        %2444 = vrot.lane.b32.xlu0 %v2429, 8
        %v2445 = vpop.permute.xlu0 %2444
        %v2454 = vsel %vm829, %v2326, %v2383
        %v2455 = vsel %vm829, %v2328, %v2385
        %v2456 = vsel %vm829, %v2330, %v2387
        %v2457 = vsel %vm829, %v2332, %v2389
        %v2458 = vsel %vm829, %v2334, %v2391
        %v2459 = vsel %vm829, %v2336, %v2393
        %v2460 = vsel %vm829, %v2338, %v2395
        %v2461 = vsel %vm829, %v2340, %v2397
        %v2462 = vsel %vm838, %v2454, %v2431
        %v2463 = vsel %vm838, %v2455, %v2433
        %v2464 = vsel %vm838, %v2456, %v2435
        %v2465 = vsel %vm838, %v2457, %v2437
        %v2466 = vsel %vm838, %v2458, %v2439
        %v2467 = vsel %vm838, %v2459, %v2441
        %v2468 = vsel %vm838, %v2460, %v2443
        %v2469 = vsel %vm838, %v2461, %v2445
        %s2470 = scalar_lea.vmem %s664, 96 [#allocation3]
        %v2471 = vld [vmem:[%s2470] sm:$0xff]
        %v2472 = vld [vmem:[%s2470 + $0x8] sm:$0x3]
        %v2473 = vld [vmem:[%s2470 + $0x10] sm:$0xff]
        %v2474 = vld [vmem:[%s2470 + $0x18] sm:$0x3]
        %v2479 = vrot.slane %v2471, 1
        %v2480 = vrot.slane %v2472, 1
        %v2481 = vsel %vm731, %v2479, %v2480
        %v2482 = vrot.slane %v2473, 1
        %v2483 = vrot.slane %v2474, 1
        %v2484 = vsel %vm731, %v2482, %v2483
        %2485 = vrot.lane.b32.xlu0 %v2481, 4
        %v2486 = vpop.permute.xlu0 %2485
        %2487 = vrot.lane.b32.xlu0 %v2484, 4
        %v2488 = vpop.permute.xlu0 %2487
        %v2491 = vrot.slane %v2471, 2
        %v2492 = vrot.slane %v2472, 2
        %v2493 = vsel %vm780, %v2491, %v2492
        %v2494 = vrot.slane %v2473, 2
        %v2495 = vrot.slane %v2474, 2
        %v2496 = vsel %vm780, %v2494, %v2495
        %2497 = vrot.lane.b32.xlu0 %v2493, 8
        %v2498 = vpop.permute.xlu0 %2497
        %2499 = vrot.lane.b32.xlu0 %v2496, 8
        %v2500 = vpop.permute.xlu0 %2499
        %v2503 = vsel %vm829, %v2471, %v2486
        %v2504 = vsel %vm829, %v2473, %v2488
        %v2505 = vsel %vm838, %v2503, %v2498
        %v2506 = vsel %vm838, %v2504, %v2500
        %v2508 = vsel %vm888, %v2463, 0
        %v2511 = vsel %vm888, %v2464, 0
        %v2514 = vsel %vm888, %v2465, 0
        %v2517 = vsel %vm888, %v2466, 0
        %v2520 = vsel %vm888, %v2467, 0
        %v2523 = vsel %vm888, %v2468, 0
        %v2526 = vsel %vm888, %v2469, 0
        %v2529 = vsel %vm888, %v2505, 0
        %2531 = vmatprep.subr.mxu0 0.0
        %2532 = vmatpush1.msra.mxu0 %v886
        %2533 = vmatprep.subr.mxu0 0.0
        %2534 = vmatpush1.msra.mxu0 %v915
        %2535 = vmatprep.subr.mxu0 0.0
        %2536 = vmatpush1.msra.mxu0 0.0
        %2537 = vmatprep.subr.mxu0 0.0
        %2538 = vmatpush1.msra.mxu0 0.0
        %2539 = vmatprep.subr.mxu0 0.0
        %2540 = vmatpush1.msra.mxu0 0.0
        %2541 = vmatprep.subr.mxu0 0.0
        %2542 = vmatpush1.msra.mxu0 0.0
        %2543 = vmatprep.subr.mxu0 0.0
        %2544 = vmatpush1.msra.mxu0 0.0
        %2545 = vmatprep.subr.mxu0 0.0
        %2546 = vmatpush1.msra.mxu0 0.0
        %2547 = vmatprep.subr.mxu0 0.0
        %2548 = vmatpush1.msra.mxu0 0.0
        %2549 = vmatprep.subr.mxu0 0.0
        %2550 = vmatpush1.msra.mxu0 0.0
        %2551 = vmatprep.subr.mxu0 0.0
        %2552 = vmatpush1.msra.mxu0 0.0
        %2553 = vmatprep.subr.mxu0 0.0
        %2554 = vmatpush1.msra.mxu0 0.0
        %2555 = vmatprep.subr.mxu0 0.0
        %2556 = vmatpush1.msra.mxu0 0.0
        %2557 = vmatprep.subr.mxu0 0.0
        %2558 = vmatpush1.msra.mxu0 0.0
        %2559 = vmatprep.subr.mxu0 0.0
        %2560 = vmatpush1.msra.mxu0 0.0
        %2561 = vmatprep.subr.mxu0 0.0
        %2562 = vmatpush1.msra.mxu0 0.0
        %2563 = vmatprep.subr.mxu0 0.0
        %2564 = vmatpush1.msra.mxu0 0.0
        %2565 = vmatprep.subr.mxu0 0.0
        %2566 = vmatpush1.msra.mxu0 0.0
        %2567 = vmatprep.subr.mxu0 0.0
        %2568 = vmatpush1.msra.mxu0 0.0
        %2569 = vmatprep.subr.mxu0 0.0
        %2570 = vmatpush1.msra.mxu0 0.0
        %2571 = vmatprep.subr.mxu0 0.0
        %2572 = vmatpush1.msra.mxu0 0.0
        %2573 = vmatprep.subr.mxu0 0.0
        %2574 = vmatpush1.msra.mxu0 0.0
        %2575 = vmatprep.subr.mxu0 0.0
        %2576 = vmatpush1.msra.mxu0 0.0
        %2577 = vmatprep.subr.mxu0 0.0
        %2578 = vmatpush1.msra.mxu0 0.0
        %2579 = vmatprep.subr.mxu0 0.0
        %2580 = vmatpush1.msra.mxu0 0.0
        %2581 = vmatprep.subr.mxu0 0.0
        %2582 = vmatpush1.msra.mxu0 0.0
        %2583 = vmatprep.subr.mxu0 0.0
        %2584 = vmatpush1.msra.mxu0 0.0
        %2585 = vmatprep.subr.mxu0 0.0
        %2586 = vmatpush1.msra.mxu0 0.0
        %2587 = vmatprep.subr.mxu0 0.0
        %2588 = vmatpush1.msra.mxu0 0.0
        %2589 = vmatprep.subr.mxu0 0.0
        %2590 = vmatpush1.msra.mxu0 0.0
        %2591 = vmatprep.subr.mxu0 0.0
        %2592 = vmatpush1.msra.mxu0 0.0
        %2593 = vmatprep.subr.mxu0 0.0
        %2594 = vmatpush1.msra.mxu0 0.0
        %2595 = vmatprep.mubr.f32.mxu0 0.0
        %2596 = vmatmul.mubr.f32.gmra.mrb[0].mxu0 %v2508
        %v2597 = vpop.f32.mrb[0].mxu0
        %v2598 = vadd.f32 0.0, %v2597
        %v2599 = vpop.f32.mrb[0].mxu0
        %2600 = vmatprep.mubr.f32.mxu0 0.0
        %2601 = vmatmul.mubr.f32.gmra.mrb[0].mxu0 %v2511
        %v2602 = vpop.f32.mrb[0].mxu0
        %v2603 = vadd.f32 0.0, %v2602
        %v2604 = vpop.f32.mrb[0].mxu0
        %2605 = vmatprep.mubr.f32.mxu0 0.0
        %2606 = vmatmul.mubr.f32.gmra.mrb[0].mxu0 %v2514
        %v2607 = vpop.f32.mrb[0].mxu0
        %v2608 = vadd.f32 0.0, %v2607
        %v2609 = vpop.f32.mrb[0].mxu0
        %2610 = vmatprep.mubr.f32.mxu0 0.0
        %2611 = vmatmul.mubr.f32.gmra.mrb[0].mxu0 %v2517
        %v2612 = vpop.f32.mrb[0].mxu0
        %v2613 = vadd.f32 0.0, %v2612
        %v2614 = vpop.f32.mrb[0].mxu0
        %2615 = vmatprep.mubr.f32.mxu0 0.0
        %2616 = vmatmul.mubr.f32.gmra.mrb[0].mxu0 %v2520
        %v2617 = vpop.f32.mrb[0].mxu0
        %v2618 = vadd.f32 0.0, %v2617
        %v2619 = vpop.f32.mrb[0].mxu0
        %2620 = vmatprep.mubr.f32.mxu0 0.0
        %2621 = vmatmul.mubr.f32.gmra.mrb[0].mxu0 %v2523
        %v2622 = vpop.f32.mrb[0].mxu0
        %v2623 = vadd.f32 0.0, %v2622
        %v2624 = vpop.f32.mrb[0].mxu0
        %2625 = vmatprep.mubr.f32.mxu0 0.0
        %2626 = vmatmul.mubr.f32.gmra.mrb[0].mxu0 %v2526
        %v2627 = vpop.f32.mrb[0].mxu0
        %v2628 = vadd.f32 0.0, %v2627
        %v2629 = vpop.f32.mrb[0].mxu0
        %2630 = vmatprep.mubr.f32.mxu0 0.0
        %2631 = vmatmul.mubr.f32.gmra.mrb[0].mxu0 %v2529
        %v2632 = vpop.f32.mrb[0].mxu0
        %v2633 = vadd.f32 0.0, %v2632
        %v2634 = vpop.f32.mrb[0].mxu0
        %2635 = vdwg.mxu0
        %v2637 = vsel %vm888, %v2462, 0
        %2639 = vmatprep.subr.mxu0 0.0
        %2640 = vmatpush1.msra.mxu0 %v883
        %2641 = vmatprep.subr.mxu0 0.0
        %2642 = vmatpush1.msra.mxu0 %v1026
        %2643 = vmatprep.subr.mxu0 0.0
        %2644 = vmatpush1.msra.mxu0 0.0
        %2645 = vmatprep.subr.mxu0 0.0
        %2646 = vmatpush1.msra.mxu0 0.0
        %2647 = vmatprep.subr.mxu0 0.0
        %2648 = vmatpush1.msra.mxu0 0.0
        %2649 = vmatprep.subr.mxu0 0.0
        %2650 = vmatpush1.msra.mxu0 0.0
        %2651 = vmatprep.subr.mxu0 0.0
        %2652 = vmatpush1.msra.mxu0 0.0
        %2653 = vmatprep.subr.mxu0 0.0
        %2654 = vmatpush1.msra.mxu0 0.0
        %2655 = vmatprep.subr.mxu0 0.0
        %2656 = vmatpush1.msra.mxu0 0.0
        %2657 = vmatprep.subr.mxu0 0.0
        %2658 = vmatpush1.msra.mxu0 0.0
        %2659 = vmatprep.subr.mxu0 0.0
        %2660 = vmatpush1.msra.mxu0 0.0
        %2661 = vmatprep.subr.mxu0 0.0
        %2662 = vmatpush1.msra.mxu0 0.0
        %2663 = vmatprep.subr.mxu0 0.0
        %2664 = vmatpush1.msra.mxu0 0.0
        %2665 = vmatprep.subr.mxu0 0.0
        %2666 = vmatpush1.msra.mxu0 0.0
        %2667 = vmatprep.subr.mxu0 0.0
        %2668 = vmatpush1.msra.mxu0 0.0
        %2669 = vmatprep.subr.mxu0 0.0
        %2670 = vmatpush1.msra.mxu0 0.0
        %2671 = vmatprep.subr.mxu0 0.0
        %2672 = vmatpush1.msra.mxu0 0.0
        %2673 = vmatprep.subr.mxu0 0.0
        %2674 = vmatpush1.msra.mxu0 0.0
        %2675 = vmatprep.subr.mxu0 0.0
        %2676 = vmatpush1.msra.mxu0 0.0
        %2677 = vmatprep.subr.mxu0 0.0
        %2678 = vmatpush1.msra.mxu0 0.0
        %2679 = vmatprep.subr.mxu0 0.0
        %2680 = vmatpush1.msra.mxu0 0.0
        %2681 = vmatprep.subr.mxu0 0.0
        %2682 = vmatpush1.msra.mxu0 0.0
        %2683 = vmatprep.subr.mxu0 0.0
        %2684 = vmatpush1.msra.mxu0 0.0
        %2685 = vmatprep.subr.mxu0 0.0
        %2686 = vmatpush1.msra.mxu0 0.0
        %2687 = vmatprep.subr.mxu0 0.0
        %2688 = vmatpush1.msra.mxu0 0.0
        %2689 = vmatprep.subr.mxu0 0.0
        %2690 = vmatpush1.msra.mxu0 0.0
        %2691 = vmatprep.subr.mxu0 0.0
        %2692 = vmatpush1.msra.mxu0 0.0
        %2693 = vmatprep.subr.mxu0 0.0
        %2694 = vmatpush1.msra.mxu0 0.0
        %2695 = vmatprep.subr.mxu0 0.0
        %2696 = vmatpush1.msra.mxu0 0.0
        %2697 = vmatprep.subr.mxu0 0.0
        %2698 = vmatpush1.msra.mxu0 0.0
        %2699 = vmatprep.subr.mxu0 0.0
        %2700 = vmatpush1.msra.mxu0 0.0
        %2701 = vmatprep.subr.mxu0 0.0
        %2702 = vmatpush1.msra.mxu0 0.0
        %2703 = vmatprep.mubr.f32.mxu0 0.0
        %2704 = vmatmul.mubr.f32.gmra.mrb[0].mxu0 %v2637
        %v2705 = vpop.f32.mrb[0].mxu0
        %v2706 = vadd.f32 %v2598, %v2705
        %v2707 = vpop.f32.mrb[0].mxu0
        %2708 = vmatprep.mubr.f32.mxu0 0.0
        %2709 = vmatmul.mubr.f32.gmra.mrb[0].mxu0 %v2508
        %v2710 = vpop.f32.mrb[0].mxu0
        %v2711 = vadd.f32 %v2603, %v2710
        %v2712 = vpop.f32.mrb[0].mxu0
        %2713 = vmatprep.mubr.f32.mxu0 0.0
        %2714 = vmatmul.mubr.f32.gmra.mrb[0].mxu0 %v2511
        %v2715 = vpop.f32.mrb[0].mxu0
        %v2716 = vadd.f32 %v2608, %v2715
        %v2717 = vpop.f32.mrb[0].mxu0
        %2718 = vmatprep.mubr.f32.mxu0 0.0
        %2719 = vmatmul.mubr.f32.gmra.mrb[0].mxu0 %v2514
        %v2720 = vpop.f32.mrb[0].mxu0
        %v2721 = vadd.f32 %v2613, %v2720
        %v2722 = vpop.f32.mrb[0].mxu0
        %2723 = vmatprep.mubr.f32.mxu0 0.0
        %2724 = vmatmul.mubr.f32.gmra.mrb[0].mxu0 %v2517
        %v2725 = vpop.f32.mrb[0].mxu0
        %v2726 = vadd.f32 %v2618, %v2725
        %v2727 = vpop.f32.mrb[0].mxu0
        %2728 = vmatprep.mubr.f32.mxu0 0.0
        %2729 = vmatmul.mubr.f32.gmra.mrb[0].mxu0 %v2520
        %v2730 = vpop.f32.mrb[0].mxu0
        %v2731 = vadd.f32 %v2623, %v2730
        %v2732 = vpop.f32.mrb[0].mxu0
        %2733 = vmatprep.mubr.f32.mxu0 0.0
        %2734 = vmatmul.mubr.f32.gmra.mrb[0].mxu0 %v2523
        %v2735 = vpop.f32.mrb[0].mxu0
        %v2736 = vadd.f32 %v2628, %v2735
        %v2737 = vpop.f32.mrb[0].mxu0
        %2738 = vmatprep.mubr.f32.mxu0 0.0
        %2739 = vmatmul.mubr.f32.gmra.mrb[0].mxu0 %v2526
        %v2740 = vpop.f32.mrb[0].mxu0
        %v2741 = vadd.f32 %v2633, %v2740
        %v2742 = vpop.f32.mrb[0].mxu0
        %2743 = vdwg.mxu0
        %v2745 = vsel %vm888, %v2506, 0
        %2747 = vmatprep.subr.mxu0 0.0
        %2748 = vmatpush1.msra.mxu0 %v1134
        %2749 = vmatprep.subr.mxu0 0.0
        %2750 = vmatpush1.msra.mxu0 %v1140
        %2751 = vmatprep.subr.mxu0 0.0
        %2752 = vmatpush1.msra.mxu0 0.0
        %2753 = vmatprep.subr.mxu0 0.0
        %2754 = vmatpush1.msra.mxu0 0.0
        %2755 = vmatprep.subr.mxu0 0.0
        %2756 = vmatpush1.msra.mxu0 0.0
        %2757 = vmatprep.subr.mxu0 0.0
        %2758 = vmatpush1.msra.mxu0 0.0
        %2759 = vmatprep.subr.mxu0 0.0
        %2760 = vmatpush1.msra.mxu0 0.0
        %2761 = vmatprep.subr.mxu0 0.0
        %2762 = vmatpush1.msra.mxu0 0.0
        %2763 = vmatprep.subr.mxu0 0.0
        %2764 = vmatpush1.msra.mxu0 0.0
        %2765 = vmatprep.subr.mxu0 0.0
        %2766 = vmatpush1.msra.mxu0 0.0
        %2767 = vmatprep.subr.mxu0 0.0
        %2768 = vmatpush1.msra.mxu0 0.0
        %2769 = vmatprep.subr.mxu0 0.0
        %2770 = vmatpush1.msra.mxu0 0.0
        %2771 = vmatprep.subr.mxu0 0.0
        %2772 = vmatpush1.msra.mxu0 0.0
        %2773 = vmatprep.subr.mxu0 0.0
        %2774 = vmatpush1.msra.mxu0 0.0
        %2775 = vmatprep.subr.mxu0 0.0
        %2776 = vmatpush1.msra.mxu0 0.0
        %2777 = vmatprep.subr.mxu0 0.0
        %2778 = vmatpush1.msra.mxu0 0.0
        %2779 = vmatprep.subr.mxu0 0.0
        %2780 = vmatpush1.msra.mxu0 0.0
        %2781 = vmatprep.subr.mxu0 0.0
        %2782 = vmatpush1.msra.mxu0 0.0
        %2783 = vmatprep.subr.mxu0 0.0
        %2784 = vmatpush1.msra.mxu0 0.0
        %2785 = vmatprep.subr.mxu0 0.0
        %2786 = vmatpush1.msra.mxu0 0.0
        %2787 = vmatprep.subr.mxu0 0.0
        %2788 = vmatpush1.msra.mxu0 0.0
        %2789 = vmatprep.subr.mxu0 0.0
        %2790 = vmatpush1.msra.mxu0 0.0
        %2791 = vmatprep.subr.mxu0 0.0
        %2792 = vmatpush1.msra.mxu0 0.0
        %2793 = vmatprep.subr.mxu0 0.0
        %2794 = vmatpush1.msra.mxu0 0.0
        %2795 = vmatprep.subr.mxu0 0.0
        %2796 = vmatpush1.msra.mxu0 0.0
        %2797 = vmatprep.subr.mxu0 0.0
        %2798 = vmatpush1.msra.mxu0 0.0
        %2799 = vmatprep.subr.mxu0 0.0
        %2800 = vmatpush1.msra.mxu0 0.0
        %2801 = vmatprep.subr.mxu0 0.0
        %2802 = vmatpush1.msra.mxu0 0.0
        %2803 = vmatprep.subr.mxu0 0.0
        %2804 = vmatpush1.msra.mxu0 0.0
        %2805 = vmatprep.subr.mxu0 0.0
        %2806 = vmatpush1.msra.mxu0 0.0
        %2807 = vmatprep.subr.mxu0 0.0
        %2808 = vmatpush1.msra.mxu0 0.0
        %2809 = vmatprep.subr.mxu0 0.0
        %2810 = vmatpush1.msra.mxu0 0.0
        %2811 = vmatprep.mubr.f32.mxu0 0.0
        %2812 = vmatmul.mubr.f32.gmra.mrb[0].mxu0 %v2511
        %v2813 = vpop.f32.mrb[0].mxu0
        %v2814 = vadd.f32 0.0, %v2813
        %v2815 = vpop.f32.mrb[0].mxu0
        %2816 = vmatprep.mubr.f32.mxu0 0.0
        %2817 = vmatmul.mubr.f32.gmra.mrb[0].mxu0 %v2514
        %v2818 = vpop.f32.mrb[0].mxu0
        %v2819 = vadd.f32 0.0, %v2818
        %v2820 = vpop.f32.mrb[0].mxu0
        %2821 = vmatprep.mubr.f32.mxu0 0.0
        %2822 = vmatmul.mubr.f32.gmra.mrb[0].mxu0 %v2517
        %v2823 = vpop.f32.mrb[0].mxu0
        %v2824 = vadd.f32 0.0, %v2823
        %v2825 = vpop.f32.mrb[0].mxu0
        %2826 = vmatprep.mubr.f32.mxu0 0.0
        %2827 = vmatmul.mubr.f32.gmra.mrb[0].mxu0 %v2520
        %v2828 = vpop.f32.mrb[0].mxu0
        %v2829 = vadd.f32 0.0, %v2828
        %v2830 = vpop.f32.mrb[0].mxu0
        %2831 = vmatprep.mubr.f32.mxu0 0.0
        %2832 = vmatmul.mubr.f32.gmra.mrb[0].mxu0 %v2523
        %v2833 = vpop.f32.mrb[0].mxu0
        %v2834 = vadd.f32 0.0, %v2833
        %v2835 = vpop.f32.mrb[0].mxu0
        %2836 = vmatprep.mubr.f32.mxu0 0.0
        %2837 = vmatmul.mubr.f32.gmra.mrb[0].mxu0 %v2526
        %v2838 = vpop.f32.mrb[0].mxu0
        %v2839 = vadd.f32 0.0, %v2838
        %v2840 = vpop.f32.mrb[0].mxu0
        %2841 = vmatprep.mubr.f32.mxu0 0.0
        %2842 = vmatmul.mubr.f32.gmra.mrb[0].mxu0 %v2529
        %v2843 = vpop.f32.mrb[0].mxu0
        %v2844 = vadd.f32 0.0, %v2843
        %v2845 = vpop.f32.mrb[0].mxu0
        %2846 = vmatprep.mubr.f32.mxu0 0.0
        %2847 = vmatmul.mubr.f32.gmra.mrb[0].mxu0 %v2745
        %v2848 = vpop.f32.mrb[0].mxu0
        %v2849 = vadd.f32 0.0, %v2848
        %v2850 = vpop.f32.mrb[0].mxu0
        %2851 = vdwg.mxu0
        %v2852 = vadd.f32 %v2706, %v2814
        %v2853 = vadd.f32 %v2711, %v2819
        %v2854 = vadd.f32 %v2716, %v2824
        %v2855 = vadd.f32 %v2721, %v2829
        %v2856 = vadd.f32 %v2726, %v2834
        %v2857 = vadd.f32 %v2731, %v2839
        %v2858 = vadd.f32 %v2736, %v2844
        %v2859 = vadd.f32 %v2741, %v2849
        %2868 = vrot.lane.b32.xlu0 %v1782, 2
        %v2869 = vpop.permute.xlu0 %2868
        %2870 = vrot.lane.b32.xlu0 %v1783, 2
        %v2871 = vpop.permute.xlu0 %2870
        %2872 = vrot.lane.b32.xlu0 %v1784, 2
        %v2873 = vpop.permute.xlu0 %2872
        %2874 = vrot.lane.b32.xlu0 %v1785, 2
        %v2875 = vpop.permute.xlu0 %2874
        %2876 = vrot.lane.b32.xlu0 %v1786, 2
        %v2877 = vpop.permute.xlu0 %2876
        %2878 = vrot.lane.b32.xlu0 %v1787, 2
        %v2879 = vpop.permute.xlu0 %2878
        %2880 = vrot.lane.b32.xlu0 %v1788, 2
        %v2881 = vpop.permute.xlu0 %2880
        %2882 = vrot.lane.b32.xlu0 %v1789, 2
        %v2883 = vpop.permute.xlu0 %2882
        %2900 = vrot.lane.b32.xlu0 %v2317, 4
        %v2901 = vpop.permute.xlu0 %2900
        %2902 = vrot.lane.b32.xlu0 %v2318, 4
        %v2903 = vpop.permute.xlu0 %2902
        %2904 = vrot.lane.b32.xlu0 %v2319, 4
        %v2905 = vpop.permute.xlu0 %2904
        %2906 = vrot.lane.b32.xlu0 %v2320, 4
        %v2907 = vpop.permute.xlu0 %2906
        %2908 = vrot.lane.b32.xlu0 %v2321, 4
        %v2909 = vpop.permute.xlu0 %2908
        %2910 = vrot.lane.b32.xlu0 %v2322, 4
        %v2911 = vpop.permute.xlu0 %2910
        %2912 = vrot.lane.b32.xlu0 %v2323, 4
        %v2913 = vpop.permute.xlu0 %2912
        %2914 = vrot.lane.b32.xlu0 %v2324, 4
        %v2915 = vpop.permute.xlu0 %2914
        %2932 = vrot.lane.b32.xlu0 %v2852, 6
        %v2933 = vpop.permute.xlu0 %2932
        %2934 = vrot.lane.b32.xlu0 %v2853, 6
        %v2935 = vpop.permute.xlu0 %2934
        %2936 = vrot.lane.b32.xlu0 %v2854, 6
        %v2937 = vpop.permute.xlu0 %2936
        %2938 = vrot.lane.b32.xlu0 %v2855, 6
        %v2939 = vpop.permute.xlu0 %2938
        %2940 = vrot.lane.b32.xlu0 %v2856, 6
        %v2941 = vpop.permute.xlu0 %2940
        %2942 = vrot.lane.b32.xlu0 %v2857, 6
        %v2943 = vpop.permute.xlu0 %2942
        %2944 = vrot.lane.b32.xlu0 %v2858, 6
        %v2945 = vpop.permute.xlu0 %2944
        %2946 = vrot.lane.b32.xlu0 %v2859, 6
        %v2947 = vpop.permute.xlu0 %2946
        %vm2956 = vcmask 15360
        %v2957 = vsel %vm2956, %v1247, %v2869
        %v2958 = vsel %vm2956, %v1248, %v2871
        %v2959 = vsel %vm2956, %v1249, %v2873
        %v2960 = vsel %vm2956, %v1250, %v2875
        %v2961 = vsel %vm2956, %v1251, %v2877
        %v2962 = vsel %vm2956, %v1252, %v2879
        %v2963 = vsel %vm2956, %v1253, %v2881
        %v2964 = vsel %vm2956, %v1254, %v2883
        %v2965 = vsel %vm829, %v2957, %v2901
        %v2966 = vsel %vm829, %v2958, %v2903
        %v2967 = vsel %vm829, %v2959, %v2905
        %v2968 = vsel %vm829, %v2960, %v2907
        %v2969 = vsel %vm829, %v2961, %v2909
        %v2970 = vsel %vm829, %v2962, %v2911
        %v2971 = vsel %vm829, %v2963, %v2913
        %v2972 = vsel %vm829, %v2964, %v2915
        %vm2973 = vcmask 48128
        %v2974 = vsel %vm2973, %v2965, %v2933
        %v2975 = vsel %vm2973, %v2966, %v2935
        %v2976 = vsel %vm2973, %v2967, %v2937
        %v2977 = vsel %vm2973, %v2968, %v2939
        %v2978 = vsel %vm2973, %v2969, %v2941
        %v2979 = vsel %vm2973, %v2970, %v2943
        %v2980 = vsel %vm2973, %v2971, %v2945
        %v2981 = vsel %vm2973, %v2972, %v2947
        %2982 = vst.msk [vmem:[%s688] sm:$0xff] %vm838, %v2974
        %2983 = vst.msk [vmem:[%s688 + $0x8] sm:$0xff] %vm838, %v2975
        %2984 = vst.msk [vmem:[%s688 + $0x10] sm:$0xff] %vm838, %v2976
        %2985 = vst.msk [vmem:[%s688 + $0x18] sm:$0xff] %vm838, %v2977
        %2986 = vst.msk [vmem:[%s688 + $0x20] sm:$0xff] %vm838, %v2978
        %2987 = vst.msk [vmem:[%s688 + $0x28] sm:$0xff] %vm838, %v2979
        %2988 = vst.msk [vmem:[%s688 + $0x30] sm:$0xff] %vm838, %v2980
        %2989 = vst.msk [vmem:[%s688 + $0x38] sm:$0xff] %vm838, %v2981
        %s2990 = sand.u32 %s120, 1
        %s2991 = scalar_lea.sflag [#allocation5], %s2990
        %s2992 = sand.u32 %s120, 1
        %s2993 = smul.addr %s2992, 64
        %s2994 = scalar_lea.vmem [#allocation4], %s2993
        // Predicated region
        $region123: #{tpu_custom_call.1} parent=113 // pred_check
          %p2995 = pneg %p130
        $region124: #{tpu_custom_call.1} parent=113 // pred_check_branch
          %2997 = sbr.rel (%p2995) target = $region126
        $region125: #{tpu_custom_call.1} parent=113 // pred_region
          %s2998 = smul.u32 8, %s21
          %s3000 = ssub.s32 1024, 1024
          %3001 = vsyncadd %s2991, %s3000
          %s3002 = smul.addr %s22, 8
          %s3003 = sadd.s32 %s2998, %s3002
          %s3004 = smul.addr %s3003, 128
          %s3005 = scalar_lea.hbm %s3, %s3004
          %s3006 = sshll.u32 %s2994, 4
          %s3007 = int_to_ptr.vmem [resolvable:$true] %s3006
          %3012 = dma.vmem_to_hbm [thread:$0]  %s3007, 1024, %s3005, %s2991, 128, 128, 8
        $region126: #{tpu_custom_call.1} parent=113 // pred_fallthru
          _
      $region114: #{tpu_custom_call.1} parent=5 // pred_fallthru
        _
      %p3013 = scmp.le.s32.totalorder 2, %s12
      // Predicated region
      $region127: #{tpu_custom_call.1} parent=5 // pred_check
        %p3014 = pneg %p3013
      $region128: #{tpu_custom_call.1} parent=5 // pred_check_branch
        %3016 = sbr.rel (%p3014) target = $region130
      $region129: #{tpu_custom_call.1} parent=5 // pred_region
        %s3017 = ssub.s32 %s12, 2
        // Predicated region
        $region131: #{tpu_custom_call.1} parent=129 // pred_check
          %p3018 = pneg %p136
        $region132: #{tpu_custom_call.1} parent=129 // pred_check_branch
          %3020 = sbr.rel (%p3018) target = $region134
        $region133: #{tpu_custom_call.1} parent=129 // pred_region
          %s3021 = sand.u32 %s121, 1
          %s3022 = scalar_lea.sflag [#allocation5], %s3021
          %s3023 = sand.u32 %s121, 1
          %s3024 = smul.addr %s3023, 64
          %s3025 = scalar_lea.vmem [#allocation4], %s3024
          %3026 = dma.done %s3022, 1024
        $region134: #{tpu_custom_call.1} parent=129 // pred_fallthru
          _
      $region130: #{tpu_custom_call.1} parent=5 // pred_fallthru
        _
    $region6: #{tpu_custom_call.1} parent=1 // loop_footer
      %s16 = sadd.s32 1, %s12
    $region7: #{tpu_custom_call.1} parent=1 // loop_footer_branch
      %11 = sbr.rel target = $region3
    $region8: #{tpu_custom_call.1} parent=1 // loop_exit
      _
    %3027 = vsyncpa [#allocation5], 1
    %s3028 = scalar_lea.sflag [#allocation5], 1
    %3029 = vsyncpa %s3028, 1

</llo_original>
